<compile_context>
chip_gen: v7x
topology: tpu7x:2x2x1
jax: 0.10.0
libtpu: 0.0.40
codegen_flags: <defaults>
</compile_context>

<pallas_src>
import functools

import jax
import jax.numpy as jnp
from jax.experimental import pallas as pl
from jax.experimental.pallas import tpu as pltpu

NUM_FEATURES = 128   # synthetic backbone feature dim
ATT_HIDDEN = 2048    # hard-coded in the module: nn.Linear(num_features, 2048)
NUM_CLASSES = 6
KSIZE = 9            # 3x3 conv taps
KPAD = 16            # taps zero-padded to a sublane-tile multiple
OUT_PAD = 128        # lane-dense logits tile, sliced back to NUM_CLASSES


# ---------------------------------------------------------------------------
# Fused kernel: synthetic backbone + MIL attention head, bblk bags / program.
# ---------------------------------------------------------------------------
def _fused_mil_kernel(hw, t, xp_ref, cw_ref, cb_ref, w1_ref, b1_ref, w2_ref,
                      b2_ref, wfc_ref, bfc_ref, out_ref):
    # xp_ref:  (bblk, T*H*W, 16) f32 im2col patches (tap index on lanes)
    # cw_ref:  (16, F) f32 conv weight (taps on sublanes, rows 9..15 zero)
    # cb_ref:  (1, F)  f32 conv bias
    # w1_ref:  (F, A) bf16   b1_ref / w2_ref: (1, A) f32   b2_ref: (1,) SMEM
    # wfc_ref: (F, 128) f32 (zero past NUM_CLASSES)   bfc_ref: (1, 128) f32
    # out_ref: (1, bblk, 128) f32
    bblk, npix, kpad = xp_ref.shape
    f = cw_ref.shape[1]

    # ---- synthetic backbone: 3x3 conv as ONE MXU matmul over the taps ----
    p = xp_ref[...].reshape(bblk * npix, kpad)                    # tile-aligned merge
    z = jnp.dot(p, cw_ref[...], preferred_element_type=jnp.float32)   # (bblk*NP, F)
    z = jnp.maximum(z + cb_ref[...], 0.0)                         # bias + ReLU
    # global average pool over the H*W pixels of each tile (sublane reduce)
    feats = jnp.sum(z.reshape(bblk * t, hw, f), axis=1) * (1.0 / hw)   # (bblk*T, F)

    # ---- MIL attention head (feats kept f32; bf16 weight, f32 accumulate) --
    hdn = jnp.dot(feats, w1_ref[...].astype(jnp.float32),
                  preferred_element_type=jnp.float32)             # (bblk*T, A)
    hdn = jnp.tanh(hdn + b1_ref[...])
    # attention logit: VPU multiply + lane reduce (avoids an N=1 MXU matmul)
    s = jnp.sum(hdn * w2_ref[...], axis=-1, keepdims=True) + b2_ref[0]
    # softmax over the T tiles of each bag (att_dropout is identity at eval)
    s = s.reshape(bblk, t, 1)
    s = s - jnp.max(s, axis=1, keepdims=True)
    e = jnp.exp(s)
    alpha = e / jnp.sum(e, axis=1, keepdims=True)                 # (bblk, T, 1)
    # attention-weighted pooling + final classifier (lane-dense 128-wide out)
    pooled = jnp.sum(feats.reshape(bblk, t, f) * alpha, axis=1)   # (bblk, F)
    logits = jnp.dot(pooled, wfc_ref[...], preferred_element_type=jnp.float32)
    out_ref[0] = logits + bfc_ref[...]                            # (bblk, 128)


def _pick_bblk(b, t, hw):
    # Batch bags per grid step so the attention matmul sees up to ~128 rows,
    # cap so the f32 conv activation (bblk*T*H*W x 128) stays <= ~8 MiB
    # (v7x has only 64 MiB VMEM), and keep >= 2 grid steps when B allows so
    # both v7x TensorCores get work under dimension_semantics=("parallel",).
    target = max(1, 128 // max(t, 1))
    target = min(target, max(1, (8 * 1024 * 1024) // (t * hw * 128 * 4)))
    best = 1
    for d in range(1, b + 1):
        if b % d != 0 or d > target:
            continue
        if b >= 2 and (b // d) < 2:
            continue
        best = d
    return best


# ---------------------------------------------------------------------------
# Forward pass
# ---------------------------------------------------------------------------
def mil_forward(x, params):
    b, t, c, h, w = x.shape
    assert c == 1, "backbone was built with in_chans=1"
    hw = h * w
    npix = t * hw
    f = params["conv_w"].shape[1]
    a = params["att_w1"].shape[1]
    nc = params["fc_w"].shape[1]

    # im2col operand for the MXU conv (single fused XLA producer): pixel rows
    # on sublanes, tap index on lanes, zero-padded 9 -> 16.
    xr = x[:, :, 0]                                                 # (B,T,H,W)
    xp = jnp.pad(xr, ((0, 0), (0, 0), (1, 1), (1, 1)))              # (B,T,H+2,W+2)
    taps = jnp.stack([xp[:, :, di:di + h, dj:dj + w]
                      for di in range(3) for dj in range(3)], axis=-1)
    patches = taps.reshape(b, npix, KSIZE)
    patches = jnp.pad(patches, ((0, 0), (0, 0), (0, KPAD - KSIZE)))  # (B,NP,16)

    # conv weight (9,F) -> (16,F); fc weight/bias padded to a 128-lane tile
    cwt = jnp.pad(params["conv_w"], ((0, KPAD - KSIZE), (0, 0)))
    wfc = jnp.pad(params["fc_w"], ((0, 0), (0, OUT_PAD - nc)))
    bfc = jnp.pad(params["fc_b"], ((0, 0), (0, OUT_PAD - nc)))

    bblk = _pick_bblk(b, t, hw)
    nblk = b // bblk

    kernel = functools.partial(_fused_mil_kernel, hw, t)
    out = pl.pallas_call(
        kernel,
        out_shape=jax.ShapeDtypeStruct((nblk, bblk, OUT_PAD), jnp.float32),
        grid=(nblk,),
        in_specs=[
            pl.BlockSpec((bblk, npix, KPAD), lambda i: (i, 0, 0)),   # patches
            # grid-invariant weights: constant index_map -> fetched only once
            pl.BlockSpec((KPAD, f), lambda i: (0, 0)),               # conv_w^T
            pl.BlockSpec((1, f), lambda i: (0, 0)),                  # conv_b
            pl.BlockSpec((f, a), lambda i: (0, 0)),                  # att_w1 bf16
            pl.BlockSpec((1, a), lambda i: (0, 0)),                  # att_b1
            pl.BlockSpec((1, a), lambda i: (0, 0)),                  # att_w2
            pl.BlockSpec(memory_space=pltpu.MemorySpace.SMEM),       # att_b2
            pl.BlockSpec((f, OUT_PAD), lambda i: (0, 0)),            # fc_w (pad)
            pl.BlockSpec((1, OUT_PAD), lambda i: (0, 0)),            # fc_b (pad)
        ],
        out_specs=pl.BlockSpec((1, bblk, OUT_PAD), lambda i: (i, 0, 0)),
        compiler_params=pltpu.CompilerParams(
            dimension_semantics=("parallel",),
            vmem_limit_bytes=32 * 1024 * 1024),
    )(patches, cwt, params["conv_b"], params["att_w1"], params["att_b1"],
      params["att_w2"], params["att_b2"], wfc, bfc)
    return out.reshape(b, OUT_PAD)[:, :nc]


# ---------------------------------------------------------------------------
# Pure-JAX reference (same synthetic backbone) for a sanity check
# ---------------------------------------------------------------------------
def mil_reference(x, params):
    b, t, c, h, w = x.shape
    xr = x[:, :, 0]
    xp = jnp.pad(xr, ((0, 0), (0, 0), (1, 1), (1, 1)))
    taps = jnp.stack(
        [xp[:, :, i:i + h, j:j + w] for i in range(3) for j in range(3)],
        axis=-1)                                                  # (B,T,H,W,9)
    conv = jnp.einsum("bthwk,kf->bthwf", taps, params["conv_w"])
    conv = jnp.maximum(conv + params["conv_b"], 0.0)
    feats = conv.mean(axis=(2, 3))                                # (B,T,F)
    hdn = jnp.tanh(feats @ params["att_w1"].astype(jnp.float32)
                   + params["att_b1"])
    s = jnp.sum(hdn * params["att_w2"], axis=-1, keepdims=True)
    s = s + params["att_b2"][0]                                   # (B,T,1)
    alpha = jax.nn.softmax(s, axis=1)
    pooled = jnp.sum(feats * alpha, axis=1)                       # (B,F)
    return pooled @ params["fc_w"] + params["fc_b"]


def init_params(key):
    ks = jax.random.split(key, 8)
    s = 0.02
    return {
        # conv weight stored tap-major (9, F): column f is torch weight[f,0].reshape(9)
        "conv_w": s * jax.random.normal(ks[0], (KSIZE, NUM_FEATURES), jnp.float32),
        "conv_b": s * jax.random.normal(ks[1], (1, NUM_FEATURES), jnp.float32),
        # only the weight is bf16 (halves DMA); activations stay f32 in-kernel
        "att_w1": (s * jax.random.normal(
            ks[2], (NUM_FEATURES, ATT_HIDDEN), jnp.float32)).astype(jnp.bfloat16),
        "att_b1": s * jax.random.normal(ks[3], (1, ATT_HIDDEN), jnp.float32),
        # second attention projection stored as a row for multiply+lane-reduce
        "att_w2": s * jax.random.normal(ks[4], (1, ATT_HIDDEN), jnp.float32),
        "att_b2": s * jax.random.normal(ks[5], (1,), jnp.float32),
        "fc_w": s * jax.random.normal(ks[6], (NUM_FEATURES, NUM_CLASSES), jnp.float32),
        "fc_b": s * jax.random.normal(ks[7], (1, NUM_CLASSES), jnp.float32),
    }


if __name__ == "__main__":
    key = jax.random.PRNGKey(0)
    kp, kx = jax.random.split(key)
    params = init_params(kp)

    b, t, c, h, w = 2, 8, 1, 16, 16
    x = jax.random.normal(kx, (b, t, c, h, w), jnp.float32)

    logits = jax.jit(mil_forward)(x, params)
    logits = jax.block_until_ready(logits)

    assert logits.shape == (b, NUM_CLASSES), logits.shape
    assert bool(jnp.all(jnp.isfinite(logits)))

    ref = mil_reference(x, params)
    assert jnp.allclose(logits, ref, atol=1e-3, rtol=1e-2), (
        float(jnp.max(jnp.abs(logits - ref))))
    print("KERNEL_OK")
</pallas_src>

<mosaic_0001>
module attributes {stable_mosaic.version = 11 : i64} {
  func.func @_fused_mil_kernel(%arg0: i32, %arg1: memref<1x2048x16xf32, #tpu.memory_space<vmem>>, %arg2: memref<16x128xf32, #tpu.memory_space<vmem>>, %arg3: memref<1x128xf32, #tpu.memory_space<vmem>>, %arg4: memref<128x2048xbf16, #tpu.memory_space<vmem>>, %arg5: memref<1x2048xf32, #tpu.memory_space<vmem>>, %arg6: memref<1x2048xf32, #tpu.memory_space<vmem>>, %arg7: memref<1xf32, #tpu.memory_space<smem>>, %arg8: memref<128x128xf32, #tpu.memory_space<vmem>>, %arg9: memref<1x128xf32, #tpu.memory_space<vmem>>, %arg10: memref<1x1x128xf32, #tpu.memory_space<vmem>>) attributes {dimension_semantics = [#tpu.dimension_semantics<parallel>], iteration_bounds = array<i64: 2>, scalar_prefetch = 0 : i64, scratch_operands = 0 : i64, tpu.core_type = #tpu.core_type<tc>, window_params = [{transform_indices = @transform_0, window_bounds = array<i64: 1, 2048, 16>}, {pipeline_mode = #tpu.pipeline_mode<synchronous>, transform_indices = @transform_1, window_bounds = array<i64: 16, 128>}, {pipeline_mode = #tpu.pipeline_mode<synchronous>, transform_indices = @transform_2, window_bounds = array<i64: 1, 128>}, {pipeline_mode = #tpu.pipeline_mode<synchronous>, transform_indices = @transform_3, window_bounds = array<i64: 128, 2048>}, {pipeline_mode = #tpu.pipeline_mode<synchronous>, transform_indices = @transform_4, window_bounds = array<i64: 1, 2048>}, {pipeline_mode = #tpu.pipeline_mode<synchronous>, transform_indices = @transform_5, window_bounds = array<i64: 1, 2048>}, {transform_indices = @transform_6, window_bounds = array<i64: 1>}, {pipeline_mode = #tpu.pipeline_mode<synchronous>, transform_indices = @transform_7, window_bounds = array<i64: 128, 128>}, {pipeline_mode = #tpu.pipeline_mode<synchronous>, transform_indices = @transform_8, window_bounds = array<i64: 1, 128>}, {transform_indices = @transform_9, window_bounds = array<i64: 1, 1, 128>}]} {
    %c0 = arith.constant 0 : index
    %c0_0 = arith.constant 0 : index
    %c0_1 = arith.constant 0 : index
    %0 = vector.load %arg1[%c0, %c0_0, %c0_1] : memref<1x2048x16xf32, #tpu.memory_space<vmem>>, vector<1x2048x16xf32>
    %1 = vector.shape_cast %0 : vector<1x2048x16xf32> to vector<2048x16xf32>
    %c0_2 = arith.constant 0 : index
    %c0_3 = arith.constant 0 : index
    %2 = vector.load %arg2[%c0_2, %c0_3] : memref<16x128xf32, #tpu.memory_space<vmem>>, vector<16x128xf32>
    %cst = arith.constant dense<0.000000e+00> : vector<2048x128xf32>
    %3 = tpu.matmul %1, %2, %cst {dimension_numbers = #tpu.dot_dimension_numbers<[1], [0], [0], [1], [0, 0, 1, 1], [], []>} : vector<2048x16xf32>, vector<16x128xf32>, vector<2048x128xf32> -> vector<2048x128xf32>
    %c0_4 = arith.constant 0 : index
    %c0_5 = arith.constant 0 : index
    %4 = vector.load %arg3[%c0_4, %c0_5] : memref<1x128xf32, #tpu.memory_space<vmem>>, vector<1x128xf32>
    %5 = vector.broadcast %4 : vector<1x128xf32> to vector<2048x128xf32>
    %6 = arith.addf %3, %5 : vector<2048x128xf32>
    %cst_6 = arith.constant 0.000000e+00 : f32
    %7 = vector.broadcast %cst_6 : f32 to vector<2048x128xf32>
    %8 = arith.maximumf %6, %7 : vector<2048x128xf32>
    %9 = vector.shape_cast %8 : vector<2048x128xf32> to vector<8x256x128xf32>
    %cst_7 = arith.constant dense<0.000000e+00> : vector<8x128xf32>
    %10 = vector.multi_reduction <add>, %9, %cst_7 [1] : vector<8x256x128xf32> to vector<8x128xf32>
    %cst_8 = arith.constant 3.906250e-03 : f32
    %11 = vector.broadcast %cst_8 : f32 to vector<8x128xf32>
    %12 = arith.mulf %10, %11 : vector<8x128xf32>
    %c0_9 = arith.constant 0 : index
    %c0_10 = arith.constant 0 : index
    %13 = vector.load %arg4[%c0_9, %c0_10] : memref<128x2048xbf16, #tpu.memory_space<vmem>>, vector<128x2048xbf16>
    %14 = arith.extf %13 : vector<128x2048xbf16> to vector<128x2048xf32>
    %cst_11 = arith.constant dense<0.000000e+00> : vector<8x2048xf32>
    %15 = tpu.matmul %12, %14, %cst_11 {dimension_numbers = #tpu.dot_dimension_numbers<[1], [0], [0], [1], [0, 0, 1, 1], [], []>} : vector<8x128xf32>, vector<128x2048xf32>, vector<8x2048xf32> -> vector<8x2048xf32>
    %c0_12 = arith.constant 0 : index
    %c0_13 = arith.constant 0 : index
    %16 = vector.load %arg5[%c0_12, %c0_13] : memref<1x2048xf32, #tpu.memory_space<vmem>>, vector<1x2048xf32>
    %17 = vector.broadcast %16 : vector<1x2048xf32> to vector<8x2048xf32>
    %18 = arith.addf %15, %17 : vector<8x2048xf32>
    %19 = math.tanh %18 : vector<8x2048xf32>
    %c0_14 = arith.constant 0 : index
    %c0_15 = arith.constant 0 : index
    %20 = vector.load %arg6[%c0_14, %c0_15] : memref<1x2048xf32, #tpu.memory_space<vmem>>, vector<1x2048xf32>
    %21 = vector.broadcast %20 : vector<1x2048xf32> to vector<8x2048xf32>
    %22 = arith.mulf %19, %21 : vector<8x2048xf32>
    %cst_16 = arith.constant dense<0.000000e+00> : vector<8xf32>
    %23 = vector.multi_reduction <add>, %22, %cst_16 [1] : vector<8x2048xf32> to vector<8xf32>
    %24 = vector.shape_cast %23 : vector<8xf32> to vector<8x1xf32>
    %c0_17 = arith.constant 0 : index
    %25 = memref.load %arg7[%c0_17] : memref<1xf32, #tpu.memory_space<smem>>
    %26 = vector.broadcast %25 : f32 to vector<8x1xf32>
    %27 = arith.addf %24, %26 : vector<8x1xf32>
    %28 = vector.shape_cast %27 : vector<8x1xf32> to vector<1x8x1xf32>
    %cst_18 = arith.constant dense<0xFF800000> : vector<1x1xf32>
    %29 = vector.multi_reduction <maximumf>, %28, %cst_18 [1] : vector<1x8x1xf32> to vector<1x1xf32>
    %30 = vector.shape_cast %29 : vector<1x1xf32> to vector<1x1x1xf32>
    %31 = vector.broadcast %30 : vector<1x1x1xf32> to vector<1x8x1xf32>
    %32 = arith.subf %28, %31 : vector<1x8x1xf32>
    %33 = math.exp %32 : vector<1x8x1xf32>
    %cst_19 = arith.constant dense<0.000000e+00> : vector<1x1xf32>
    %34 = vector.multi_reduction <add>, %33, %cst_19 [1] : vector<1x8x1xf32> to vector<1x1xf32>
    %35 = vector.shape_cast %34 : vector<1x1xf32> to vector<1x1x1xf32>
    %36 = vector.broadcast %35 : vector<1x1x1xf32> to vector<1x8x1xf32>
    %37 = arith.divf %33, %36 : vector<1x8x1xf32>
    %38 = vector.shape_cast %12 : vector<8x128xf32> to vector<1x8x128xf32>
    %39 = vector.broadcast %37 : vector<1x8x1xf32> to vector<1x8x128xf32>
    %40 = arith.mulf %38, %39 : vector<1x8x128xf32>
    %cst_20 = arith.constant dense<0.000000e+00> : vector<1x128xf32>
    %41 = vector.multi_reduction <add>, %40, %cst_20 [1] : vector<1x8x128xf32> to vector<1x128xf32>
    %c0_21 = arith.constant 0 : index
    %c0_22 = arith.constant 0 : index
    %42 = vector.load %arg8[%c0_21, %c0_22] : memref<128x128xf32, #tpu.memory_space<vmem>>, vector<128x128xf32>
    %cst_23 = arith.constant dense<0.000000e+00> : vector<1x128xf32>
    %43 = tpu.matmul %41, %42, %cst_23 {dimension_numbers = #tpu.dot_dimension_numbers<[1], [0], [0], [1], [0, 0, 1, 1], [], []>} : vector<1x128xf32>, vector<128x128xf32>, vector<1x128xf32> -> vector<1x128xf32>
    %c0_24 = arith.constant 0 : index
    %c0_25 = arith.constant 0 : index
    %44 = vector.load %arg9[%c0_24, %c0_25] : memref<1x128xf32, #tpu.memory_space<vmem>>, vector<1x128xf32>
    %45 = arith.addf %43, %44 : vector<1x128xf32>
    %c0_26 = arith.constant 0 : index
    %c0_27 = arith.constant 0 : index
    %c0_28 = arith.constant 0 : index
    %46 = vector.load %arg10[%c0_26, %c0_27, %c0_28] : memref<1x1x128xf32, #tpu.memory_space<vmem>>, vector<1x1x128xf32>
    %47 = vector.shape_cast %46 : vector<1x1x128xf32> to vector<1x128xf32>
    %48 = vector.shape_cast %45 : vector<1x128xf32> to vector<1x1x128xf32>
    tpu.vector_store %arg10[%c0_26, %c0_27, %c0_28], %48 {strides = array<i32>} : memref<1x1x128xf32, #tpu.memory_space<vmem>>, vector<1x1x128xf32>,
    return
  }
  func.func @transform_0(%arg0: i32) -> (i32, i32, i32) {
    %c0_i32 = arith.constant 0 : i32
    %c0_i32_0 = arith.constant 0 : i32
    %c0_i32_1 = arith.constant 0 : i32
    return %arg0, %c0_i32, %c0_i32_0 : i32, i32, i32
  }
  func.func @transform_1(%arg0: i32) -> (i32, i32) {
    %c0_i32 = arith.constant 0 : i32
    %c0_i32_0 = arith.constant 0 : i32
    %c0_i32_1 = arith.constant 0 : i32
    return %c0_i32, %c0_i32_0 : i32, i32
  }
  func.func @transform_2(%arg0: i32) -> (i32, i32) {
    %c0_i32 = arith.constant 0 : i32
    %c0_i32_0 = arith.constant 0 : i32
    %c0_i32_1 = arith.constant 0 : i32
    return %c0_i32, %c0_i32_0 : i32, i32
  }
  func.func @transform_3(%arg0: i32) -> (i32, i32) {
    %c0_i32 = arith.constant 0 : i32
    %c0_i32_0 = arith.constant 0 : i32
    %c0_i32_1 = arith.constant 0 : i32
    return %c0_i32, %c0_i32_0 : i32, i32
  }
  func.func @transform_4(%arg0: i32) -> (i32, i32) {
    %c0_i32 = arith.constant 0 : i32
    %c0_i32_0 = arith.constant 0 : i32
    %c0_i32_1 = arith.constant 0 : i32
    return %c0_i32, %c0_i32_0 : i32, i32
  }
  func.func @transform_5(%arg0: i32) -> (i32, i32) {
    %c0_i32 = arith.constant 0 : i32
    %c0_i32_0 = arith.constant 0 : i32
    %c0_i32_1 = arith.constant 0 : i32
    return %c0_i32, %c0_i32_0 : i32, i32
  }
  func.func @transform_6(%arg0: i32) -> i32 {
    %c0_i32 = arith.constant 0 : i32
    %c0_i32_0 = arith.constant 0 : i32
    return %c0_i32 : i32
  }
  func.func @transform_7(%arg0: i32) -> (i32, i32) {
    %c0_i32 = arith.constant 0 : i32
    %c0_i32_0 = arith.constant 0 : i32
    %c0_i32_1 = arith.constant 0 : i32
    return %c0_i32, %c0_i32_0 : i32, i32
  }
  func.func @transform_8(%arg0: i32) -> (i32, i32) {
    %c0_i32 = arith.constant 0 : i32
    %c0_i32_0 = arith.constant 0 : i32
    %c0_i32_1 = arith.constant 0 : i32
    return %c0_i32, %c0_i32_0 : i32, i32
  }
  func.func @transform_9(%arg0: i32) -> (i32, i32, i32) {
    %c0_i32 = arith.constant 0 : i32
    %c0_i32_0 = arith.constant 0 : i32
    %c0_i32_1 = arith.constant 0 : i32
    return %arg0, %c0_i32, %c0_i32_0 : i32, i32, i32
  }
}

</mosaic_0001>

<llo_original>
// kernel: mil_forward.1
$region0: #{mil_forward.1}
  #allocation0 [shape = 'u32[]', space=smem, size = 0x4, offset = 0x4, fixed_abs, tag = 'smem constant byte address 0x4 - core index']
  #allocation1 [shape = 'u32[144,128]{1,0:T(1,128)}', space=vmem, size = 0x12000, scoped, tag = 'internal scratch']
  #allocation2 [shape = 'f32[1]{0:T(128)S(6)}', space=smem, size = 0x200, scoped, tag = 'scoped memory for mil_forward.1']
  %s0 = inlined_call_operand.vmem [shape: f32[2,2048,16], index: 0, kind: input, shape index: {}]
  %s1 = inlined_call_operand.vmem [shape: f32[16,128], index: 1, kind: input, shape index: {}]
  %s2 = inlined_call_operand.vmem [shape: f32[1,128], index: 2, kind: input, shape index: {}]
  %s3 = inlined_call_operand.vmem [shape: bf16[128,2048], index: 3, kind: input, shape index: {}]
  %s4 = inlined_call_operand.vmem [shape: f32[1,2048], index: 4, kind: input, shape index: {}]
  %s5 = inlined_call_operand.vmem [shape: f32[1,2048], index: 5, kind: input, shape index: {}]
  %s6 = inlined_call_operand.<no memory space> [shape: f32[1], index: 6, kind: input, shape index: {}]
  %s7 = inlined_call_operand.vmem [shape: f32[128,128], index: 7, kind: input, shape index: {}]
  %s8 = inlined_call_operand.vmem [shape: f32[1,128], index: 8, kind: input, shape index: {}]
  %s9 = inlined_call_operand.hbm [shape: f32[2,1,128], index: 9, kind: output, shape index: {}]
  %s10 = sld [smem:[#allocation0]]
  $region69: #{mil_forward.1} parent=0
    _
  %s12 = ssub.s32 1, %s10
  %s13 = scalar_select 0, %s12, %s10
  %14 = sst [smem:[#allocation2]] %s6
  $region1: #{mil_forward.1} parent=0
    #allocation3 [shape = 'u8[1024]{0}', space=vmem, size = 0x400, scoped, tag = 'output window, operand 0']
    #allocation4 [shape = 's32[2]{0}', space=sflag, size = 0x8, scoped, tag = 'scoped memory for mil_forward.1']
    %15 = vsyncpa [#allocation4], 0
    %s16 = scalar_lea.sflag [#allocation4], 1
    %17 = vsyncpa %s16, 0
    loop: start=0, step=1, limit=4
    $region2: #{mil_forward.1} parent=1 // loop_pre_header
      _
    $region3: #{mil_forward.1} parent=1 // loop_header
      %s19 = sphi 0, %s23
      %p20 = scmp.ge.s32.totalorder %s19, 4
      %s29 = sphi 0, %s31
      %s32 = sphi 0, %s29
      %s33 = sphi 0, %s32
      %s49 = sphi 0, %s33
      %s53 = sphi 0, %s53
      %s55 = sphi 0, %s53
      %s56 = sphi 0, %s55
      %s70 = sphi 0, %s56
      %s74 = sphi 0, %s74
      %s76 = sphi 0, %s74
      %s77 = sphi 0, %s76
      %s91 = sphi 0, %s77
      %s95 = sphi 0, %s95
      %s97 = sphi 0, %s95
      %s98 = sphi 0, %s97
      %s112 = sphi 0, %s98
      %s116 = sphi 0, %s116
      %s118 = sphi 0, %s116
      %s119 = sphi 0, %s118
      %s133 = sphi 0, %s119
      %s137 = sphi 0, %s137
      %s139 = sphi 0, %s137
      %s140 = sphi 0, %s139
      %s154 = sphi 0, %s140
      %s158 = sphi 0, %s158
      %s160 = sphi 0, %s158
      %s161 = sphi 0, %s160
      %s175 = sphi 0, %s161
      %s179 = sphi 0, %s179
      %s181 = sphi 0, %s179
      %s182 = sphi 0, %s181
      %s196 = sphi 0, %s182
      %s200 = sphi 0, %s200
      %s202 = sphi 0, %s200
      %s203 = sphi 0, %s202
      %s217 = sphi 0, %s203
      %s223 = sphi 0, %s225
      %s226 = sphi 0, %s223
      %s227 = sphi 0, %s226
      %s243 = sphi 0, %s227
    $region4: #{mil_forward.1} parent=1 // loop_header_branch
      %22 = sbr.rel (%p20) target = $region8
    $region5: #{mil_forward.1} parent=1 // loop_body
      %s24 = ssub.s32 %s19, 1
      %s25 = ssub.s32 %s19, 2
      %s26 = sadd.s32 %s19, 1
      %s27 = ssub.s32 %s19, %s26
      %p28 = scmp.eq.s32.totalorder %s27, 0
      %s30 = sadd.s32 %s29, 1
      %s31 = scalar_select %p28, %s29, %s30
      %p34 = pneg %p28
      %p35 = scmp.eq.s32.totalorder %s19, 1
      %p36 = por %p34, %p35
      %p37 = scmp.ne.s32.totalorder %s29, %s32
      %p38 = scmp.eq.s32.totalorder %s19, 0
      %p39 = por %p37, %p38
      %p40 = scmp.ne.s32.totalorder %s29, %s32
      %p41 = scmp.eq.s32.totalorder %s24, 1
      %p42 = por %p40, %p41
      %p43 = scmp.ne.s32.totalorder %s32, %s33
      %p44 = scmp.eq.s32.totalorder %s24, 0
      %p45 = por %p43, %p44
      %p46 = scmp.ne.s32.totalorder %s32, %s33
      %p47 = scmp.eq.s32.totalorder %s25, 1
      %p48 = por %p46, %p47
      %p50 = scmp.ne.s32.totalorder %s33, %s49
      %p51 = scmp.eq.s32.totalorder %s25, 0
      %p52 = por %p50, %p51
      %s54 = sadd.s32 %s53, 1
      %p57 = scmp.eq.s32.totalorder %s19, 1
      %p58 = scmp.ne.s32.totalorder %s53, %s55
      %p59 = scmp.eq.s32.totalorder %s19, 0
      %p60 = por %p58, %p59
      %p61 = scmp.ne.s32.totalorder %s53, %s55
      %p62 = scmp.eq.s32.totalorder %s24, 1
      %p63 = por %p61, %p62
      %p64 = scmp.ne.s32.totalorder %s55, %s56
      %p65 = scmp.eq.s32.totalorder %s24, 0
      %p66 = por %p64, %p65
      %p67 = scmp.ne.s32.totalorder %s55, %s56
      %p68 = scmp.eq.s32.totalorder %s25, 1
      %p69 = por %p67, %p68
      %p71 = scmp.ne.s32.totalorder %s56, %s70
      %p72 = scmp.eq.s32.totalorder %s25, 0
      %p73 = por %p71, %p72
      %s75 = sadd.s32 %s74, 1
      %p78 = scmp.eq.s32.totalorder %s19, 1
      %p79 = scmp.ne.s32.totalorder %s74, %s76
      %p80 = scmp.eq.s32.totalorder %s19, 0
      %p81 = por %p79, %p80
      %p82 = scmp.ne.s32.totalorder %s74, %s76
      %p83 = scmp.eq.s32.totalorder %s24, 1
      %p84 = por %p82, %p83
      %p85 = scmp.ne.s32.totalorder %s76, %s77
      %p86 = scmp.eq.s32.totalorder %s24, 0
      %p87 = por %p85, %p86
      %p88 = scmp.ne.s32.totalorder %s76, %s77
      %p89 = scmp.eq.s32.totalorder %s25, 1
      %p90 = por %p88, %p89
      %p92 = scmp.ne.s32.totalorder %s77, %s91
      %p93 = scmp.eq.s32.totalorder %s25, 0
      %p94 = por %p92, %p93
      %s96 = sadd.s32 %s95, 1
      %p99 = scmp.eq.s32.totalorder %s19, 1
      %p100 = scmp.ne.s32.totalorder %s95, %s97
      %p101 = scmp.eq.s32.totalorder %s19, 0
      %p102 = por %p100, %p101
      %p103 = scmp.ne.s32.totalorder %s95, %s97
      %p104 = scmp.eq.s32.totalorder %s24, 1
      %p105 = por %p103, %p104
      %p106 = scmp.ne.s32.totalorder %s97, %s98
      %p107 = scmp.eq.s32.totalorder %s24, 0
      %p108 = por %p106, %p107
      %p109 = scmp.ne.s32.totalorder %s97, %s98
      %p110 = scmp.eq.s32.totalorder %s25, 1
      %p111 = por %p109, %p110
      %p113 = scmp.ne.s32.totalorder %s98, %s112
      %p114 = scmp.eq.s32.totalorder %s25, 0
      %p115 = por %p113, %p114
      %s117 = sadd.s32 %s116, 1
      %p120 = scmp.eq.s32.totalorder %s19, 1
      %p121 = scmp.ne.s32.totalorder %s116, %s118
      %p122 = scmp.eq.s32.totalorder %s19, 0
      %p123 = por %p121, %p122
      %p124 = scmp.ne.s32.totalorder %s116, %s118
      %p125 = scmp.eq.s32.totalorder %s24, 1
      %p126 = por %p124, %p125
      %p127 = scmp.ne.s32.totalorder %s118, %s119
      %p128 = scmp.eq.s32.totalorder %s24, 0
      %p129 = por %p127, %p128
      %p130 = scmp.ne.s32.totalorder %s118, %s119
      %p131 = scmp.eq.s32.totalorder %s25, 1
      %p132 = por %p130, %p131
      %p134 = scmp.ne.s32.totalorder %s119, %s133
      %p135 = scmp.eq.s32.totalorder %s25, 0
      %p136 = por %p134, %p135
      %s138 = sadd.s32 %s137, 1
      %p141 = scmp.eq.s32.totalorder %s19, 1
      %p142 = scmp.ne.s32.totalorder %s137, %s139
      %p143 = scmp.eq.s32.totalorder %s19, 0
      %p144 = por %p142, %p143
      %p145 = scmp.ne.s32.totalorder %s137, %s139
      %p146 = scmp.eq.s32.totalorder %s24, 1
      %p147 = por %p145, %p146
      %p148 = scmp.ne.s32.totalorder %s139, %s140
      %p149 = scmp.eq.s32.totalorder %s24, 0
      %p150 = por %p148, %p149
      %p151 = scmp.ne.s32.totalorder %s139, %s140
      %p152 = scmp.eq.s32.totalorder %s25, 1
      %p153 = por %p151, %p152
      %p155 = scmp.ne.s32.totalorder %s140, %s154
      %p156 = scmp.eq.s32.totalorder %s25, 0
      %p157 = por %p155, %p156
      %s159 = sadd.s32 %s158, 1
      %p162 = scmp.eq.s32.totalorder %s19, 1
      %p163 = scmp.ne.s32.totalorder %s158, %s160
      %p164 = scmp.eq.s32.totalorder %s19, 0
      %p165 = por %p163, %p164
      %p166 = scmp.ne.s32.totalorder %s158, %s160
      %p167 = scmp.eq.s32.totalorder %s24, 1
      %p168 = por %p166, %p167
      %p169 = scmp.ne.s32.totalorder %s160, %s161
      %p170 = scmp.eq.s32.totalorder %s24, 0
      %p171 = por %p169, %p170
      %p172 = scmp.ne.s32.totalorder %s160, %s161
      %p173 = scmp.eq.s32.totalorder %s25, 1
      %p174 = por %p172, %p173
      %p176 = scmp.ne.s32.totalorder %s161, %s175
      %p177 = scmp.eq.s32.totalorder %s25, 0
      %p178 = por %p176, %p177
      %s180 = sadd.s32 %s179, 1
      %p183 = scmp.eq.s32.totalorder %s19, 1
      %p184 = scmp.ne.s32.totalorder %s179, %s181
      %p185 = scmp.eq.s32.totalorder %s19, 0
      %p186 = por %p184, %p185
      %p187 = scmp.ne.s32.totalorder %s179, %s181
      %p188 = scmp.eq.s32.totalorder %s24, 1
      %p189 = por %p187, %p188
      %p190 = scmp.ne.s32.totalorder %s181, %s182
      %p191 = scmp.eq.s32.totalorder %s24, 0
      %p192 = por %p190, %p191
      %p193 = scmp.ne.s32.totalorder %s181, %s182
      %p194 = scmp.eq.s32.totalorder %s25, 1
      %p195 = por %p193, %p194
      %p197 = scmp.ne.s32.totalorder %s182, %s196
      %p198 = scmp.eq.s32.totalorder %s25, 0
      %p199 = por %p197, %p198
      %s201 = sadd.s32 %s200, 1
      %p204 = scmp.eq.s32.totalorder %s19, 1
      %p205 = scmp.ne.s32.totalorder %s200, %s202
      %p206 = scmp.eq.s32.totalorder %s19, 0
      %p207 = por %p205, %p206
      %p208 = scmp.ne.s32.totalorder %s200, %s202
      %p209 = scmp.eq.s32.totalorder %s24, 1
      %p210 = por %p208, %p209
      %p211 = scmp.ne.s32.totalorder %s202, %s203
      %p212 = scmp.eq.s32.totalorder %s24, 0
      %p213 = por %p211, %p212
      %p214 = scmp.ne.s32.totalorder %s202, %s203
      %p215 = scmp.eq.s32.totalorder %s25, 1
      %p216 = por %p214, %p215
      %p218 = scmp.ne.s32.totalorder %s203, %s217
      %p219 = scmp.eq.s32.totalorder %s25, 0
      %p220 = por %p218, %p219
      %s221 = ssub.s32 %s19, %s26
      %p222 = scmp.eq.s32.totalorder %s221, 0
      %s224 = sadd.s32 %s223, 1
      %s225 = scalar_select %p222, %s223, %s224
      %p228 = pneg %p222
      %p229 = scmp.eq.s32.totalorder %s19, 1
      %p230 = por %p228, %p229
      %p231 = scmp.ne.s32.totalorder %s223, %s226
      %p232 = scmp.eq.s32.totalorder %s19, 0
      %p233 = por %p231, %p232
      %p234 = scmp.ne.s32.totalorder %s223, %s226
      %p235 = scmp.eq.s32.totalorder %s24, 1
      %p236 = por %p234, %p235
      %p237 = scmp.ne.s32.totalorder %s226, %s227
      %p238 = scmp.eq.s32.totalorder %s24, 0
      %p239 = por %p237, %p238
      %p240 = scmp.ne.s32.totalorder %s226, %s227
      %p241 = scmp.eq.s32.totalorder %s25, 1
      %p242 = por %p240, %p241
      %p244 = scmp.ne.s32.totalorder %s227, %s243
      %p245 = scmp.eq.s32.totalorder %s25, 0
      %p246 = por %p244, %p245
      %p247 = scmp.le.s32.totalorder 1, %s19
      %p248 = scmp.lt.s32.totalorder %s19, 3
      %p249 = pnand %p247, %p248
      %p250 = pneg %p249
      // Predicated region
      $region9: #{mil_forward.1} parent=5 // pred_check
        _
      $region10: #{mil_forward.1} parent=5 // pred_check_branch
        %252 = sbr.rel (%p249) target = $region12
      $region11: #{mil_forward.1} parent=5 // pred_region
        %s253 = ssub.s32 %s19, 1
        // Predicated region
        $region13: #{mil_forward.1} parent=11 // pred_check
          %p254 = pneg %p66
        $region14: #{mil_forward.1} parent=11 // pred_check_branch
          %256 = sbr.rel (%p254) target = $region16
        $region15: #{mil_forward.1} parent=11 // pred_region
          _
        $region16: #{mil_forward.1} parent=11 // pred_fallthru
          _
        // Predicated region
        $region17: #{mil_forward.1} parent=11 // pred_check
          %p257 = pneg %p87
        $region18: #{mil_forward.1} parent=11 // pred_check_branch
          %259 = sbr.rel (%p257) target = $region20
        $region19: #{mil_forward.1} parent=11 // pred_region
          _
        $region20: #{mil_forward.1} parent=11 // pred_fallthru
          _
        // Predicated region
        $region21: #{mil_forward.1} parent=11 // pred_check
          %p260 = pneg %p108
        $region22: #{mil_forward.1} parent=11 // pred_check_branch
          %262 = sbr.rel (%p260) target = $region24
        $region23: #{mil_forward.1} parent=11 // pred_region
          _
        $region24: #{mil_forward.1} parent=11 // pred_fallthru
          _
        // Predicated region
        $region25: #{mil_forward.1} parent=11 // pred_check
          %p263 = pneg %p129
        $region26: #{mil_forward.1} parent=11 // pred_check_branch
          %265 = sbr.rel (%p263) target = $region28
        $region27: #{mil_forward.1} parent=11 // pred_region
          _
        $region28: #{mil_forward.1} parent=11 // pred_fallthru
          _
        // Predicated region
        $region29: #{mil_forward.1} parent=11 // pred_check
          %p266 = pneg %p150
        $region30: #{mil_forward.1} parent=11 // pred_check_branch
          %268 = sbr.rel (%p266) target = $region32
        $region31: #{mil_forward.1} parent=11 // pred_region
          _
        $region32: #{mil_forward.1} parent=11 // pred_fallthru
          _
        // Predicated region
        $region33: #{mil_forward.1} parent=11 // pred_check
          %p269 = pneg %p171
        $region34: #{mil_forward.1} parent=11 // pred_check_branch
          %271 = sbr.rel (%p269) target = $region36
        $region35: #{mil_forward.1} parent=11 // pred_region
          _
        $region36: #{mil_forward.1} parent=11 // pred_fallthru
          _
        // Predicated region
        $region37: #{mil_forward.1} parent=11 // pred_check
          %p272 = pneg %p192
        $region38: #{mil_forward.1} parent=11 // pred_check_branch
          %274 = sbr.rel (%p272) target = $region40
        $region39: #{mil_forward.1} parent=11 // pred_region
          _
        $region40: #{mil_forward.1} parent=11 // pred_fallthru
          _
        // Predicated region
        $region41: #{mil_forward.1} parent=11 // pred_check
          %p275 = pneg %p213
        $region42: #{mil_forward.1} parent=11 // pred_check_branch
          %277 = sbr.rel (%p275) target = $region44
        $region43: #{mil_forward.1} parent=11 // pred_region
          _
        $region44: #{mil_forward.1} parent=11 // pred_fallthru
          _
      $region12: #{mil_forward.1} parent=5 // pred_fallthru
        _
      %p278 = scmp.lt.s32.totalorder %s19, 2
      // Predicated region
      $region45: #{mil_forward.1} parent=5 // pred_check
        %p279 = pneg %p278
      $region46: #{mil_forward.1} parent=5 // pred_check_branch
        %281 = sbr.rel (%p279) target = $region48
      $region47: #{mil_forward.1} parent=5 // pred_region
        // Predicated region
        $region49: #{mil_forward.1} parent=47 // pred_check
          %p282 = pneg %p39
        $region50: #{mil_forward.1} parent=47 // pred_check_branch
          %284 = sbr.rel (%p282) target = $region52
        $region51: #{mil_forward.1} parent=47 // pred_region
          %p285 = scmp.lt.s32.totalorder %s19, 1
          %s286 = scalar_select %p285, %s19, 1
          %s287 = smul.addr %s286, 256
          %s288 = smul.addr %s287, 8
          %s289 = scalar_lea.vmem %s0, %s288
        $region52: #{mil_forward.1} parent=47 // pred_fallthru
          _
      $region48: #{mil_forward.1} parent=5 // pred_fallthru
        _
      %p290 = scmp.le.s32.totalorder 1, %s19
      %p291 = scmp.lt.s32.totalorder %s19, 3
      %p292 = pnand %p290, %p291
      %p293 = pneg %p292
      // Predicated region
      $region53: #{mil_forward.1} parent=5 // pred_check
        _
      $region54: #{mil_forward.1} parent=5 // pred_check_branch
        %295 = sbr.rel (%p292) target = $region56
      $region55: #{mil_forward.1} parent=5 // pred_region
        %s296 = ssub.s32 %s19, 1
        %p297 = scmp.lt.s32.totalorder %s24, 1
        %s298 = scalar_select %p297, %s24, 1
        %s299 = smul.addr %s298, 256
        %s300 = smul.addr %s299, 8
        %s301 = scalar_lea.vmem %s0, %s300
        %p302 = pneg %p45
        %p303 = pneg %p42
        %p304 = pneg %p66
        %p305 = pneg %p63
        %p306 = pneg %p87
        %p307 = pneg %p84
        %p308 = pneg %p108
        %p309 = pneg %p105
        %p310 = pneg %p129
        %p311 = pneg %p126
        %p312 = pneg %p150
        %p313 = pneg %p147
        %p314 = pneg %p171
        %p315 = pneg %p168
        %p316 = pneg %p192
        %p317 = pneg %p189
        %p318 = pneg %p213
        %p319 = pneg %p210
        %p320 = pneg %p239
        %p321 = pneg %p236
        %s322 = sand.u32 %s226, 1
        %s323 = scalar_lea.sflag [#allocation4], %s322
        %s324 = sand.u32 %s226, 1
        %s325 = scalar_lea.vmem [#allocation3], %s324
        %p326 = scmp.lt.s32.totalorder %s24, 1
        %s327 = scalar_select %p326, %s24, 1
        %s328 = smul.addr %s327, 256
        %s329 = smul.addr %s328, 8
        %s330 = scalar_lea.vmem %s0, %s329
        %v331 = vld [vmem:[%s330] sm:$0xff]
        %v332 = vld [vmem:[%s330 + $0x8] sm:$0xff]
        %v333 = vld [vmem:[%s330 + $0x10] sm:$0xff]
        %v334 = vld [vmem:[%s330 + $0x18] sm:$0xff]
        %v335 = vld [vmem:[%s330 + $0x20] sm:$0xff]
        %v336 = vld [vmem:[%s330 + $0x28] sm:$0xff]
        %v337 = vld [vmem:[%s330 + $0x30] sm:$0xff]
        %v338 = vld [vmem:[%s330 + $0x38] sm:$0xff]
        %v339 = vld [vmem:[%s330 + $0x40] sm:$0xff]
        %v340 = vld [vmem:[%s330 + $0x48] sm:$0xff]
        %v341 = vld [vmem:[%s330 + $0x50] sm:$0xff]
        %v342 = vld [vmem:[%s330 + $0x58] sm:$0xff]
        %v343 = vld [vmem:[%s330 + $0x60] sm:$0xff]
        %v344 = vld [vmem:[%s330 + $0x68] sm:$0xff]
        %v345 = vld [vmem:[%s330 + $0x70] sm:$0xff]
        %v346 = vld [vmem:[%s330 + $0x78] sm:$0xff]
        %v347 = vld [vmem:[%s330 + $0x80] sm:$0xff]
        %v348 = vld [vmem:[%s330 + $0x88] sm:$0xff]
        %v349 = vld [vmem:[%s330 + $0x90] sm:$0xff]
        %v350 = vld [vmem:[%s330 + $0x98] sm:$0xff]
        %v351 = vld [vmem:[%s330 + $0xa0] sm:$0xff]
        %v352 = vld [vmem:[%s330 + $0xa8] sm:$0xff]
        %v353 = vld [vmem:[%s330 + $0xb0] sm:$0xff]
        %v354 = vld [vmem:[%s330 + $0xb8] sm:$0xff]
        %v355 = vld [vmem:[%s330 + $0xc0] sm:$0xff]
        %v356 = vld [vmem:[%s330 + $0xc8] sm:$0xff]
        %v357 = vld [vmem:[%s330 + $0xd0] sm:$0xff]
        %v358 = vld [vmem:[%s330 + $0xd8] sm:$0xff]
        %v359 = vld [vmem:[%s330 + $0xe0] sm:$0xff]
        %v360 = vld [vmem:[%s330 + $0xe8] sm:$0xff]
        %v361 = vld [vmem:[%s330 + $0xf0] sm:$0xff]
        %v362 = vld [vmem:[%s330 + $0xf8] sm:$0xff]
        %v363 = vld [vmem:[%s330 + $0x100] sm:$0xff]
        %v364 = vld [vmem:[%s330 + $0x108] sm:$0xff]
        %v365 = vld [vmem:[%s330 + $0x110] sm:$0xff]
        %v366 = vld [vmem:[%s330 + $0x118] sm:$0xff]
        %v367 = vld [vmem:[%s330 + $0x120] sm:$0xff]
        %v368 = vld [vmem:[%s330 + $0x128] sm:$0xff]
        %v369 = vld [vmem:[%s330 + $0x130] sm:$0xff]
        %v370 = vld [vmem:[%s330 + $0x138] sm:$0xff]
        %v371 = vld [vmem:[%s330 + $0x140] sm:$0xff]
        %v372 = vld [vmem:[%s330 + $0x148] sm:$0xff]
        %v373 = vld [vmem:[%s330 + $0x150] sm:$0xff]
        %v374 = vld [vmem:[%s330 + $0x158] sm:$0xff]
        %v375 = vld [vmem:[%s330 + $0x160] sm:$0xff]
        %v376 = vld [vmem:[%s330 + $0x168] sm:$0xff]
        %v377 = vld [vmem:[%s330 + $0x170] sm:$0xff]
        %v378 = vld [vmem:[%s330 + $0x178] sm:$0xff]
        %v379 = vld [vmem:[%s330 + $0x180] sm:$0xff]
        %v380 = vld [vmem:[%s330 + $0x188] sm:$0xff]
        %v381 = vld [vmem:[%s330 + $0x190] sm:$0xff]
        %v382 = vld [vmem:[%s330 + $0x198] sm:$0xff]
        %v383 = vld [vmem:[%s330 + $0x1a0] sm:$0xff]
        %v384 = vld [vmem:[%s330 + $0x1a8] sm:$0xff]
        %v385 = vld [vmem:[%s330 + $0x1b0] sm:$0xff]
        %v386 = vld [vmem:[%s330 + $0x1b8] sm:$0xff]
        %v387 = vld [vmem:[%s330 + $0x1c0] sm:$0xff]
        %v388 = vld [vmem:[%s330 + $0x1c8] sm:$0xff]
        %v389 = vld [vmem:[%s330 + $0x1d0] sm:$0xff]
        %v390 = vld [vmem:[%s330 + $0x1d8] sm:$0xff]
        %v391 = vld [vmem:[%s330 + $0x1e0] sm:$0xff]
        %v392 = vld [vmem:[%s330 + $0x1e8] sm:$0xff]
        %v393 = vld [vmem:[%s330 + $0x1f0] sm:$0xff]
        %v394 = vld [vmem:[%s330 + $0x1f8] sm:$0xff]
        %v395 = vld [vmem:[%s330 + $0x200] sm:$0xff]
        %v396 = vld [vmem:[%s330 + $0x208] sm:$0xff]
        %v397 = vld [vmem:[%s330 + $0x210] sm:$0xff]
        %v398 = vld [vmem:[%s330 + $0x218] sm:$0xff]
        %v399 = vld [vmem:[%s330 + $0x220] sm:$0xff]
        %v400 = vld [vmem:[%s330 + $0x228] sm:$0xff]
        %v401 = vld [vmem:[%s330 + $0x230] sm:$0xff]
        %v402 = vld [vmem:[%s330 + $0x238] sm:$0xff]
        %v403 = vld [vmem:[%s330 + $0x240] sm:$0xff]
        %v404 = vld [vmem:[%s330 + $0x248] sm:$0xff]
        %v405 = vld [vmem:[%s330 + $0x250] sm:$0xff]
        %v406 = vld [vmem:[%s330 + $0x258] sm:$0xff]
        %v407 = vld [vmem:[%s330 + $0x260] sm:$0xff]
        %v408 = vld [vmem:[%s330 + $0x268] sm:$0xff]
        %v409 = vld [vmem:[%s330 + $0x270] sm:$0xff]
        %v410 = vld [vmem:[%s330 + $0x278] sm:$0xff]
        %v411 = vld [vmem:[%s330 + $0x280] sm:$0xff]
        %v412 = vld [vmem:[%s330 + $0x288] sm:$0xff]
        %v413 = vld [vmem:[%s330 + $0x290] sm:$0xff]
        %v414 = vld [vmem:[%s330 + $0x298] sm:$0xff]
        %v415 = vld [vmem:[%s330 + $0x2a0] sm:$0xff]
        %v416 = vld [vmem:[%s330 + $0x2a8] sm:$0xff]
        %v417 = vld [vmem:[%s330 + $0x2b0] sm:$0xff]
        %v418 = vld [vmem:[%s330 + $0x2b8] sm:$0xff]
        %v419 = vld [vmem:[%s330 + $0x2c0] sm:$0xff]
        %v420 = vld [vmem:[%s330 + $0x2c8] sm:$0xff]
        %v421 = vld [vmem:[%s330 + $0x2d0] sm:$0xff]
        %v422 = vld [vmem:[%s330 + $0x2d8] sm:$0xff]
        %v423 = vld [vmem:[%s330 + $0x2e0] sm:$0xff]
        %v424 = vld [vmem:[%s330 + $0x2e8] sm:$0xff]
        %v425 = vld [vmem:[%s330 + $0x2f0] sm:$0xff]
        %v426 = vld [vmem:[%s330 + $0x2f8] sm:$0xff]
        %v427 = vld [vmem:[%s330 + $0x300] sm:$0xff]
        %v428 = vld [vmem:[%s330 + $0x308] sm:$0xff]
        %v429 = vld [vmem:[%s330 + $0x310] sm:$0xff]
        %v430 = vld [vmem:[%s330 + $0x318] sm:$0xff]
        %v431 = vld [vmem:[%s330 + $0x320] sm:$0xff]
        %v432 = vld [vmem:[%s330 + $0x328] sm:$0xff]
        %v433 = vld [vmem:[%s330 + $0x330] sm:$0xff]
        %v434 = vld [vmem:[%s330 + $0x338] sm:$0xff]
        %v435 = vld [vmem:[%s330 + $0x340] sm:$0xff]
        %v436 = vld [vmem:[%s330 + $0x348] sm:$0xff]
        %v437 = vld [vmem:[%s330 + $0x350] sm:$0xff]
        %v438 = vld [vmem:[%s330 + $0x358] sm:$0xff]
        %v439 = vld [vmem:[%s330 + $0x360] sm:$0xff]
        %v440 = vld [vmem:[%s330 + $0x368] sm:$0xff]
        %v441 = vld [vmem:[%s330 + $0x370] sm:$0xff]
        %v442 = vld [vmem:[%s330 + $0x378] sm:$0xff]
        %v443 = vld [vmem:[%s330 + $0x380] sm:$0xff]
        %v444 = vld [vmem:[%s330 + $0x388] sm:$0xff]
        %v445 = vld [vmem:[%s330 + $0x390] sm:$0xff]
        %v446 = vld [vmem:[%s330 + $0x398] sm:$0xff]
        %v447 = vld [vmem:[%s330 + $0x3a0] sm:$0xff]
        %v448 = vld [vmem:[%s330 + $0x3a8] sm:$0xff]
        %v449 = vld [vmem:[%s330 + $0x3b0] sm:$0xff]
        %v450 = vld [vmem:[%s330 + $0x3b8] sm:$0xff]
        %v451 = vld [vmem:[%s330 + $0x3c0] sm:$0xff]
        %v452 = vld [vmem:[%s330 + $0x3c8] sm:$0xff]
        %v453 = vld [vmem:[%s330 + $0x3d0] sm:$0xff]
        %v454 = vld [vmem:[%s330 + $0x3d8] sm:$0xff]
        %v455 = vld [vmem:[%s330 + $0x3e0] sm:$0xff]
        %v456 = vld [vmem:[%s330 + $0x3e8] sm:$0xff]
        %v457 = vld [vmem:[%s330 + $0x3f0] sm:$0xff]
        %v458 = vld [vmem:[%s330 + $0x3f8] sm:$0xff]
        %v459 = vld [vmem:[%s330 + $0x400] sm:$0xff]
        %v460 = vld [vmem:[%s330 + $0x408] sm:$0xff]
        %v461 = vld [vmem:[%s330 + $0x410] sm:$0xff]
        %v462 = vld [vmem:[%s330 + $0x418] sm:$0xff]
        %v463 = vld [vmem:[%s330 + $0x420] sm:$0xff]
        %v464 = vld [vmem:[%s330 + $0x428] sm:$0xff]
        %v465 = vld [vmem:[%s330 + $0x430] sm:$0xff]
        %v466 = vld [vmem:[%s330 + $0x438] sm:$0xff]
        %v467 = vld [vmem:[%s330 + $0x440] sm:$0xff]
        %v468 = vld [vmem:[%s330 + $0x448] sm:$0xff]
        %v469 = vld [vmem:[%s330 + $0x450] sm:$0xff]
        %v470 = vld [vmem:[%s330 + $0x458] sm:$0xff]
        %v471 = vld [vmem:[%s330 + $0x460] sm:$0xff]
        %v472 = vld [vmem:[%s330 + $0x468] sm:$0xff]
        %v473 = vld [vmem:[%s330 + $0x470] sm:$0xff]
        %v474 = vld [vmem:[%s330 + $0x478] sm:$0xff]
        %v475 = vld [vmem:[%s330 + $0x480] sm:$0xff]
        %v476 = vld [vmem:[%s330 + $0x488] sm:$0xff]
        %v477 = vld [vmem:[%s330 + $0x490] sm:$0xff]
        %v478 = vld [vmem:[%s330 + $0x498] sm:$0xff]
        %v479 = vld [vmem:[%s330 + $0x4a0] sm:$0xff]
        %v480 = vld [vmem:[%s330 + $0x4a8] sm:$0xff]
        %v481 = vld [vmem:[%s330 + $0x4b0] sm:$0xff]
        %v482 = vld [vmem:[%s330 + $0x4b8] sm:$0xff]
        %v483 = vld [vmem:[%s330 + $0x4c0] sm:$0xff]
        %v484 = vld [vmem:[%s330 + $0x4c8] sm:$0xff]
        %v485 = vld [vmem:[%s330 + $0x4d0] sm:$0xff]
        %v486 = vld [vmem:[%s330 + $0x4d8] sm:$0xff]
        %v487 = vld [vmem:[%s330 + $0x4e0] sm:$0xff]
        %v488 = vld [vmem:[%s330 + $0x4e8] sm:$0xff]
        %v489 = vld [vmem:[%s330 + $0x4f0] sm:$0xff]
        %v490 = vld [vmem:[%s330 + $0x4f8] sm:$0xff]
        %v491 = vld [vmem:[%s330 + $0x500] sm:$0xff]
        %v492 = vld [vmem:[%s330 + $0x508] sm:$0xff]
        %v493 = vld [vmem:[%s330 + $0x510] sm:$0xff]
        %v494 = vld [vmem:[%s330 + $0x518] sm:$0xff]
        %v495 = vld [vmem:[%s330 + $0x520] sm:$0xff]
        %v496 = vld [vmem:[%s330 + $0x528] sm:$0xff]
        %v497 = vld [vmem:[%s330 + $0x530] sm:$0xff]
        %v498 = vld [vmem:[%s330 + $0x538] sm:$0xff]
        %v499 = vld [vmem:[%s330 + $0x540] sm:$0xff]
        %v500 = vld [vmem:[%s330 + $0x548] sm:$0xff]
        %v501 = vld [vmem:[%s330 + $0x550] sm:$0xff]
        %v502 = vld [vmem:[%s330 + $0x558] sm:$0xff]
        %v503 = vld [vmem:[%s330 + $0x560] sm:$0xff]
        %v504 = vld [vmem:[%s330 + $0x568] sm:$0xff]
        %v505 = vld [vmem:[%s330 + $0x570] sm:$0xff]
        %v506 = vld [vmem:[%s330 + $0x578] sm:$0xff]
        %v507 = vld [vmem:[%s330 + $0x580] sm:$0xff]
        %v508 = vld [vmem:[%s330 + $0x588] sm:$0xff]
        %v509 = vld [vmem:[%s330 + $0x590] sm:$0xff]
        %v510 = vld [vmem:[%s330 + $0x598] sm:$0xff]
        %v511 = vld [vmem:[%s330 + $0x5a0] sm:$0xff]
        %v512 = vld [vmem:[%s330 + $0x5a8] sm:$0xff]
        %v513 = vld [vmem:[%s330 + $0x5b0] sm:$0xff]
        %v514 = vld [vmem:[%s330 + $0x5b8] sm:$0xff]
        %v515 = vld [vmem:[%s330 + $0x5c0] sm:$0xff]
        %v516 = vld [vmem:[%s330 + $0x5c8] sm:$0xff]
        %v517 = vld [vmem:[%s330 + $0x5d0] sm:$0xff]
        %v518 = vld [vmem:[%s330 + $0x5d8] sm:$0xff]
        %v519 = vld [vmem:[%s330 + $0x5e0] sm:$0xff]
        %v520 = vld [vmem:[%s330 + $0x5e8] sm:$0xff]
        %v521 = vld [vmem:[%s330 + $0x5f0] sm:$0xff]
        %v522 = vld [vmem:[%s330 + $0x5f8] sm:$0xff]
        %v523 = vld [vmem:[%s330 + $0x600] sm:$0xff]
        %v524 = vld [vmem:[%s330 + $0x608] sm:$0xff]
        %v525 = vld [vmem:[%s330 + $0x610] sm:$0xff]
        %v526 = vld [vmem:[%s330 + $0x618] sm:$0xff]
        %v527 = vld [vmem:[%s330 + $0x620] sm:$0xff]
        %v528 = vld [vmem:[%s330 + $0x628] sm:$0xff]
        %v529 = vld [vmem:[%s330 + $0x630] sm:$0xff]
        %v530 = vld [vmem:[%s330 + $0x638] sm:$0xff]
        %v531 = vld [vmem:[%s330 + $0x640] sm:$0xff]
        %v532 = vld [vmem:[%s330 + $0x648] sm:$0xff]
        %v533 = vld [vmem:[%s330 + $0x650] sm:$0xff]
        %v534 = vld [vmem:[%s330 + $0x658] sm:$0xff]
        %v535 = vld [vmem:[%s330 + $0x660] sm:$0xff]
        %v536 = vld [vmem:[%s330 + $0x668] sm:$0xff]
        %v537 = vld [vmem:[%s330 + $0x670] sm:$0xff]
        %v538 = vld [vmem:[%s330 + $0x678] sm:$0xff]
        %v539 = vld [vmem:[%s330 + $0x680] sm:$0xff]
        %v540 = vld [vmem:[%s330 + $0x688] sm:$0xff]
        %v541 = vld [vmem:[%s330 + $0x690] sm:$0xff]
        %v542 = vld [vmem:[%s330 + $0x698] sm:$0xff]
        %v543 = vld [vmem:[%s330 + $0x6a0] sm:$0xff]
        %v544 = vld [vmem:[%s330 + $0x6a8] sm:$0xff]
        %v545 = vld [vmem:[%s330 + $0x6b0] sm:$0xff]
        %v546 = vld [vmem:[%s330 + $0x6b8] sm:$0xff]
        %v547 = vld [vmem:[%s330 + $0x6c0] sm:$0xff]
        %v548 = vld [vmem:[%s330 + $0x6c8] sm:$0xff]
        %v549 = vld [vmem:[%s330 + $0x6d0] sm:$0xff]
        %v550 = vld [vmem:[%s330 + $0x6d8] sm:$0xff]
        %v551 = vld [vmem:[%s330 + $0x6e0] sm:$0xff]
        %v552 = vld [vmem:[%s330 + $0x6e8] sm:$0xff]
        %v553 = vld [vmem:[%s330 + $0x6f0] sm:$0xff]
        %v554 = vld [vmem:[%s330 + $0x6f8] sm:$0xff]
        %v555 = vld [vmem:[%s330 + $0x700] sm:$0xff]
        %v556 = vld [vmem:[%s330 + $0x708] sm:$0xff]
        %v557 = vld [vmem:[%s330 + $0x710] sm:$0xff]
        %v558 = vld [vmem:[%s330 + $0x718] sm:$0xff]
        %v559 = vld [vmem:[%s330 + $0x720] sm:$0xff]
        %v560 = vld [vmem:[%s330 + $0x728] sm:$0xff]
        %v561 = vld [vmem:[%s330 + $0x730] sm:$0xff]
        %v562 = vld [vmem:[%s330 + $0x738] sm:$0xff]
        %v563 = vld [vmem:[%s330 + $0x740] sm:$0xff]
        %v564 = vld [vmem:[%s330 + $0x748] sm:$0xff]
        %v565 = vld [vmem:[%s330 + $0x750] sm:$0xff]
        %v566 = vld [vmem:[%s330 + $0x758] sm:$0xff]
        %v567 = vld [vmem:[%s330 + $0x760] sm:$0xff]
        %v568 = vld [vmem:[%s330 + $0x768] sm:$0xff]
        %v569 = vld [vmem:[%s330 + $0x770] sm:$0xff]
        %v570 = vld [vmem:[%s330 + $0x778] sm:$0xff]
        %v571 = vld [vmem:[%s330 + $0x780] sm:$0xff]
        %v572 = vld [vmem:[%s330 + $0x788] sm:$0xff]
        %v573 = vld [vmem:[%s330 + $0x790] sm:$0xff]
        %v574 = vld [vmem:[%s330 + $0x798] sm:$0xff]
        %v575 = vld [vmem:[%s330 + $0x7a0] sm:$0xff]
        %v576 = vld [vmem:[%s330 + $0x7a8] sm:$0xff]
        %v577 = vld [vmem:[%s330 + $0x7b0] sm:$0xff]
        %v578 = vld [vmem:[%s330 + $0x7b8] sm:$0xff]
        %v579 = vld [vmem:[%s330 + $0x7c0] sm:$0xff]
        %v580 = vld [vmem:[%s330 + $0x7c8] sm:$0xff]
        %v581 = vld [vmem:[%s330 + $0x7d0] sm:$0xff]
        %v582 = vld [vmem:[%s330 + $0x7d8] sm:$0xff]
        %v583 = vld [vmem:[%s330 + $0x7e0] sm:$0xff]
        %v584 = vld [vmem:[%s330 + $0x7e8] sm:$0xff]
        %v585 = vld [vmem:[%s330 + $0x7f0] sm:$0xff]
        %v586 = vld [vmem:[%s330 + $0x7f8] sm:$0xff]
        %v587 = vld [vmem:[%s1] sm:$0xff]
        %v588 = vld [vmem:[%s1 + $0x8] sm:$0xff]
        %v589 = vld [vmem:[%s2] sm:$0x1]
        %v591 = vlaneseq
        %v592 = vshrl.u32 %v591, 7
        %v593 = vsub.s32 0, %v592
        %v594 = vrot.slane %v589, %v593
        %vm596 = vcmask 130048
        %v598 = vsel %vm596, %v331, 0
        %v601 = vsel %vm596, %v332, 0
        %v604 = vsel %vm596, %v333, 0
        %v607 = vsel %vm596, %v334, 0
        %v610 = vsel %vm596, %v335, 0
        %v613 = vsel %vm596, %v336, 0
        %v616 = vsel %vm596, %v337, 0
        %v619 = vsel %vm596, %v338, 0
        %v622 = vsel %vm596, %v339, 0
        %v625 = vsel %vm596, %v340, 0
        %v628 = vsel %vm596, %v341, 0
        %v631 = vsel %vm596, %v342, 0
        %v634 = vsel %vm596, %v343, 0
        %v637 = vsel %vm596, %v344, 0
        %v640 = vsel %vm596, %v345, 0
        %v643 = vsel %vm596, %v346, 0
        %v646 = vsel %vm596, %v347, 0
        %v649 = vsel %vm596, %v348, 0
        %v652 = vsel %vm596, %v349, 0
        %v655 = vsel %vm596, %v350, 0
        %v658 = vsel %vm596, %v351, 0
        %v661 = vsel %vm596, %v352, 0
        %v664 = vsel %vm596, %v353, 0
        %v667 = vsel %vm596, %v354, 0
        %v670 = vsel %vm596, %v355, 0
        %v673 = vsel %vm596, %v356, 0
        %v676 = vsel %vm596, %v357, 0
        %v679 = vsel %vm596, %v358, 0
        %v682 = vsel %vm596, %v359, 0
        %v685 = vsel %vm596, %v360, 0
        %v688 = vsel %vm596, %v361, 0
        %v691 = vsel %vm596, %v362, 0
        %v694 = vsel %vm596, %v363, 0
        %v697 = vsel %vm596, %v364, 0
        %v700 = vsel %vm596, %v365, 0
        %v703 = vsel %vm596, %v366, 0
        %v706 = vsel %vm596, %v367, 0
        %v709 = vsel %vm596, %v368, 0
        %v712 = vsel %vm596, %v369, 0
        %v715 = vsel %vm596, %v370, 0
        %v718 = vsel %vm596, %v371, 0
        %v721 = vsel %vm596, %v372, 0
        %v724 = vsel %vm596, %v373, 0
        %v727 = vsel %vm596, %v374, 0
        %v730 = vsel %vm596, %v375, 0
        %v733 = vsel %vm596, %v376, 0
        %v736 = vsel %vm596, %v377, 0
        %v739 = vsel %vm596, %v378, 0
        %v742 = vsel %vm596, %v379, 0
        %v745 = vsel %vm596, %v380, 0
        %v748 = vsel %vm596, %v381, 0
        %v751 = vsel %vm596, %v382, 0
        %v754 = vsel %vm596, %v383, 0
        %v757 = vsel %vm596, %v384, 0
        %v760 = vsel %vm596, %v385, 0
        %v763 = vsel %vm596, %v386, 0
        %v766 = vsel %vm596, %v387, 0
        %v769 = vsel %vm596, %v388, 0
        %v772 = vsel %vm596, %v389, 0
        %v775 = vsel %vm596, %v390, 0
        %v778 = vsel %vm596, %v391, 0
        %v781 = vsel %vm596, %v392, 0
        %v784 = vsel %vm596, %v393, 0
        %v787 = vsel %vm596, %v394, 0
        %v790 = vsel %vm596, %v395, 0
        %v793 = vsel %vm596, %v396, 0
        %v796 = vsel %vm596, %v397, 0
        %v799 = vsel %vm596, %v398, 0
        %v802 = vsel %vm596, %v399, 0
        %v805 = vsel %vm596, %v400, 0
        %v808 = vsel %vm596, %v401, 0
        %v811 = vsel %vm596, %v402, 0
        %v814 = vsel %vm596, %v403, 0
        %v817 = vsel %vm596, %v404, 0
        %v820 = vsel %vm596, %v405, 0
        %v823 = vsel %vm596, %v406, 0
        %v826 = vsel %vm596, %v407, 0
        %v829 = vsel %vm596, %v408, 0
        %v832 = vsel %vm596, %v409, 0
        %v835 = vsel %vm596, %v410, 0
        %v838 = vsel %vm596, %v411, 0
        %v841 = vsel %vm596, %v412, 0
        %v844 = vsel %vm596, %v413, 0
        %v847 = vsel %vm596, %v414, 0
        %v850 = vsel %vm596, %v415, 0
        %v853 = vsel %vm596, %v416, 0
        %v856 = vsel %vm596, %v417, 0
        %v859 = vsel %vm596, %v418, 0
        %v862 = vsel %vm596, %v419, 0
        %v865 = vsel %vm596, %v420, 0
        %v868 = vsel %vm596, %v421, 0
        %v871 = vsel %vm596, %v422, 0
        %v874 = vsel %vm596, %v423, 0
        %v877 = vsel %vm596, %v424, 0
        %v880 = vsel %vm596, %v425, 0
        %v883 = vsel %vm596, %v426, 0
        %v886 = vsel %vm596, %v427, 0
        %v889 = vsel %vm596, %v428, 0
        %v892 = vsel %vm596, %v429, 0
        %v895 = vsel %vm596, %v430, 0
        %v898 = vsel %vm596, %v431, 0
        %v901 = vsel %vm596, %v432, 0
        %v904 = vsel %vm596, %v433, 0
        %v907 = vsel %vm596, %v434, 0
        %v910 = vsel %vm596, %v435, 0
        %v913 = vsel %vm596, %v436, 0
        %v916 = vsel %vm596, %v437, 0
        %v919 = vsel %vm596, %v438, 0
        %v922 = vsel %vm596, %v439, 0
        %v925 = vsel %vm596, %v440, 0
        %v928 = vsel %vm596, %v441, 0
        %v931 = vsel %vm596, %v442, 0
        %v934 = vsel %vm596, %v443, 0
        %v937 = vsel %vm596, %v444, 0
        %v940 = vsel %vm596, %v445, 0
        %v943 = vsel %vm596, %v446, 0
        %v946 = vsel %vm596, %v447, 0
        %v949 = vsel %vm596, %v448, 0
        %v952 = vsel %vm596, %v449, 0
        %v955 = vsel %vm596, %v450, 0
        %v958 = vsel %vm596, %v451, 0
        %v961 = vsel %vm596, %v452, 0
        %v964 = vsel %vm596, %v453, 0
        %v967 = vsel %vm596, %v454, 0
        %v970 = vsel %vm596, %v455, 0
        %v973 = vsel %vm596, %v456, 0
        %v976 = vsel %vm596, %v457, 0
        %v979 = vsel %vm596, %v458, 0
        %v982 = vsel %vm596, %v459, 0
        %v985 = vsel %vm596, %v460, 0
        %v988 = vsel %vm596, %v461, 0
        %v991 = vsel %vm596, %v462, 0
        %v994 = vsel %vm596, %v463, 0
        %v997 = vsel %vm596, %v464, 0
        %v1000 = vsel %vm596, %v465, 0
        %v1003 = vsel %vm596, %v466, 0
        %v1006 = vsel %vm596, %v467, 0
        %v1009 = vsel %vm596, %v468, 0
        %v1012 = vsel %vm596, %v469, 0
        %v1015 = vsel %vm596, %v470, 0
        %v1018 = vsel %vm596, %v471, 0
        %v1021 = vsel %vm596, %v472, 0
        %v1024 = vsel %vm596, %v473, 0
        %v1027 = vsel %vm596, %v474, 0
        %v1030 = vsel %vm596, %v475, 0
        %v1033 = vsel %vm596, %v476, 0
        %v1036 = vsel %vm596, %v477, 0
        %v1039 = vsel %vm596, %v478, 0
        %v1042 = vsel %vm596, %v479, 0
        %v1045 = vsel %vm596, %v480, 0
        %v1048 = vsel %vm596, %v481, 0
        %v1051 = vsel %vm596, %v482, 0
        %v1054 = vsel %vm596, %v483, 0
        %v1057 = vsel %vm596, %v484, 0
        %v1060 = vsel %vm596, %v485, 0
        %v1063 = vsel %vm596, %v486, 0
        %v1066 = vsel %vm596, %v487, 0
        %v1069 = vsel %vm596, %v488, 0
        %v1072 = vsel %vm596, %v489, 0
        %v1075 = vsel %vm596, %v490, 0
        %v1078 = vsel %vm596, %v491, 0
        %v1081 = vsel %vm596, %v492, 0
        %v1084 = vsel %vm596, %v493, 0
        %v1087 = vsel %vm596, %v494, 0
        %v1090 = vsel %vm596, %v495, 0
        %v1093 = vsel %vm596, %v496, 0
        %v1096 = vsel %vm596, %v497, 0
        %v1099 = vsel %vm596, %v498, 0
        %v1102 = vsel %vm596, %v499, 0
        %v1105 = vsel %vm596, %v500, 0
        %v1108 = vsel %vm596, %v501, 0
        %v1111 = vsel %vm596, %v502, 0
        %v1114 = vsel %vm596, %v503, 0
        %v1117 = vsel %vm596, %v504, 0
        %v1120 = vsel %vm596, %v505, 0
        %v1123 = vsel %vm596, %v506, 0
        %v1126 = vsel %vm596, %v507, 0
        %v1129 = vsel %vm596, %v508, 0
        %v1132 = vsel %vm596, %v509, 0
        %v1135 = vsel %vm596, %v510, 0
        %v1138 = vsel %vm596, %v511, 0
        %v1141 = vsel %vm596, %v512, 0
        %v1144 = vsel %vm596, %v513, 0
        %v1147 = vsel %vm596, %v514, 0
        %v1150 = vsel %vm596, %v515, 0
        %v1153 = vsel %vm596, %v516, 0
        %v1156 = vsel %vm596, %v517, 0
        %v1159 = vsel %vm596, %v518, 0
        %v1162 = vsel %vm596, %v519, 0
        %v1165 = vsel %vm596, %v520, 0
        %v1168 = vsel %vm596, %v521, 0
        %v1171 = vsel %vm596, %v522, 0
        %v1174 = vsel %vm596, %v523, 0
        %v1177 = vsel %vm596, %v524, 0
        %v1180 = vsel %vm596, %v525, 0
        %v1183 = vsel %vm596, %v526, 0
        %v1186 = vsel %vm596, %v527, 0
        %v1189 = vsel %vm596, %v528, 0
        %v1192 = vsel %vm596, %v529, 0
        %v1195 = vsel %vm596, %v530, 0
        %v1198 = vsel %vm596, %v531, 0
        %v1201 = vsel %vm596, %v532, 0
        %v1204 = vsel %vm596, %v533, 0
        %v1207 = vsel %vm596, %v534, 0
        %v1210 = vsel %vm596, %v535, 0
        %v1213 = vsel %vm596, %v536, 0
        %v1216 = vsel %vm596, %v537, 0
        %v1219 = vsel %vm596, %v538, 0
        %v1222 = vsel %vm596, %v539, 0
        %v1225 = vsel %vm596, %v540, 0
        %v1228 = vsel %vm596, %v541, 0
        %v1231 = vsel %vm596, %v542, 0
        %v1234 = vsel %vm596, %v543, 0
        %v1237 = vsel %vm596, %v544, 0
        %v1240 = vsel %vm596, %v545, 0
        %v1243 = vsel %vm596, %v546, 0
        %v1246 = vsel %vm596, %v547, 0
        %v1249 = vsel %vm596, %v548, 0
        %v1252 = vsel %vm596, %v549, 0
        %v1255 = vsel %vm596, %v550, 0
        %v1258 = vsel %vm596, %v551, 0
        %v1261 = vsel %vm596, %v552, 0
        %v1264 = vsel %vm596, %v553, 0
        %v1267 = vsel %vm596, %v554, 0
        %v1270 = vsel %vm596, %v555, 0
        %v1273 = vsel %vm596, %v556, 0
        %v1276 = vsel %vm596, %v557, 0
        %v1279 = vsel %vm596, %v558, 0
        %v1282 = vsel %vm596, %v559, 0
        %v1285 = vsel %vm596, %v560, 0
        %v1288 = vsel %vm596, %v561, 0
        %v1291 = vsel %vm596, %v562, 0
        %v1294 = vsel %vm596, %v563, 0
        %v1297 = vsel %vm596, %v564, 0
        %v1300 = vsel %vm596, %v565, 0
        %v1303 = vsel %vm596, %v566, 0
        %v1306 = vsel %vm596, %v567, 0
        %v1309 = vsel %vm596, %v568, 0
        %v1312 = vsel %vm596, %v569, 0
        %v1315 = vsel %vm596, %v570, 0
        %v1318 = vsel %vm596, %v571, 0
        %v1321 = vsel %vm596, %v572, 0
        %v1324 = vsel %vm596, %v573, 0
        %v1327 = vsel %vm596, %v574, 0
        %v1330 = vsel %vm596, %v575, 0
        %v1333 = vsel %vm596, %v576, 0
        %v1336 = vsel %vm596, %v577, 0
        %v1339 = vsel %vm596, %v578, 0
        %v1342 = vsel %vm596, %v579, 0
        %v1345 = vsel %vm596, %v580, 0
        %v1348 = vsel %vm596, %v581, 0
        %v1351 = vsel %vm596, %v582, 0
        %v1354 = vsel %vm596, %v583, 0
        %v1357 = vsel %vm596, %v584, 0
        %v1360 = vsel %vm596, %v585, 0
        %v1363 = vsel %vm596, %v586, 0
        %1365 = vmatprep.subr.mxu0 0.0
        %1366 = vmatpush1.msra.mxu0 %v587
        %1367 = vmatprep.subr.mxu0 0.0
        %1368 = vmatpush1.msra.mxu0 %v588
        %1369 = vmatprep.subr.mxu0 0.0
        %1370 = vmatpush1.msra.mxu0 0.0
        %1371 = vmatprep.subr.mxu0 0.0
        %1372 = vmatpush1.msra.mxu0 0.0
        %1373 = vmatprep.subr.mxu0 0.0
        %1374 = vmatpush1.msra.mxu0 0.0
        %1375 = vmatprep.subr.mxu0 0.0
        %1376 = vmatpush1.msra.mxu0 0.0
        %1377 = vmatprep.subr.mxu0 0.0
        %1378 = vmatpush1.msra.mxu0 0.0
        %1379 = vmatprep.subr.mxu0 0.0
        %1380 = vmatpush1.msra.mxu0 0.0
        %1381 = vmatprep.subr.mxu0 0.0
        %1382 = vmatpush1.msra.mxu0 0.0
        %1383 = vmatprep.subr.mxu0 0.0
        %1384 = vmatpush1.msra.mxu0 0.0
        %1385 = vmatprep.subr.mxu0 0.0
        %1386 = vmatpush1.msra.mxu0 0.0
        %1387 = vmatprep.subr.mxu0 0.0
        %1388 = vmatpush1.msra.mxu0 0.0
        %1389 = vmatprep.subr.mxu0 0.0
        %1390 = vmatpush1.msra.mxu0 0.0
        %1391 = vmatprep.subr.mxu0 0.0
        %1392 = vmatpush1.msra.mxu0 0.0
        %1393 = vmatprep.subr.mxu0 0.0
        %1394 = vmatpush1.msra.mxu0 0.0
        %1395 = vmatprep.subr.mxu0 0.0
        %1396 = vmatpush1.msra.mxu0 0.0
        %1397 = vmatprep.subr.mxu0 0.0
        %1398 = vmatpush1.msra.mxu0 0.0
        %1399 = vmatprep.subr.mxu0 0.0
        %1400 = vmatpush1.msra.mxu0 0.0
        %1401 = vmatprep.subr.mxu0 0.0
        %1402 = vmatpush1.msra.mxu0 0.0
        %1403 = vmatprep.subr.mxu0 0.0
        %1404 = vmatpush1.msra.mxu0 0.0
        %1405 = vmatprep.subr.mxu0 0.0
        %1406 = vmatpush1.msra.mxu0 0.0
        %1407 = vmatprep.subr.mxu0 0.0
        %1408 = vmatpush1.msra.mxu0 0.0
        %1409 = vmatprep.subr.mxu0 0.0
        %1410 = vmatpush1.msra.mxu0 0.0
        %1411 = vmatprep.subr.mxu0 0.0
        %1412 = vmatpush1.msra.mxu0 0.0
        %1413 = vmatprep.subr.mxu0 0.0
        %1414 = vmatpush1.msra.mxu0 0.0
        %1415 = vmatprep.subr.mxu0 0.0
        %1416 = vmatpush1.msra.mxu0 0.0
        %1417 = vmatprep.subr.mxu0 0.0
        %1418 = vmatpush1.msra.mxu0 0.0
        %1419 = vmatprep.subr.mxu0 0.0
        %1420 = vmatpush1.msra.mxu0 0.0
        %1421 = vmatprep.subr.mxu0 0.0
        %1422 = vmatpush1.msra.mxu0 0.0
        %1423 = vmatprep.subr.mxu0 0.0
        %1424 = vmatpush1.msra.mxu0 0.0
        %1425 = vmatprep.subr.mxu0 0.0
        %1426 = vmatpush1.msra.mxu0 0.0
        %1427 = vmatprep.subr.mxu0 0.0
        %1428 = vmatpush1.msra.mxu0 0.0
        %1429 = vmatprep.mubr.f32.mxu0 0.0
        %1430 = vmatmul.mubr.f32.gmra.mrb[0].mxu0 %v598
        %v1431 = vpop.f32.mrb[0].mxu0
        %v1432 = vadd.f32 %v594, %v1431
        %v1433 = vpop.f32.mrb[0].mxu0
        %1434 = vmatprep.mubr.f32.mxu0 0.0
        %1435 = vmatmul.mubr.f32.gmra.mrb[0].mxu0 %v601
        %v1436 = vpop.f32.mrb[0].mxu0
        %v1437 = vadd.f32 %v594, %v1436
        %v1438 = vpop.f32.mrb[0].mxu0
        %1439 = vmatprep.mubr.f32.mxu0 0.0
        %1440 = vmatmul.mubr.f32.gmra.mrb[0].mxu0 %v604
        %v1441 = vpop.f32.mrb[0].mxu0
        %v1442 = vadd.f32 %v594, %v1441
        %v1443 = vpop.f32.mrb[0].mxu0
        %1444 = vmatprep.mubr.f32.mxu0 0.0
        %1445 = vmatmul.mubr.f32.gmra.mrb[0].mxu0 %v607
        %v1446 = vpop.f32.mrb[0].mxu0
        %v1447 = vadd.f32 %v594, %v1446
        %v1448 = vpop.f32.mrb[0].mxu0
        %1449 = vmatprep.mubr.f32.mxu0 0.0
        %1450 = vmatmul.mubr.f32.gmra.mrb[0].mxu0 %v610
        %v1451 = vpop.f32.mrb[0].mxu0
        %v1452 = vadd.f32 %v594, %v1451
        %v1453 = vpop.f32.mrb[0].mxu0
        %1454 = vmatprep.mubr.f32.mxu0 0.0
        %1455 = vmatmul.mubr.f32.gmra.mrb[0].mxu0 %v613
        %v1456 = vpop.f32.mrb[0].mxu0
        %v1457 = vadd.f32 %v594, %v1456
        %v1458 = vpop.f32.mrb[0].mxu0
        %1459 = vmatprep.mubr.f32.mxu0 0.0
        %1460 = vmatmul.mubr.f32.gmra.mrb[0].mxu0 %v616
        %v1461 = vpop.f32.mrb[0].mxu0
        %v1462 = vadd.f32 %v594, %v1461
        %v1463 = vpop.f32.mrb[0].mxu0
        %1464 = vmatprep.mubr.f32.mxu0 0.0
        %1465 = vmatmul.mubr.f32.gmra.mrb[0].mxu0 %v619
        %v1466 = vpop.f32.mrb[0].mxu0
        %v1467 = vadd.f32 %v594, %v1466
        %v1468 = vpop.f32.mrb[0].mxu0
        %1469 = vmatprep.mubr.f32.mxu0 0.0
        %1470 = vmatmul.mubr.f32.gmra.mrb[0].mxu0 %v622
        %v1471 = vpop.f32.mrb[0].mxu0
        %v1472 = vadd.f32 %v594, %v1471
        %v1473 = vpop.f32.mrb[0].mxu0
        %1474 = vmatprep.mubr.f32.mxu0 0.0
        %1475 = vmatmul.mubr.f32.gmra.mrb[0].mxu0 %v625
        %v1476 = vpop.f32.mrb[0].mxu0
        %v1477 = vadd.f32 %v594, %v1476
        %v1478 = vpop.f32.mrb[0].mxu0
        %1479 = vmatprep.mubr.f32.mxu0 0.0
        %1480 = vmatmul.mubr.f32.gmra.mrb[0].mxu0 %v628
        %v1481 = vpop.f32.mrb[0].mxu0
        %v1482 = vadd.f32 %v594, %v1481
        %v1483 = vpop.f32.mrb[0].mxu0
        %1484 = vmatprep.mubr.f32.mxu0 0.0
        %1485 = vmatmul.mubr.f32.gmra.mrb[0].mxu0 %v631
        %v1486 = vpop.f32.mrb[0].mxu0
        %v1487 = vadd.f32 %v594, %v1486
        %v1488 = vpop.f32.mrb[0].mxu0
        %1489 = vmatprep.mubr.f32.mxu0 0.0
        %1490 = vmatmul.mubr.f32.gmra.mrb[0].mxu0 %v634
        %v1491 = vpop.f32.mrb[0].mxu0
        %v1492 = vadd.f32 %v594, %v1491
        %v1493 = vpop.f32.mrb[0].mxu0
        %1494 = vmatprep.mubr.f32.mxu0 0.0
        %1495 = vmatmul.mubr.f32.gmra.mrb[0].mxu0 %v637
        %v1496 = vpop.f32.mrb[0].mxu0
        %v1497 = vadd.f32 %v594, %v1496
        %v1498 = vpop.f32.mrb[0].mxu0
        %1499 = vmatprep.mubr.f32.mxu0 0.0
        %1500 = vmatmul.mubr.f32.gmra.mrb[0].mxu0 %v640
        %v1501 = vpop.f32.mrb[0].mxu0
        %v1502 = vadd.f32 %v594, %v1501
        %v1503 = vpop.f32.mrb[0].mxu0
        %1504 = vmatprep.mubr.f32.mxu0 0.0
        %1505 = vmatmul.mubr.f32.gmra.mrb[0].mxu0 %v643
        %v1506 = vpop.f32.mrb[0].mxu0
        %v1507 = vadd.f32 %v594, %v1506
        %v1508 = vpop.f32.mrb[0].mxu0
        %1509 = vmatprep.mubr.f32.mxu0 0.0
        %1510 = vmatmul.mubr.f32.gmra.mrb[0].mxu0 %v646
        %v1511 = vpop.f32.mrb[0].mxu0
        %v1512 = vadd.f32 %v594, %v1511
        %v1513 = vpop.f32.mrb[0].mxu0
        %1514 = vmatprep.mubr.f32.mxu0 0.0
        %1515 = vmatmul.mubr.f32.gmra.mrb[0].mxu0 %v649
        %v1516 = vpop.f32.mrb[0].mxu0
        %v1517 = vadd.f32 %v594, %v1516
        %v1518 = vpop.f32.mrb[0].mxu0
        %1519 = vmatprep.mubr.f32.mxu0 0.0
        %1520 = vmatmul.mubr.f32.gmra.mrb[0].mxu0 %v652
        %v1521 = vpop.f32.mrb[0].mxu0
        %v1522 = vadd.f32 %v594, %v1521
        %v1523 = vpop.f32.mrb[0].mxu0
        %1524 = vmatprep.mubr.f32.mxu0 0.0
        %1525 = vmatmul.mubr.f32.gmra.mrb[0].mxu0 %v655
        %v1526 = vpop.f32.mrb[0].mxu0
        %v1527 = vadd.f32 %v594, %v1526
        %v1528 = vpop.f32.mrb[0].mxu0
        %1529 = vmatprep.mubr.f32.mxu0 0.0
        %1530 = vmatmul.mubr.f32.gmra.mrb[0].mxu0 %v658
        %v1531 = vpop.f32.mrb[0].mxu0
        %v1532 = vadd.f32 %v594, %v1531
        %v1533 = vpop.f32.mrb[0].mxu0
        %1534 = vmatprep.mubr.f32.mxu0 0.0
        %1535 = vmatmul.mubr.f32.gmra.mrb[0].mxu0 %v661
        %v1536 = vpop.f32.mrb[0].mxu0
        %v1537 = vadd.f32 %v594, %v1536
        %v1538 = vpop.f32.mrb[0].mxu0
        %1539 = vmatprep.mubr.f32.mxu0 0.0
        %1540 = vmatmul.mubr.f32.gmra.mrb[0].mxu0 %v664
        %v1541 = vpop.f32.mrb[0].mxu0
        %v1542 = vadd.f32 %v594, %v1541
        %v1543 = vpop.f32.mrb[0].mxu0
        %1544 = vmatprep.mubr.f32.mxu0 0.0
        %1545 = vmatmul.mubr.f32.gmra.mrb[0].mxu0 %v667
        %v1546 = vpop.f32.mrb[0].mxu0
        %v1547 = vadd.f32 %v594, %v1546
        %v1548 = vpop.f32.mrb[0].mxu0
        %1549 = vmatprep.mubr.f32.mxu0 0.0
        %1550 = vmatmul.mubr.f32.gmra.mrb[0].mxu0 %v670
        %v1551 = vpop.f32.mrb[0].mxu0
        %v1552 = vadd.f32 %v594, %v1551
        %v1553 = vpop.f32.mrb[0].mxu0
        %1554 = vmatprep.mubr.f32.mxu0 0.0
        %1555 = vmatmul.mubr.f32.gmra.mrb[0].mxu0 %v673
        %v1556 = vpop.f32.mrb[0].mxu0
        %v1557 = vadd.f32 %v594, %v1556
        %v1558 = vpop.f32.mrb[0].mxu0
        %1559 = vmatprep.mubr.f32.mxu0 0.0
        %1560 = vmatmul.mubr.f32.gmra.mrb[0].mxu0 %v676
        %v1561 = vpop.f32.mrb[0].mxu0
        %v1562 = vadd.f32 %v594, %v1561
        %v1563 = vpop.f32.mrb[0].mxu0
        %1564 = vmatprep.mubr.f32.mxu0 0.0
        %1565 = vmatmul.mubr.f32.gmra.mrb[0].mxu0 %v679
        %v1566 = vpop.f32.mrb[0].mxu0
        %v1567 = vadd.f32 %v594, %v1566
        %v1568 = vpop.f32.mrb[0].mxu0
        %1569 = vmatprep.mubr.f32.mxu0 0.0
        %1570 = vmatmul.mubr.f32.gmra.mrb[0].mxu0 %v682
        %v1571 = vpop.f32.mrb[0].mxu0
        %v1572 = vadd.f32 %v594, %v1571
        %v1573 = vpop.f32.mrb[0].mxu0
        %1574 = vmatprep.mubr.f32.mxu0 0.0
        %1575 = vmatmul.mubr.f32.gmra.mrb[0].mxu0 %v685
        %v1576 = vpop.f32.mrb[0].mxu0
        %v1577 = vadd.f32 %v594, %v1576
        %v1578 = vpop.f32.mrb[0].mxu0
        %1579 = vmatprep.mubr.f32.mxu0 0.0
        %1580 = vmatmul.mubr.f32.gmra.mrb[0].mxu0 %v688
        %v1581 = vpop.f32.mrb[0].mxu0
        %v1582 = vadd.f32 %v594, %v1581
        %v1583 = vpop.f32.mrb[0].mxu0
        %1584 = vmatprep.mubr.f32.mxu0 0.0
        %1585 = vmatmul.mubr.f32.gmra.mrb[0].mxu0 %v691
        %v1586 = vpop.f32.mrb[0].mxu0
        %v1587 = vadd.f32 %v594, %v1586
        %v1588 = vpop.f32.mrb[0].mxu0
        %1589 = vmatprep.mubr.f32.mxu0 0.0
        %1590 = vmatmul.mubr.f32.gmra.mrb[0].mxu0 %v694
        %v1591 = vpop.f32.mrb[0].mxu0
        %v1592 = vadd.f32 %v594, %v1591
        %v1593 = vpop.f32.mrb[0].mxu0
        %1594 = vmatprep.mubr.f32.mxu0 0.0
        %1595 = vmatmul.mubr.f32.gmra.mrb[0].mxu0 %v697
        %v1596 = vpop.f32.mrb[0].mxu0
        %v1597 = vadd.f32 %v594, %v1596
        %v1598 = vpop.f32.mrb[0].mxu0
        %1599 = vmatprep.mubr.f32.mxu0 0.0
        %1600 = vmatmul.mubr.f32.gmra.mrb[0].mxu0 %v700
        %v1601 = vpop.f32.mrb[0].mxu0
        %v1602 = vadd.f32 %v594, %v1601
        %v1603 = vpop.f32.mrb[0].mxu0
        %1604 = vmatprep.mubr.f32.mxu0 0.0
        %1605 = vmatmul.mubr.f32.gmra.mrb[0].mxu0 %v703
        %v1606 = vpop.f32.mrb[0].mxu0
        %v1607 = vadd.f32 %v594, %v1606
        %v1608 = vpop.f32.mrb[0].mxu0
        %1609 = vmatprep.mubr.f32.mxu0 0.0
        %1610 = vmatmul.mubr.f32.gmra.mrb[0].mxu0 %v706
        %v1611 = vpop.f32.mrb[0].mxu0
        %v1612 = vadd.f32 %v594, %v1611
        %v1613 = vpop.f32.mrb[0].mxu0
        %1614 = vmatprep.mubr.f32.mxu0 0.0
        %1615 = vmatmul.mubr.f32.gmra.mrb[0].mxu0 %v709
        %v1616 = vpop.f32.mrb[0].mxu0
        %v1617 = vadd.f32 %v594, %v1616
        %v1618 = vpop.f32.mrb[0].mxu0
        %1619 = vmatprep.mubr.f32.mxu0 0.0
        %1620 = vmatmul.mubr.f32.gmra.mrb[0].mxu0 %v712
        %v1621 = vpop.f32.mrb[0].mxu0
        %v1622 = vadd.f32 %v594, %v1621
        %v1623 = vpop.f32.mrb[0].mxu0
        %1624 = vmatprep.mubr.f32.mxu0 0.0
        %1625 = vmatmul.mubr.f32.gmra.mrb[0].mxu0 %v715
        %v1626 = vpop.f32.mrb[0].mxu0
        %v1627 = vadd.f32 %v594, %v1626
        %v1628 = vpop.f32.mrb[0].mxu0
        %1629 = vmatprep.mubr.f32.mxu0 0.0
        %1630 = vmatmul.mubr.f32.gmra.mrb[0].mxu0 %v718
        %v1631 = vpop.f32.mrb[0].mxu0
        %v1632 = vadd.f32 %v594, %v1631
        %v1633 = vpop.f32.mrb[0].mxu0
        %1634 = vmatprep.mubr.f32.mxu0 0.0
        %1635 = vmatmul.mubr.f32.gmra.mrb[0].mxu0 %v721
        %v1636 = vpop.f32.mrb[0].mxu0
        %v1637 = vadd.f32 %v594, %v1636
        %v1638 = vpop.f32.mrb[0].mxu0
        %1639 = vmatprep.mubr.f32.mxu0 0.0
        %1640 = vmatmul.mubr.f32.gmra.mrb[0].mxu0 %v724
        %v1641 = vpop.f32.mrb[0].mxu0
        %v1642 = vadd.f32 %v594, %v1641
        %v1643 = vpop.f32.mrb[0].mxu0
        %1644 = vmatprep.mubr.f32.mxu0 0.0
        %1645 = vmatmul.mubr.f32.gmra.mrb[0].mxu0 %v727
        %v1646 = vpop.f32.mrb[0].mxu0
        %v1647 = vadd.f32 %v594, %v1646
        %v1648 = vpop.f32.mrb[0].mxu0
        %1649 = vmatprep.mubr.f32.mxu0 0.0
        %1650 = vmatmul.mubr.f32.gmra.mrb[0].mxu0 %v730
        %v1651 = vpop.f32.mrb[0].mxu0
        %v1652 = vadd.f32 %v594, %v1651
        %v1653 = vpop.f32.mrb[0].mxu0
        %1654 = vmatprep.mubr.f32.mxu0 0.0
        %1655 = vmatmul.mubr.f32.gmra.mrb[0].mxu0 %v733
        %v1656 = vpop.f32.mrb[0].mxu0
        %v1657 = vadd.f32 %v594, %v1656
        %v1658 = vpop.f32.mrb[0].mxu0
        %1659 = vmatprep.mubr.f32.mxu0 0.0
        %1660 = vmatmul.mubr.f32.gmra.mrb[0].mxu0 %v736
        %v1661 = vpop.f32.mrb[0].mxu0
        %v1662 = vadd.f32 %v594, %v1661
        %v1663 = vpop.f32.mrb[0].mxu0
        %1664 = vmatprep.mubr.f32.mxu0 0.0
        %1665 = vmatmul.mubr.f32.gmra.mrb[0].mxu0 %v739
        %v1666 = vpop.f32.mrb[0].mxu0
        %v1667 = vadd.f32 %v594, %v1666
        %v1668 = vpop.f32.mrb[0].mxu0
        %1669 = vmatprep.mubr.f32.mxu0 0.0
        %1670 = vmatmul.mubr.f32.gmra.mrb[0].mxu0 %v742
        %v1671 = vpop.f32.mrb[0].mxu0
        %v1672 = vadd.f32 %v594, %v1671
        %v1673 = vpop.f32.mrb[0].mxu0
        %1674 = vmatprep.mubr.f32.mxu0 0.0
        %1675 = vmatmul.mubr.f32.gmra.mrb[0].mxu0 %v745
        %v1676 = vpop.f32.mrb[0].mxu0
        %v1677 = vadd.f32 %v594, %v1676
        %v1678 = vpop.f32.mrb[0].mxu0
        %1679 = vmatprep.mubr.f32.mxu0 0.0
        %1680 = vmatmul.mubr.f32.gmra.mrb[0].mxu0 %v748
        %v1681 = vpop.f32.mrb[0].mxu0
        %v1682 = vadd.f32 %v594, %v1681
        %v1683 = vpop.f32.mrb[0].mxu0
        %1684 = vmatprep.mubr.f32.mxu0 0.0
        %1685 = vmatmul.mubr.f32.gmra.mrb[0].mxu0 %v751
        %v1686 = vpop.f32.mrb[0].mxu0
        %v1687 = vadd.f32 %v594, %v1686
        %v1688 = vpop.f32.mrb[0].mxu0
        %1689 = vmatprep.mubr.f32.mxu0 0.0
        %1690 = vmatmul.mubr.f32.gmra.mrb[0].mxu0 %v754
        %v1691 = vpop.f32.mrb[0].mxu0
        %v1692 = vadd.f32 %v594, %v1691
        %v1693 = vpop.f32.mrb[0].mxu0
        %1694 = vmatprep.mubr.f32.mxu0 0.0
        %1695 = vmatmul.mubr.f32.gmra.mrb[0].mxu0 %v757
        %v1696 = vpop.f32.mrb[0].mxu0
        %v1697 = vadd.f32 %v594, %v1696
        %v1698 = vpop.f32.mrb[0].mxu0
        %1699 = vmatprep.mubr.f32.mxu0 0.0
        %1700 = vmatmul.mubr.f32.gmra.mrb[0].mxu0 %v760
        %v1701 = vpop.f32.mrb[0].mxu0
        %v1702 = vadd.f32 %v594, %v1701
        %v1703 = vpop.f32.mrb[0].mxu0
        %1704 = vmatprep.mubr.f32.mxu0 0.0
        %1705 = vmatmul.mubr.f32.gmra.mrb[0].mxu0 %v763
        %v1706 = vpop.f32.mrb[0].mxu0
        %v1707 = vadd.f32 %v594, %v1706
        %v1708 = vpop.f32.mrb[0].mxu0
        %1709 = vmatprep.mubr.f32.mxu0 0.0
        %1710 = vmatmul.mubr.f32.gmra.mrb[0].mxu0 %v766
        %v1711 = vpop.f32.mrb[0].mxu0
        %v1712 = vadd.f32 %v594, %v1711
        %v1713 = vpop.f32.mrb[0].mxu0
        %1714 = vmatprep.mubr.f32.mxu0 0.0
        %1715 = vmatmul.mubr.f32.gmra.mrb[0].mxu0 %v769
        %v1716 = vpop.f32.mrb[0].mxu0
        %v1717 = vadd.f32 %v594, %v1716
        %v1718 = vpop.f32.mrb[0].mxu0
        %1719 = vmatprep.mubr.f32.mxu0 0.0
        %1720 = vmatmul.mubr.f32.gmra.mrb[0].mxu0 %v772
        %v1721 = vpop.f32.mrb[0].mxu0
        %v1722 = vadd.f32 %v594, %v1721
        %v1723 = vpop.f32.mrb[0].mxu0
        %1724 = vmatprep.mubr.f32.mxu0 0.0
        %1725 = vmatmul.mubr.f32.gmra.mrb[0].mxu0 %v775
        %v1726 = vpop.f32.mrb[0].mxu0
        %v1727 = vadd.f32 %v594, %v1726
        %v1728 = vpop.f32.mrb[0].mxu0
        %1729 = vmatprep.mubr.f32.mxu0 0.0
        %1730 = vmatmul.mubr.f32.gmra.mrb[0].mxu0 %v778
        %v1731 = vpop.f32.mrb[0].mxu0
        %v1732 = vadd.f32 %v594, %v1731
        %v1733 = vpop.f32.mrb[0].mxu0
        %1734 = vmatprep.mubr.f32.mxu0 0.0
        %1735 = vmatmul.mubr.f32.gmra.mrb[0].mxu0 %v781
        %v1736 = vpop.f32.mrb[0].mxu0
        %v1737 = vadd.f32 %v594, %v1736
        %v1738 = vpop.f32.mrb[0].mxu0
        %1739 = vmatprep.mubr.f32.mxu0 0.0
        %1740 = vmatmul.mubr.f32.gmra.mrb[0].mxu0 %v784
        %v1741 = vpop.f32.mrb[0].mxu0
        %v1742 = vadd.f32 %v594, %v1741
        %v1743 = vpop.f32.mrb[0].mxu0
        %1744 = vmatprep.mubr.f32.mxu0 0.0
        %1745 = vmatmul.mubr.f32.gmra.mrb[0].mxu0 %v787
        %v1746 = vpop.f32.mrb[0].mxu0
        %v1747 = vadd.f32 %v594, %v1746
        %v1748 = vpop.f32.mrb[0].mxu0
        %1749 = vmatprep.mubr.f32.mxu0 0.0
        %1750 = vmatmul.mubr.f32.gmra.mrb[0].mxu0 %v790
        %v1751 = vpop.f32.mrb[0].mxu0
        %v1752 = vadd.f32 %v594, %v1751
        %v1753 = vpop.f32.mrb[0].mxu0
        %1754 = vmatprep.mubr.f32.mxu0 0.0
        %1755 = vmatmul.mubr.f32.gmra.mrb[0].mxu0 %v793
        %v1756 = vpop.f32.mrb[0].mxu0
        %v1757 = vadd.f32 %v594, %v1756
        %v1758 = vpop.f32.mrb[0].mxu0
        %1759 = vmatprep.mubr.f32.mxu0 0.0
        %1760 = vmatmul.mubr.f32.gmra.mrb[0].mxu0 %v796
        %v1761 = vpop.f32.mrb[0].mxu0
        %v1762 = vadd.f32 %v594, %v1761
        %v1763 = vpop.f32.mrb[0].mxu0
        %1764 = vmatprep.mubr.f32.mxu0 0.0
        %1765 = vmatmul.mubr.f32.gmra.mrb[0].mxu0 %v799
        %v1766 = vpop.f32.mrb[0].mxu0
        %v1767 = vadd.f32 %v594, %v1766
        %v1768 = vpop.f32.mrb[0].mxu0
        %1769 = vmatprep.mubr.f32.mxu0 0.0
        %1770 = vmatmul.mubr.f32.gmra.mrb[0].mxu0 %v802
        %v1771 = vpop.f32.mrb[0].mxu0
        %v1772 = vadd.f32 %v594, %v1771
        %v1773 = vpop.f32.mrb[0].mxu0
        %1774 = vmatprep.mubr.f32.mxu0 0.0
        %1775 = vmatmul.mubr.f32.gmra.mrb[0].mxu0 %v805
        %v1776 = vpop.f32.mrb[0].mxu0
        %v1777 = vadd.f32 %v594, %v1776
        %v1778 = vpop.f32.mrb[0].mxu0
        %1779 = vmatprep.mubr.f32.mxu0 0.0
        %1780 = vmatmul.mubr.f32.gmra.mrb[0].mxu0 %v808
        %v1781 = vpop.f32.mrb[0].mxu0
        %v1782 = vadd.f32 %v594, %v1781
        %v1783 = vpop.f32.mrb[0].mxu0
        %1784 = vmatprep.mubr.f32.mxu0 0.0
        %1785 = vmatmul.mubr.f32.gmra.mrb[0].mxu0 %v811
        %v1786 = vpop.f32.mrb[0].mxu0
        %v1787 = vadd.f32 %v594, %v1786
        %v1788 = vpop.f32.mrb[0].mxu0
        %1789 = vmatprep.mubr.f32.mxu0 0.0
        %1790 = vmatmul.mubr.f32.gmra.mrb[0].mxu0 %v814
        %v1791 = vpop.f32.mrb[0].mxu0
        %v1792 = vadd.f32 %v594, %v1791
        %v1793 = vpop.f32.mrb[0].mxu0
        %1794 = vmatprep.mubr.f32.mxu0 0.0
        %1795 = vmatmul.mubr.f32.gmra.mrb[0].mxu0 %v817
        %v1796 = vpop.f32.mrb[0].mxu0
        %v1797 = vadd.f32 %v594, %v1796
        %v1798 = vpop.f32.mrb[0].mxu0
        %1799 = vmatprep.mubr.f32.mxu0 0.0
        %1800 = vmatmul.mubr.f32.gmra.mrb[0].mxu0 %v820
        %v1801 = vpop.f32.mrb[0].mxu0
        %v1802 = vadd.f32 %v594, %v1801
        %v1803 = vpop.f32.mrb[0].mxu0
        %1804 = vmatprep.mubr.f32.mxu0 0.0
        %1805 = vmatmul.mubr.f32.gmra.mrb[0].mxu0 %v823
        %v1806 = vpop.f32.mrb[0].mxu0
        %v1807 = vadd.f32 %v594, %v1806
        %v1808 = vpop.f32.mrb[0].mxu0
        %1809 = vmatprep.mubr.f32.mxu0 0.0
        %1810 = vmatmul.mubr.f32.gmra.mrb[0].mxu0 %v826
        %v1811 = vpop.f32.mrb[0].mxu0
        %v1812 = vadd.f32 %v594, %v1811
        %v1813 = vpop.f32.mrb[0].mxu0
        %1814 = vmatprep.mubr.f32.mxu0 0.0
        %1815 = vmatmul.mubr.f32.gmra.mrb[0].mxu0 %v829
        %v1816 = vpop.f32.mrb[0].mxu0
        %v1817 = vadd.f32 %v594, %v1816
        %v1818 = vpop.f32.mrb[0].mxu0
        %1819 = vmatprep.mubr.f32.mxu0 0.0
        %1820 = vmatmul.mubr.f32.gmra.mrb[0].mxu0 %v832
        %v1821 = vpop.f32.mrb[0].mxu0
        %v1822 = vadd.f32 %v594, %v1821
        %v1823 = vpop.f32.mrb[0].mxu0
        %1824 = vmatprep.mubr.f32.mxu0 0.0
        %1825 = vmatmul.mubr.f32.gmra.mrb[0].mxu0 %v835
        %v1826 = vpop.f32.mrb[0].mxu0
        %v1827 = vadd.f32 %v594, %v1826
        %v1828 = vpop.f32.mrb[0].mxu0
        %1829 = vmatprep.mubr.f32.mxu0 0.0
        %1830 = vmatmul.mubr.f32.gmra.mrb[0].mxu0 %v838
        %v1831 = vpop.f32.mrb[0].mxu0
        %v1832 = vadd.f32 %v594, %v1831
        %v1833 = vpop.f32.mrb[0].mxu0
        %1834 = vmatprep.mubr.f32.mxu0 0.0
        %1835 = vmatmul.mubr.f32.gmra.mrb[0].mxu0 %v841
        %v1836 = vpop.f32.mrb[0].mxu0
        %v1837 = vadd.f32 %v594, %v1836
        %v1838 = vpop.f32.mrb[0].mxu0
        %1839 = vmatprep.mubr.f32.mxu0 0.0
        %1840 = vmatmul.mubr.f32.gmra.mrb[0].mxu0 %v844
        %v1841 = vpop.f32.mrb[0].mxu0
        %v1842 = vadd.f32 %v594, %v1841
        %v1843 = vpop.f32.mrb[0].mxu0
        %1844 = vmatprep.mubr.f32.mxu0 0.0
        %1845 = vmatmul.mubr.f32.gmra.mrb[0].mxu0 %v847
        %v1846 = vpop.f32.mrb[0].mxu0
        %v1847 = vadd.f32 %v594, %v1846
        %v1848 = vpop.f32.mrb[0].mxu0
        %1849 = vmatprep.mubr.f32.mxu0 0.0
        %1850 = vmatmul.mubr.f32.gmra.mrb[0].mxu0 %v850
        %v1851 = vpop.f32.mrb[0].mxu0
        %v1852 = vadd.f32 %v594, %v1851
        %v1853 = vpop.f32.mrb[0].mxu0
        %1854 = vmatprep.mubr.f32.mxu0 0.0
        %1855 = vmatmul.mubr.f32.gmra.mrb[0].mxu0 %v853
        %v1856 = vpop.f32.mrb[0].mxu0
        %v1857 = vadd.f32 %v594, %v1856
        %v1858 = vpop.f32.mrb[0].mxu0
        %1859 = vmatprep.mubr.f32.mxu0 0.0
        %1860 = vmatmul.mubr.f32.gmra.mrb[0].mxu0 %v856
        %v1861 = vpop.f32.mrb[0].mxu0
        %v1862 = vadd.f32 %v594, %v1861
        %v1863 = vpop.f32.mrb[0].mxu0
        %1864 = vmatprep.mubr.f32.mxu0 0.0
        %1865 = vmatmul.mubr.f32.gmra.mrb[0].mxu0 %v859
        %v1866 = vpop.f32.mrb[0].mxu0
        %v1867 = vadd.f32 %v594, %v1866
        %v1868 = vpop.f32.mrb[0].mxu0
        %1869 = vmatprep.mubr.f32.mxu0 0.0
        %1870 = vmatmul.mubr.f32.gmra.mrb[0].mxu0 %v862
        %v1871 = vpop.f32.mrb[0].mxu0
        %v1872 = vadd.f32 %v594, %v1871
        %v1873 = vpop.f32.mrb[0].mxu0
        %1874 = vmatprep.mubr.f32.mxu0 0.0
        %1875 = vmatmul.mubr.f32.gmra.mrb[0].mxu0 %v865
        %v1876 = vpop.f32.mrb[0].mxu0
        %v1877 = vadd.f32 %v594, %v1876
        %v1878 = vpop.f32.mrb[0].mxu0
        %1879 = vmatprep.mubr.f32.mxu0 0.0
        %1880 = vmatmul.mubr.f32.gmra.mrb[0].mxu0 %v868
        %v1881 = vpop.f32.mrb[0].mxu0
        %v1882 = vadd.f32 %v594, %v1881
        %v1883 = vpop.f32.mrb[0].mxu0
        %1884 = vmatprep.mubr.f32.mxu0 0.0
        %1885 = vmatmul.mubr.f32.gmra.mrb[0].mxu0 %v871
        %v1886 = vpop.f32.mrb[0].mxu0
        %v1887 = vadd.f32 %v594, %v1886
        %v1888 = vpop.f32.mrb[0].mxu0
        %1889 = vmatprep.mubr.f32.mxu0 0.0
        %1890 = vmatmul.mubr.f32.gmra.mrb[0].mxu0 %v874
        %v1891 = vpop.f32.mrb[0].mxu0
        %v1892 = vadd.f32 %v594, %v1891
        %v1893 = vpop.f32.mrb[0].mxu0
        %1894 = vmatprep.mubr.f32.mxu0 0.0
        %1895 = vmatmul.mubr.f32.gmra.mrb[0].mxu0 %v877
        %v1896 = vpop.f32.mrb[0].mxu0
        %v1897 = vadd.f32 %v594, %v1896
        %v1898 = vpop.f32.mrb[0].mxu0
        %1899 = vmatprep.mubr.f32.mxu0 0.0
        %1900 = vmatmul.mubr.f32.gmra.mrb[0].mxu0 %v880
        %v1901 = vpop.f32.mrb[0].mxu0
        %v1902 = vadd.f32 %v594, %v1901
        %v1903 = vpop.f32.mrb[0].mxu0
        %1904 = vmatprep.mubr.f32.mxu0 0.0
        %1905 = vmatmul.mubr.f32.gmra.mrb[0].mxu0 %v883
        %v1906 = vpop.f32.mrb[0].mxu0
        %v1907 = vadd.f32 %v594, %v1906
        %v1908 = vpop.f32.mrb[0].mxu0
        %1909 = vmatprep.mubr.f32.mxu0 0.0
        %1910 = vmatmul.mubr.f32.gmra.mrb[0].mxu0 %v886
        %v1911 = vpop.f32.mrb[0].mxu0
        %v1912 = vadd.f32 %v594, %v1911
        %v1913 = vpop.f32.mrb[0].mxu0
        %1914 = vmatprep.mubr.f32.mxu0 0.0
        %1915 = vmatmul.mubr.f32.gmra.mrb[0].mxu0 %v889
        %v1916 = vpop.f32.mrb[0].mxu0
        %v1917 = vadd.f32 %v594, %v1916
        %v1918 = vpop.f32.mrb[0].mxu0
        %1919 = vmatprep.mubr.f32.mxu0 0.0
        %1920 = vmatmul.mubr.f32.gmra.mrb[0].mxu0 %v892
        %v1921 = vpop.f32.mrb[0].mxu0
        %v1922 = vadd.f32 %v594, %v1921
        %v1923 = vpop.f32.mrb[0].mxu0
        %1924 = vmatprep.mubr.f32.mxu0 0.0
        %1925 = vmatmul.mubr.f32.gmra.mrb[0].mxu0 %v895
        %v1926 = vpop.f32.mrb[0].mxu0
        %v1927 = vadd.f32 %v594, %v1926
        %v1928 = vpop.f32.mrb[0].mxu0
        %1929 = vmatprep.mubr.f32.mxu0 0.0
        %1930 = vmatmul.mubr.f32.gmra.mrb[0].mxu0 %v898
        %v1931 = vpop.f32.mrb[0].mxu0
        %v1932 = vadd.f32 %v594, %v1931
        %v1933 = vpop.f32.mrb[0].mxu0
        %1934 = vmatprep.mubr.f32.mxu0 0.0
        %1935 = vmatmul.mubr.f32.gmra.mrb[0].mxu0 %v901
        %v1936 = vpop.f32.mrb[0].mxu0
        %v1937 = vadd.f32 %v594, %v1936
        %v1938 = vpop.f32.mrb[0].mxu0
        %1939 = vmatprep.mubr.f32.mxu0 0.0
        %1940 = vmatmul.mubr.f32.gmra.mrb[0].mxu0 %v904
        %v1941 = vpop.f32.mrb[0].mxu0
        %v1942 = vadd.f32 %v594, %v1941
        %v1943 = vpop.f32.mrb[0].mxu0
        %1944 = vmatprep.mubr.f32.mxu0 0.0
        %1945 = vmatmul.mubr.f32.gmra.mrb[0].mxu0 %v907
        %v1946 = vpop.f32.mrb[0].mxu0
        %v1947 = vadd.f32 %v594, %v1946
        %v1948 = vpop.f32.mrb[0].mxu0
        %1949 = vmatprep.mubr.f32.mxu0 0.0
        %1950 = vmatmul.mubr.f32.gmra.mrb[0].mxu0 %v910
        %v1951 = vpop.f32.mrb[0].mxu0
        %v1952 = vadd.f32 %v594, %v1951
        %v1953 = vpop.f32.mrb[0].mxu0
        %1954 = vmatprep.mubr.f32.mxu0 0.0
        %1955 = vmatmul.mubr.f32.gmra.mrb[0].mxu0 %v913
        %v1956 = vpop.f32.mrb[0].mxu0
        %v1957 = vadd.f32 %v594, %v1956
        %v1958 = vpop.f32.mrb[0].mxu0
        %1959 = vmatprep.mubr.f32.mxu0 0.0
        %1960 = vmatmul.mubr.f32.gmra.mrb[0].mxu0 %v916
        %v1961 = vpop.f32.mrb[0].mxu0
        %v1962 = vadd.f32 %v594, %v1961
        %v1963 = vpop.f32.mrb[0].mxu0
        %1964 = vmatprep.mubr.f32.mxu0 0.0
        %1965 = vmatmul.mubr.f32.gmra.mrb[0].mxu0 %v919
        %v1966 = vpop.f32.mrb[0].mxu0
        %v1967 = vadd.f32 %v594, %v1966
        %v1968 = vpop.f32.mrb[0].mxu0
        %1969 = vmatprep.mubr.f32.mxu0 0.0
        %1970 = vmatmul.mubr.f32.gmra.mrb[0].mxu0 %v922
        %v1971 = vpop.f32.mrb[0].mxu0
        %v1972 = vadd.f32 %v594, %v1971
        %v1973 = vpop.f32.mrb[0].mxu0
        %1974 = vmatprep.mubr.f32.mxu0 0.0
        %1975 = vmatmul.mubr.f32.gmra.mrb[0].mxu0 %v925
        %v1976 = vpop.f32.mrb[0].mxu0
        %v1977 = vadd.f32 %v594, %v1976
        %v1978 = vpop.f32.mrb[0].mxu0
        %1979 = vmatprep.mubr.f32.mxu0 0.0
        %1980 = vmatmul.mubr.f32.gmra.mrb[0].mxu0 %v928
        %v1981 = vpop.f32.mrb[0].mxu0
        %v1982 = vadd.f32 %v594, %v1981
        %v1983 = vpop.f32.mrb[0].mxu0
        %1984 = vmatprep.mubr.f32.mxu0 0.0
        %1985 = vmatmul.mubr.f32.gmra.mrb[0].mxu0 %v931
        %v1986 = vpop.f32.mrb[0].mxu0
        %v1987 = vadd.f32 %v594, %v1986
        %v1988 = vpop.f32.mrb[0].mxu0
        %1989 = vmatprep.mubr.f32.mxu0 0.0
        %1990 = vmatmul.mubr.f32.gmra.mrb[0].mxu0 %v934
        %v1991 = vpop.f32.mrb[0].mxu0
        %v1992 = vadd.f32 %v594, %v1991
        %v1993 = vpop.f32.mrb[0].mxu0
        %1994 = vmatprep.mubr.f32.mxu0 0.0
        %1995 = vmatmul.mubr.f32.gmra.mrb[0].mxu0 %v937
        %v1996 = vpop.f32.mrb[0].mxu0
        %v1997 = vadd.f32 %v594, %v1996
        %v1998 = vpop.f32.mrb[0].mxu0
        %1999 = vmatprep.mubr.f32.mxu0 0.0
        %2000 = vmatmul.mubr.f32.gmra.mrb[0].mxu0 %v940
        %v2001 = vpop.f32.mrb[0].mxu0
        %v2002 = vadd.f32 %v594, %v2001
        %v2003 = vpop.f32.mrb[0].mxu0
        %2004 = vmatprep.mubr.f32.mxu0 0.0
        %2005 = vmatmul.mubr.f32.gmra.mrb[0].mxu0 %v943
        %v2006 = vpop.f32.mrb[0].mxu0
        %v2007 = vadd.f32 %v594, %v2006
        %v2008 = vpop.f32.mrb[0].mxu0
        %2009 = vmatprep.mubr.f32.mxu0 0.0
        %2010 = vmatmul.mubr.f32.gmra.mrb[0].mxu0 %v946
        %v2011 = vpop.f32.mrb[0].mxu0
        %v2012 = vadd.f32 %v594, %v2011
        %v2013 = vpop.f32.mrb[0].mxu0
        %2014 = vmatprep.mubr.f32.mxu0 0.0
        %2015 = vmatmul.mubr.f32.gmra.mrb[0].mxu0 %v949
        %v2016 = vpop.f32.mrb[0].mxu0
        %v2017 = vadd.f32 %v594, %v2016
        %v2018 = vpop.f32.mrb[0].mxu0
        %2019 = vmatprep.mubr.f32.mxu0 0.0
        %2020 = vmatmul.mubr.f32.gmra.mrb[0].mxu0 %v952
        %v2021 = vpop.f32.mrb[0].mxu0
        %v2022 = vadd.f32 %v594, %v2021
        %v2023 = vpop.f32.mrb[0].mxu0
        %2024 = vmatprep.mubr.f32.mxu0 0.0
        %2025 = vmatmul.mubr.f32.gmra.mrb[0].mxu0 %v955
        %v2026 = vpop.f32.mrb[0].mxu0
        %v2027 = vadd.f32 %v594, %v2026
        %v2028 = vpop.f32.mrb[0].mxu0
        %2029 = vmatprep.mubr.f32.mxu0 0.0
        %2030 = vmatmul.mubr.f32.gmra.mrb[0].mxu0 %v958
        %v2031 = vpop.f32.mrb[0].mxu0
        %v2032 = vadd.f32 %v594, %v2031
        %v2033 = vpop.f32.mrb[0].mxu0
        %2034 = vmatprep.mubr.f32.mxu0 0.0
        %2035 = vmatmul.mubr.f32.gmra.mrb[0].mxu0 %v961
        %v2036 = vpop.f32.mrb[0].mxu0
        %v2037 = vadd.f32 %v594, %v2036
        %v2038 = vpop.f32.mrb[0].mxu0
        %2039 = vmatprep.mubr.f32.mxu0 0.0
        %2040 = vmatmul.mubr.f32.gmra.mrb[0].mxu0 %v964
        %v2041 = vpop.f32.mrb[0].mxu0
        %v2042 = vadd.f32 %v594, %v2041
        %v2043 = vpop.f32.mrb[0].mxu0
        %2044 = vmatprep.mubr.f32.mxu0 0.0
        %2045 = vmatmul.mubr.f32.gmra.mrb[0].mxu0 %v967
        %v2046 = vpop.f32.mrb[0].mxu0
        %v2047 = vadd.f32 %v594, %v2046
        %v2048 = vpop.f32.mrb[0].mxu0
        %2049 = vmatprep.mubr.f32.mxu0 0.0
        %2050 = vmatmul.mubr.f32.gmra.mrb[0].mxu0 %v970
        %v2051 = vpop.f32.mrb[0].mxu0
        %v2052 = vadd.f32 %v594, %v2051
        %v2053 = vpop.f32.mrb[0].mxu0
        %2054 = vmatprep.mubr.f32.mxu0 0.0
        %2055 = vmatmul.mubr.f32.gmra.mrb[0].mxu0 %v973
        %v2056 = vpop.f32.mrb[0].mxu0
        %v2057 = vadd.f32 %v594, %v2056
        %v2058 = vpop.f32.mrb[0].mxu0
        %2059 = vmatprep.mubr.f32.mxu0 0.0
        %2060 = vmatmul.mubr.f32.gmra.mrb[0].mxu0 %v976
        %v2061 = vpop.f32.mrb[0].mxu0
        %v2062 = vadd.f32 %v594, %v2061
        %v2063 = vpop.f32.mrb[0].mxu0
        %2064 = vmatprep.mubr.f32.mxu0 0.0
        %2065 = vmatmul.mubr.f32.gmra.mrb[0].mxu0 %v979
        %v2066 = vpop.f32.mrb[0].mxu0
        %v2067 = vadd.f32 %v594, %v2066
        %v2068 = vpop.f32.mrb[0].mxu0
        %2069 = vmatprep.mubr.f32.mxu0 0.0
        %2070 = vmatmul.mubr.f32.gmra.mrb[0].mxu0 %v982
        %v2071 = vpop.f32.mrb[0].mxu0
        %v2072 = vadd.f32 %v594, %v2071
        %v2073 = vpop.f32.mrb[0].mxu0
        %2074 = vmatprep.mubr.f32.mxu0 0.0
        %2075 = vmatmul.mubr.f32.gmra.mrb[0].mxu0 %v985
        %v2076 = vpop.f32.mrb[0].mxu0
        %v2077 = vadd.f32 %v594, %v2076
        %v2078 = vpop.f32.mrb[0].mxu0
        %2079 = vmatprep.mubr.f32.mxu0 0.0
        %2080 = vmatmul.mubr.f32.gmra.mrb[0].mxu0 %v988
        %v2081 = vpop.f32.mrb[0].mxu0
        %v2082 = vadd.f32 %v594, %v2081
        %v2083 = vpop.f32.mrb[0].mxu0
        %2084 = vmatprep.mubr.f32.mxu0 0.0
        %2085 = vmatmul.mubr.f32.gmra.mrb[0].mxu0 %v991
        %v2086 = vpop.f32.mrb[0].mxu0
        %v2087 = vadd.f32 %v594, %v2086
        %v2088 = vpop.f32.mrb[0].mxu0
        %2089 = vmatprep.mubr.f32.mxu0 0.0
        %2090 = vmatmul.mubr.f32.gmra.mrb[0].mxu0 %v994
        %v2091 = vpop.f32.mrb[0].mxu0
        %v2092 = vadd.f32 %v594, %v2091
        %v2093 = vpop.f32.mrb[0].mxu0
        %2094 = vmatprep.mubr.f32.mxu0 0.0
        %2095 = vmatmul.mubr.f32.gmra.mrb[0].mxu0 %v997
        %v2096 = vpop.f32.mrb[0].mxu0
        %v2097 = vadd.f32 %v594, %v2096
        %v2098 = vpop.f32.mrb[0].mxu0
        %2099 = vmatprep.mubr.f32.mxu0 0.0
        %2100 = vmatmul.mubr.f32.gmra.mrb[0].mxu0 %v1000
        %v2101 = vpop.f32.mrb[0].mxu0
        %v2102 = vadd.f32 %v594, %v2101
        %v2103 = vpop.f32.mrb[0].mxu0
        %2104 = vmatprep.mubr.f32.mxu0 0.0
        %2105 = vmatmul.mubr.f32.gmra.mrb[0].mxu0 %v1003
        %v2106 = vpop.f32.mrb[0].mxu0
        %v2107 = vadd.f32 %v594, %v2106
        %v2108 = vpop.f32.mrb[0].mxu0
        %2109 = vmatprep.mubr.f32.mxu0 0.0
        %2110 = vmatmul.mubr.f32.gmra.mrb[0].mxu0 %v1006
        %v2111 = vpop.f32.mrb[0].mxu0
        %v2112 = vadd.f32 %v594, %v2111
        %v2113 = vpop.f32.mrb[0].mxu0
        %2114 = vmatprep.mubr.f32.mxu0 0.0
        %2115 = vmatmul.mubr.f32.gmra.mrb[0].mxu0 %v1009
        %v2116 = vpop.f32.mrb[0].mxu0
        %v2117 = vadd.f32 %v594, %v2116
        %v2118 = vpop.f32.mrb[0].mxu0
        %2119 = vmatprep.mubr.f32.mxu0 0.0
        %2120 = vmatmul.mubr.f32.gmra.mrb[0].mxu0 %v1012
        %v2121 = vpop.f32.mrb[0].mxu0
        %v2122 = vadd.f32 %v594, %v2121
        %v2123 = vpop.f32.mrb[0].mxu0
        %2124 = vmatprep.mubr.f32.mxu0 0.0
        %2125 = vmatmul.mubr.f32.gmra.mrb[0].mxu0 %v1015
        %v2126 = vpop.f32.mrb[0].mxu0
        %v2127 = vadd.f32 %v594, %v2126
        %v2128 = vpop.f32.mrb[0].mxu0
        %2129 = vmatprep.mubr.f32.mxu0 0.0
        %2130 = vmatmul.mubr.f32.gmra.mrb[0].mxu0 %v1018
        %v2131 = vpop.f32.mrb[0].mxu0
        %v2132 = vadd.f32 %v594, %v2131
        %v2133 = vpop.f32.mrb[0].mxu0
        %2134 = vmatprep.mubr.f32.mxu0 0.0
        %2135 = vmatmul.mubr.f32.gmra.mrb[0].mxu0 %v1021
        %v2136 = vpop.f32.mrb[0].mxu0
        %v2137 = vadd.f32 %v594, %v2136
        %v2138 = vpop.f32.mrb[0].mxu0
        %2139 = vmatprep.mubr.f32.mxu0 0.0
        %2140 = vmatmul.mubr.f32.gmra.mrb[0].mxu0 %v1024
        %v2141 = vpop.f32.mrb[0].mxu0
        %v2142 = vadd.f32 %v594, %v2141
        %v2143 = vpop.f32.mrb[0].mxu0
        %2144 = vmatprep.mubr.f32.mxu0 0.0
        %2145 = vmatmul.mubr.f32.gmra.mrb[0].mxu0 %v1027
        %v2146 = vpop.f32.mrb[0].mxu0
        %v2147 = vadd.f32 %v594, %v2146
        %v2148 = vpop.f32.mrb[0].mxu0
        %2149 = vmatprep.mubr.f32.mxu0 0.0
        %2150 = vmatmul.mubr.f32.gmra.mrb[0].mxu0 %v1030
        %v2151 = vpop.f32.mrb[0].mxu0
        %v2152 = vadd.f32 %v594, %v2151
        %v2153 = vpop.f32.mrb[0].mxu0
        %2154 = vmatprep.mubr.f32.mxu0 0.0
        %2155 = vmatmul.mubr.f32.gmra.mrb[0].mxu0 %v1033
        %v2156 = vpop.f32.mrb[0].mxu0
        %v2157 = vadd.f32 %v594, %v2156
        %v2158 = vpop.f32.mrb[0].mxu0
        %2159 = vmatprep.mubr.f32.mxu0 0.0
        %2160 = vmatmul.mubr.f32.gmra.mrb[0].mxu0 %v1036
        %v2161 = vpop.f32.mrb[0].mxu0
        %v2162 = vadd.f32 %v594, %v2161
        %v2163 = vpop.f32.mrb[0].mxu0
        %2164 = vmatprep.mubr.f32.mxu0 0.0
        %2165 = vmatmul.mubr.f32.gmra.mrb[0].mxu0 %v1039
        %v2166 = vpop.f32.mrb[0].mxu0
        %v2167 = vadd.f32 %v594, %v2166
        %v2168 = vpop.f32.mrb[0].mxu0
        %2169 = vmatprep.mubr.f32.mxu0 0.0
        %2170 = vmatmul.mubr.f32.gmra.mrb[0].mxu0 %v1042
        %v2171 = vpop.f32.mrb[0].mxu0
        %v2172 = vadd.f32 %v594, %v2171
        %v2173 = vpop.f32.mrb[0].mxu0
        %2174 = vmatprep.mubr.f32.mxu0 0.0
        %2175 = vmatmul.mubr.f32.gmra.mrb[0].mxu0 %v1045
        %v2176 = vpop.f32.mrb[0].mxu0
        %v2177 = vadd.f32 %v594, %v2176
        %v2178 = vpop.f32.mrb[0].mxu0
        %2179 = vmatprep.mubr.f32.mxu0 0.0
        %2180 = vmatmul.mubr.f32.gmra.mrb[0].mxu0 %v1048
        %v2181 = vpop.f32.mrb[0].mxu0
        %v2182 = vadd.f32 %v594, %v2181
        %v2183 = vpop.f32.mrb[0].mxu0
        %2184 = vmatprep.mubr.f32.mxu0 0.0
        %2185 = vmatmul.mubr.f32.gmra.mrb[0].mxu0 %v1051
        %v2186 = vpop.f32.mrb[0].mxu0
        %v2187 = vadd.f32 %v594, %v2186
        %v2188 = vpop.f32.mrb[0].mxu0
        %2189 = vmatprep.mubr.f32.mxu0 0.0
        %2190 = vmatmul.mubr.f32.gmra.mrb[0].mxu0 %v1054
        %v2191 = vpop.f32.mrb[0].mxu0
        %v2192 = vadd.f32 %v594, %v2191
        %v2193 = vpop.f32.mrb[0].mxu0
        %2194 = vmatprep.mubr.f32.mxu0 0.0
        %2195 = vmatmul.mubr.f32.gmra.mrb[0].mxu0 %v1057
        %v2196 = vpop.f32.mrb[0].mxu0
        %v2197 = vadd.f32 %v594, %v2196
        %v2198 = vpop.f32.mrb[0].mxu0
        %2199 = vmatprep.mubr.f32.mxu0 0.0
        %2200 = vmatmul.mubr.f32.gmra.mrb[0].mxu0 %v1060
        %v2201 = vpop.f32.mrb[0].mxu0
        %v2202 = vadd.f32 %v594, %v2201
        %v2203 = vpop.f32.mrb[0].mxu0
        %2204 = vmatprep.mubr.f32.mxu0 0.0
        %2205 = vmatmul.mubr.f32.gmra.mrb[0].mxu0 %v1063
        %v2206 = vpop.f32.mrb[0].mxu0
        %v2207 = vadd.f32 %v594, %v2206
        %v2208 = vpop.f32.mrb[0].mxu0
        %2209 = vmatprep.mubr.f32.mxu0 0.0
        %2210 = vmatmul.mubr.f32.gmra.mrb[0].mxu0 %v1066
        %v2211 = vpop.f32.mrb[0].mxu0
        %v2212 = vadd.f32 %v594, %v2211
        %v2213 = vpop.f32.mrb[0].mxu0
        %2214 = vmatprep.mubr.f32.mxu0 0.0
        %2215 = vmatmul.mubr.f32.gmra.mrb[0].mxu0 %v1069
        %v2216 = vpop.f32.mrb[0].mxu0
        %v2217 = vadd.f32 %v594, %v2216
        %v2218 = vpop.f32.mrb[0].mxu0
        %2219 = vmatprep.mubr.f32.mxu0 0.0
        %2220 = vmatmul.mubr.f32.gmra.mrb[0].mxu0 %v1072
        %v2221 = vpop.f32.mrb[0].mxu0
        %v2222 = vadd.f32 %v594, %v2221
        %v2223 = vpop.f32.mrb[0].mxu0
        %2224 = vmatprep.mubr.f32.mxu0 0.0
        %2225 = vmatmul.mubr.f32.gmra.mrb[0].mxu0 %v1075
        %v2226 = vpop.f32.mrb[0].mxu0
        %v2227 = vadd.f32 %v594, %v2226
        %v2228 = vpop.f32.mrb[0].mxu0
        %2229 = vmatprep.mubr.f32.mxu0 0.0
        %2230 = vmatmul.mubr.f32.gmra.mrb[0].mxu0 %v1078
        %v2231 = vpop.f32.mrb[0].mxu0
        %v2232 = vadd.f32 %v594, %v2231
        %v2233 = vpop.f32.mrb[0].mxu0
        %2234 = vmatprep.mubr.f32.mxu0 0.0
        %2235 = vmatmul.mubr.f32.gmra.mrb[0].mxu0 %v1081
        %v2236 = vpop.f32.mrb[0].mxu0
        %v2237 = vadd.f32 %v594, %v2236
        %v2238 = vpop.f32.mrb[0].mxu0
        %2239 = vmatprep.mubr.f32.mxu0 0.0
        %2240 = vmatmul.mubr.f32.gmra.mrb[0].mxu0 %v1084
        %v2241 = vpop.f32.mrb[0].mxu0
        %v2242 = vadd.f32 %v594, %v2241
        %v2243 = vpop.f32.mrb[0].mxu0
        %2244 = vmatprep.mubr.f32.mxu0 0.0
        %2245 = vmatmul.mubr.f32.gmra.mrb[0].mxu0 %v1087
        %v2246 = vpop.f32.mrb[0].mxu0
        %v2247 = vadd.f32 %v594, %v2246
        %v2248 = vpop.f32.mrb[0].mxu0
        %2249 = vmatprep.mubr.f32.mxu0 0.0
        %2250 = vmatmul.mubr.f32.gmra.mrb[0].mxu0 %v1090
        %v2251 = vpop.f32.mrb[0].mxu0
        %v2252 = vadd.f32 %v594, %v2251
        %v2253 = vpop.f32.mrb[0].mxu0
        %2254 = vmatprep.mubr.f32.mxu0 0.0
        %2255 = vmatmul.mubr.f32.gmra.mrb[0].mxu0 %v1093
        %v2256 = vpop.f32.mrb[0].mxu0
        %v2257 = vadd.f32 %v594, %v2256
        %v2258 = vpop.f32.mrb[0].mxu0
        %2259 = vmatprep.mubr.f32.mxu0 0.0
        %2260 = vmatmul.mubr.f32.gmra.mrb[0].mxu0 %v1096
        %v2261 = vpop.f32.mrb[0].mxu0
        %v2262 = vadd.f32 %v594, %v2261
        %v2263 = vpop.f32.mrb[0].mxu0
        %2264 = vmatprep.mubr.f32.mxu0 0.0
        %2265 = vmatmul.mubr.f32.gmra.mrb[0].mxu0 %v1099
        %v2266 = vpop.f32.mrb[0].mxu0
        %v2267 = vadd.f32 %v594, %v2266
        %v2268 = vpop.f32.mrb[0].mxu0
        %2269 = vmatprep.mubr.f32.mxu0 0.0
        %2270 = vmatmul.mubr.f32.gmra.mrb[0].mxu0 %v1102
        %v2271 = vpop.f32.mrb[0].mxu0
        %v2272 = vadd.f32 %v594, %v2271
        %v2273 = vpop.f32.mrb[0].mxu0
        %2274 = vmatprep.mubr.f32.mxu0 0.0
        %2275 = vmatmul.mubr.f32.gmra.mrb[0].mxu0 %v1105
        %v2276 = vpop.f32.mrb[0].mxu0
        %v2277 = vadd.f32 %v594, %v2276
        %v2278 = vpop.f32.mrb[0].mxu0
        %2279 = vmatprep.mubr.f32.mxu0 0.0
        %2280 = vmatmul.mubr.f32.gmra.mrb[0].mxu0 %v1108
        %v2281 = vpop.f32.mrb[0].mxu0
        %v2282 = vadd.f32 %v594, %v2281
        %v2283 = vpop.f32.mrb[0].mxu0
        %2284 = vmatprep.mubr.f32.mxu0 0.0
        %2285 = vmatmul.mubr.f32.gmra.mrb[0].mxu0 %v1111
        %v2286 = vpop.f32.mrb[0].mxu0
        %v2287 = vadd.f32 %v594, %v2286
        %v2288 = vpop.f32.mrb[0].mxu0
        %2289 = vmatprep.mubr.f32.mxu0 0.0
        %2290 = vmatmul.mubr.f32.gmra.mrb[0].mxu0 %v1114
        %v2291 = vpop.f32.mrb[0].mxu0
        %v2292 = vadd.f32 %v594, %v2291
        %v2293 = vpop.f32.mrb[0].mxu0
        %2294 = vmatprep.mubr.f32.mxu0 0.0
        %2295 = vmatmul.mubr.f32.gmra.mrb[0].mxu0 %v1117
        %v2296 = vpop.f32.mrb[0].mxu0
        %v2297 = vadd.f32 %v594, %v2296
        %v2298 = vpop.f32.mrb[0].mxu0
        %2299 = vmatprep.mubr.f32.mxu0 0.0
        %2300 = vmatmul.mubr.f32.gmra.mrb[0].mxu0 %v1120
        %v2301 = vpop.f32.mrb[0].mxu0
        %v2302 = vadd.f32 %v594, %v2301
        %v2303 = vpop.f32.mrb[0].mxu0
        %2304 = vmatprep.mubr.f32.mxu0 0.0
        %2305 = vmatmul.mubr.f32.gmra.mrb[0].mxu0 %v1123
        %v2306 = vpop.f32.mrb[0].mxu0
        %v2307 = vadd.f32 %v594, %v2306
        %v2308 = vpop.f32.mrb[0].mxu0
        %2309 = vmatprep.mubr.f32.mxu0 0.0
        %2310 = vmatmul.mubr.f32.gmra.mrb[0].mxu0 %v1126
        %v2311 = vpop.f32.mrb[0].mxu0
        %v2312 = vadd.f32 %v594, %v2311
        %v2313 = vpop.f32.mrb[0].mxu0
        %2314 = vmatprep.mubr.f32.mxu0 0.0
        %2315 = vmatmul.mubr.f32.gmra.mrb[0].mxu0 %v1129
        %v2316 = vpop.f32.mrb[0].mxu0
        %v2317 = vadd.f32 %v594, %v2316
        %v2318 = vpop.f32.mrb[0].mxu0
        %2319 = vmatprep.mubr.f32.mxu0 0.0
        %2320 = vmatmul.mubr.f32.gmra.mrb[0].mxu0 %v1132
        %v2321 = vpop.f32.mrb[0].mxu0
        %v2322 = vadd.f32 %v594, %v2321
        %v2323 = vpop.f32.mrb[0].mxu0
        %2324 = vmatprep.mubr.f32.mxu0 0.0
        %2325 = vmatmul.mubr.f32.gmra.mrb[0].mxu0 %v1135
        %v2326 = vpop.f32.mrb[0].mxu0
        %v2327 = vadd.f32 %v594, %v2326
        %v2328 = vpop.f32.mrb[0].mxu0
        %2329 = vmatprep.mubr.f32.mxu0 0.0
        %2330 = vmatmul.mubr.f32.gmra.mrb[0].mxu0 %v1138
        %v2331 = vpop.f32.mrb[0].mxu0
        %v2332 = vadd.f32 %v594, %v2331
        %v2333 = vpop.f32.mrb[0].mxu0
        %2334 = vmatprep.mubr.f32.mxu0 0.0
        %2335 = vmatmul.mubr.f32.gmra.mrb[0].mxu0 %v1141
        %v2336 = vpop.f32.mrb[0].mxu0
        %v2337 = vadd.f32 %v594, %v2336
        %v2338 = vpop.f32.mrb[0].mxu0
        %2339 = vmatprep.mubr.f32.mxu0 0.0
        %2340 = vmatmul.mubr.f32.gmra.mrb[0].mxu0 %v1144
        %v2341 = vpop.f32.mrb[0].mxu0
        %v2342 = vadd.f32 %v594, %v2341
        %v2343 = vpop.f32.mrb[0].mxu0
        %2344 = vmatprep.mubr.f32.mxu0 0.0
        %2345 = vmatmul.mubr.f32.gmra.mrb[0].mxu0 %v1147
        %v2346 = vpop.f32.mrb[0].mxu0
        %v2347 = vadd.f32 %v594, %v2346
        %v2348 = vpop.f32.mrb[0].mxu0
        %2349 = vmatprep.mubr.f32.mxu0 0.0
        %2350 = vmatmul.mubr.f32.gmra.mrb[0].mxu0 %v1150
        %v2351 = vpop.f32.mrb[0].mxu0
        %v2352 = vadd.f32 %v594, %v2351
        %v2353 = vpop.f32.mrb[0].mxu0
        %2354 = vmatprep.mubr.f32.mxu0 0.0
        %2355 = vmatmul.mubr.f32.gmra.mrb[0].mxu0 %v1153
        %v2356 = vpop.f32.mrb[0].mxu0
        %v2357 = vadd.f32 %v594, %v2356
        %v2358 = vpop.f32.mrb[0].mxu0
        %2359 = vmatprep.mubr.f32.mxu0 0.0
        %2360 = vmatmul.mubr.f32.gmra.mrb[0].mxu0 %v1156
        %v2361 = vpop.f32.mrb[0].mxu0
        %v2362 = vadd.f32 %v594, %v2361
        %v2363 = vpop.f32.mrb[0].mxu0
        %2364 = vmatprep.mubr.f32.mxu0 0.0
        %2365 = vmatmul.mubr.f32.gmra.mrb[0].mxu0 %v1159
        %v2366 = vpop.f32.mrb[0].mxu0
        %v2367 = vadd.f32 %v594, %v2366
        %v2368 = vpop.f32.mrb[0].mxu0
        %2369 = vmatprep.mubr.f32.mxu0 0.0
        %2370 = vmatmul.mubr.f32.gmra.mrb[0].mxu0 %v1162
        %v2371 = vpop.f32.mrb[0].mxu0
        %v2372 = vadd.f32 %v594, %v2371
        %v2373 = vpop.f32.mrb[0].mxu0
        %2374 = vmatprep.mubr.f32.mxu0 0.0
        %2375 = vmatmul.mubr.f32.gmra.mrb[0].mxu0 %v1165
        %v2376 = vpop.f32.mrb[0].mxu0
        %v2377 = vadd.f32 %v594, %v2376
        %v2378 = vpop.f32.mrb[0].mxu0
        %2379 = vmatprep.mubr.f32.mxu0 0.0
        %2380 = vmatmul.mubr.f32.gmra.mrb[0].mxu0 %v1168
        %v2381 = vpop.f32.mrb[0].mxu0
        %v2382 = vadd.f32 %v594, %v2381
        %v2383 = vpop.f32.mrb[0].mxu0
        %2384 = vmatprep.mubr.f32.mxu0 0.0
        %2385 = vmatmul.mubr.f32.gmra.mrb[0].mxu0 %v1171
        %v2386 = vpop.f32.mrb[0].mxu0
        %v2387 = vadd.f32 %v594, %v2386
        %v2388 = vpop.f32.mrb[0].mxu0
        %2389 = vmatprep.mubr.f32.mxu0 0.0
        %2390 = vmatmul.mubr.f32.gmra.mrb[0].mxu0 %v1174
        %v2391 = vpop.f32.mrb[0].mxu0
        %v2392 = vadd.f32 %v594, %v2391
        %v2393 = vpop.f32.mrb[0].mxu0
        %2394 = vmatprep.mubr.f32.mxu0 0.0
        %2395 = vmatmul.mubr.f32.gmra.mrb[0].mxu0 %v1177
        %v2396 = vpop.f32.mrb[0].mxu0
        %v2397 = vadd.f32 %v594, %v2396
        %v2398 = vpop.f32.mrb[0].mxu0
        %2399 = vmatprep.mubr.f32.mxu0 0.0
        %2400 = vmatmul.mubr.f32.gmra.mrb[0].mxu0 %v1180
        %v2401 = vpop.f32.mrb[0].mxu0
        %v2402 = vadd.f32 %v594, %v2401
        %v2403 = vpop.f32.mrb[0].mxu0
        %2404 = vmatprep.mubr.f32.mxu0 0.0
        %2405 = vmatmul.mubr.f32.gmra.mrb[0].mxu0 %v1183
        %v2406 = vpop.f32.mrb[0].mxu0
        %v2407 = vadd.f32 %v594, %v2406
        %v2408 = vpop.f32.mrb[0].mxu0
        %2409 = vmatprep.mubr.f32.mxu0 0.0
        %2410 = vmatmul.mubr.f32.gmra.mrb[0].mxu0 %v1186
        %v2411 = vpop.f32.mrb[0].mxu0
        %v2412 = vadd.f32 %v594, %v2411
        %v2413 = vpop.f32.mrb[0].mxu0
        %2414 = vmatprep.mubr.f32.mxu0 0.0
        %2415 = vmatmul.mubr.f32.gmra.mrb[0].mxu0 %v1189
        %v2416 = vpop.f32.mrb[0].mxu0
        %v2417 = vadd.f32 %v594, %v2416
        %v2418 = vpop.f32.mrb[0].mxu0
        %2419 = vmatprep.mubr.f32.mxu0 0.0
        %2420 = vmatmul.mubr.f32.gmra.mrb[0].mxu0 %v1192
        %v2421 = vpop.f32.mrb[0].mxu0
        %v2422 = vadd.f32 %v594, %v2421
        %v2423 = vpop.f32.mrb[0].mxu0
        %2424 = vmatprep.mubr.f32.mxu0 0.0
        %2425 = vmatmul.mubr.f32.gmra.mrb[0].mxu0 %v1195
        %v2426 = vpop.f32.mrb[0].mxu0
        %v2427 = vadd.f32 %v594, %v2426
        %v2428 = vpop.f32.mrb[0].mxu0
        %2429 = vmatprep.mubr.f32.mxu0 0.0
        %2430 = vmatmul.mubr.f32.gmra.mrb[0].mxu0 %v1198
        %v2431 = vpop.f32.mrb[0].mxu0
        %v2432 = vadd.f32 %v594, %v2431
        %v2433 = vpop.f32.mrb[0].mxu0
        %2434 = vmatprep.mubr.f32.mxu0 0.0
        %2435 = vmatmul.mubr.f32.gmra.mrb[0].mxu0 %v1201
        %v2436 = vpop.f32.mrb[0].mxu0
        %v2437 = vadd.f32 %v594, %v2436
        %v2438 = vpop.f32.mrb[0].mxu0
        %2439 = vmatprep.mubr.f32.mxu0 0.0
        %2440 = vmatmul.mubr.f32.gmra.mrb[0].mxu0 %v1204
        %v2441 = vpop.f32.mrb[0].mxu0
        %v2442 = vadd.f32 %v594, %v2441
        %v2443 = vpop.f32.mrb[0].mxu0
        %2444 = vmatprep.mubr.f32.mxu0 0.0
        %2445 = vmatmul.mubr.f32.gmra.mrb[0].mxu0 %v1207
        %v2446 = vpop.f32.mrb[0].mxu0
        %v2447 = vadd.f32 %v594, %v2446
        %v2448 = vpop.f32.mrb[0].mxu0
        %2449 = vmatprep.mubr.f32.mxu0 0.0
        %2450 = vmatmul.mubr.f32.gmra.mrb[0].mxu0 %v1210
        %v2451 = vpop.f32.mrb[0].mxu0
        %v2452 = vadd.f32 %v594, %v2451
        %v2453 = vpop.f32.mrb[0].mxu0
        %2454 = vmatprep.mubr.f32.mxu0 0.0
        %2455 = vmatmul.mubr.f32.gmra.mrb[0].mxu0 %v1213
        %v2456 = vpop.f32.mrb[0].mxu0
        %v2457 = vadd.f32 %v594, %v2456
        %v2458 = vpop.f32.mrb[0].mxu0
        %2459 = vmatprep.mubr.f32.mxu0 0.0
        %2460 = vmatmul.mubr.f32.gmra.mrb[0].mxu0 %v1216
        %v2461 = vpop.f32.mrb[0].mxu0
        %v2462 = vadd.f32 %v594, %v2461
        %v2463 = vpop.f32.mrb[0].mxu0
        %2464 = vmatprep.mubr.f32.mxu0 0.0
        %2465 = vmatmul.mubr.f32.gmra.mrb[0].mxu0 %v1219
        %v2466 = vpop.f32.mrb[0].mxu0
        %v2467 = vadd.f32 %v594, %v2466
        %v2468 = vpop.f32.mrb[0].mxu0
        %2469 = vmatprep.mubr.f32.mxu0 0.0
        %2470 = vmatmul.mubr.f32.gmra.mrb[0].mxu0 %v1222
        %v2471 = vpop.f32.mrb[0].mxu0
        %v2472 = vadd.f32 %v594, %v2471
        %v2473 = vpop.f32.mrb[0].mxu0
        %2474 = vmatprep.mubr.f32.mxu0 0.0
        %2475 = vmatmul.mubr.f32.gmra.mrb[0].mxu0 %v1225
        %v2476 = vpop.f32.mrb[0].mxu0
        %v2477 = vadd.f32 %v594, %v2476
        %v2478 = vpop.f32.mrb[0].mxu0
        %2479 = vmatprep.mubr.f32.mxu0 0.0
        %2480 = vmatmul.mubr.f32.gmra.mrb[0].mxu0 %v1228
        %v2481 = vpop.f32.mrb[0].mxu0
        %v2482 = vadd.f32 %v594, %v2481
        %v2483 = vpop.f32.mrb[0].mxu0
        %2484 = vmatprep.mubr.f32.mxu0 0.0
        %2485 = vmatmul.mubr.f32.gmra.mrb[0].mxu0 %v1231
        %v2486 = vpop.f32.mrb[0].mxu0
        %v2487 = vadd.f32 %v594, %v2486
        %v2488 = vpop.f32.mrb[0].mxu0
        %2489 = vmatprep.mubr.f32.mxu0 0.0
        %2490 = vmatmul.mubr.f32.gmra.mrb[0].mxu0 %v1234
        %v2491 = vpop.f32.mrb[0].mxu0
        %v2492 = vadd.f32 %v594, %v2491
        %v2493 = vpop.f32.mrb[0].mxu0
        %2494 = vmatprep.mubr.f32.mxu0 0.0
        %2495 = vmatmul.mubr.f32.gmra.mrb[0].mxu0 %v1237
        %v2496 = vpop.f32.mrb[0].mxu0
        %v2497 = vadd.f32 %v594, %v2496
        %v2498 = vpop.f32.mrb[0].mxu0
        %2499 = vmatprep.mubr.f32.mxu0 0.0
        %2500 = vmatmul.mubr.f32.gmra.mrb[0].mxu0 %v1240
        %v2501 = vpop.f32.mrb[0].mxu0
        %v2502 = vadd.f32 %v594, %v2501
        %v2503 = vpop.f32.mrb[0].mxu0
        %2504 = vmatprep.mubr.f32.mxu0 0.0
        %2505 = vmatmul.mubr.f32.gmra.mrb[0].mxu0 %v1243
        %v2506 = vpop.f32.mrb[0].mxu0
        %v2507 = vadd.f32 %v594, %v2506
        %v2508 = vpop.f32.mrb[0].mxu0
        %2509 = vmatprep.mubr.f32.mxu0 0.0
        %2510 = vmatmul.mubr.f32.gmra.mrb[0].mxu0 %v1246
        %v2511 = vpop.f32.mrb[0].mxu0
        %v2512 = vadd.f32 %v594, %v2511
        %v2513 = vpop.f32.mrb[0].mxu0
        %2514 = vmatprep.mubr.f32.mxu0 0.0
        %2515 = vmatmul.mubr.f32.gmra.mrb[0].mxu0 %v1249
        %v2516 = vpop.f32.mrb[0].mxu0
        %v2517 = vadd.f32 %v594, %v2516
        %v2518 = vpop.f32.mrb[0].mxu0
        %2519 = vmatprep.mubr.f32.mxu0 0.0
        %2520 = vmatmul.mubr.f32.gmra.mrb[0].mxu0 %v1252
        %v2521 = vpop.f32.mrb[0].mxu0
        %v2522 = vadd.f32 %v594, %v2521
        %v2523 = vpop.f32.mrb[0].mxu0
        %2524 = vmatprep.mubr.f32.mxu0 0.0
        %2525 = vmatmul.mubr.f32.gmra.mrb[0].mxu0 %v1255
        %v2526 = vpop.f32.mrb[0].mxu0
        %v2527 = vadd.f32 %v594, %v2526
        %v2528 = vpop.f32.mrb[0].mxu0
        %2529 = vmatprep.mubr.f32.mxu0 0.0
        %2530 = vmatmul.mubr.f32.gmra.mrb[0].mxu0 %v1258
        %v2531 = vpop.f32.mrb[0].mxu0
        %v2532 = vadd.f32 %v594, %v2531
        %v2533 = vpop.f32.mrb[0].mxu0
        %2534 = vmatprep.mubr.f32.mxu0 0.0
        %2535 = vmatmul.mubr.f32.gmra.mrb[0].mxu0 %v1261
        %v2536 = vpop.f32.mrb[0].mxu0
        %v2537 = vadd.f32 %v594, %v2536
        %v2538 = vpop.f32.mrb[0].mxu0
        %2539 = vmatprep.mubr.f32.mxu0 0.0
        %2540 = vmatmul.mubr.f32.gmra.mrb[0].mxu0 %v1264
        %v2541 = vpop.f32.mrb[0].mxu0
        %v2542 = vadd.f32 %v594, %v2541
        %v2543 = vpop.f32.mrb[0].mxu0
        %2544 = vmatprep.mubr.f32.mxu0 0.0
        %2545 = vmatmul.mubr.f32.gmra.mrb[0].mxu0 %v1267
        %v2546 = vpop.f32.mrb[0].mxu0
        %v2547 = vadd.f32 %v594, %v2546
        %v2548 = vpop.f32.mrb[0].mxu0
        %2549 = vmatprep.mubr.f32.mxu0 0.0
        %2550 = vmatmul.mubr.f32.gmra.mrb[0].mxu0 %v1270
        %v2551 = vpop.f32.mrb[0].mxu0
        %v2552 = vadd.f32 %v594, %v2551
        %v2553 = vpop.f32.mrb[0].mxu0
        %2554 = vmatprep.mubr.f32.mxu0 0.0
        %2555 = vmatmul.mubr.f32.gmra.mrb[0].mxu0 %v1273
        %v2556 = vpop.f32.mrb[0].mxu0
        %v2557 = vadd.f32 %v594, %v2556
        %v2558 = vpop.f32.mrb[0].mxu0
        %2559 = vmatprep.mubr.f32.mxu0 0.0
        %2560 = vmatmul.mubr.f32.gmra.mrb[0].mxu0 %v1276
        %v2561 = vpop.f32.mrb[0].mxu0
        %v2562 = vadd.f32 %v594, %v2561
        %v2563 = vpop.f32.mrb[0].mxu0
        %2564 = vmatprep.mubr.f32.mxu0 0.0
        %2565 = vmatmul.mubr.f32.gmra.mrb[0].mxu0 %v1279
        %v2566 = vpop.f32.mrb[0].mxu0
        %v2567 = vadd.f32 %v594, %v2566
        %v2568 = vpop.f32.mrb[0].mxu0
        %2569 = vmatprep.mubr.f32.mxu0 0.0
        %2570 = vmatmul.mubr.f32.gmra.mrb[0].mxu0 %v1282
        %v2571 = vpop.f32.mrb[0].mxu0
        %v2572 = vadd.f32 %v594, %v2571
        %v2573 = vpop.f32.mrb[0].mxu0
        %2574 = vmatprep.mubr.f32.mxu0 0.0
        %2575 = vmatmul.mubr.f32.gmra.mrb[0].mxu0 %v1285
        %v2576 = vpop.f32.mrb[0].mxu0
        %v2577 = vadd.f32 %v594, %v2576
        %v2578 = vpop.f32.mrb[0].mxu0
        %2579 = vmatprep.mubr.f32.mxu0 0.0
        %2580 = vmatmul.mubr.f32.gmra.mrb[0].mxu0 %v1288
        %v2581 = vpop.f32.mrb[0].mxu0
        %v2582 = vadd.f32 %v594, %v2581
        %v2583 = vpop.f32.mrb[0].mxu0
        %2584 = vmatprep.mubr.f32.mxu0 0.0
        %2585 = vmatmul.mubr.f32.gmra.mrb[0].mxu0 %v1291
        %v2586 = vpop.f32.mrb[0].mxu0
        %v2587 = vadd.f32 %v594, %v2586
        %v2588 = vpop.f32.mrb[0].mxu0
        %2589 = vmatprep.mubr.f32.mxu0 0.0
        %2590 = vmatmul.mubr.f32.gmra.mrb[0].mxu0 %v1294
        %v2591 = vpop.f32.mrb[0].mxu0
        %v2592 = vadd.f32 %v594, %v2591
        %v2593 = vpop.f32.mrb[0].mxu0
        %2594 = vmatprep.mubr.f32.mxu0 0.0
        %2595 = vmatmul.mubr.f32.gmra.mrb[0].mxu0 %v1297
        %v2596 = vpop.f32.mrb[0].mxu0
        %v2597 = vadd.f32 %v594, %v2596
        %v2598 = vpop.f32.mrb[0].mxu0
        %2599 = vmatprep.mubr.f32.mxu0 0.0
        %2600 = vmatmul.mubr.f32.gmra.mrb[0].mxu0 %v1300
        %v2601 = vpop.f32.mrb[0].mxu0
        %v2602 = vadd.f32 %v594, %v2601
        %v2603 = vpop.f32.mrb[0].mxu0
        %2604 = vmatprep.mubr.f32.mxu0 0.0
        %2605 = vmatmul.mubr.f32.gmra.mrb[0].mxu0 %v1303
        %v2606 = vpop.f32.mrb[0].mxu0
        %v2607 = vadd.f32 %v594, %v2606
        %v2608 = vpop.f32.mrb[0].mxu0
        %2609 = vmatprep.mubr.f32.mxu0 0.0
        %2610 = vmatmul.mubr.f32.gmra.mrb[0].mxu0 %v1306
        %v2611 = vpop.f32.mrb[0].mxu0
        %v2612 = vadd.f32 %v594, %v2611
        %v2613 = vpop.f32.mrb[0].mxu0
        %2614 = vmatprep.mubr.f32.mxu0 0.0
        %2615 = vmatmul.mubr.f32.gmra.mrb[0].mxu0 %v1309
        %v2616 = vpop.f32.mrb[0].mxu0
        %v2617 = vadd.f32 %v594, %v2616
        %v2618 = vpop.f32.mrb[0].mxu0
        %2619 = vmatprep.mubr.f32.mxu0 0.0
        %2620 = vmatmul.mubr.f32.gmra.mrb[0].mxu0 %v1312
        %v2621 = vpop.f32.mrb[0].mxu0
        %v2622 = vadd.f32 %v594, %v2621
        %v2623 = vpop.f32.mrb[0].mxu0
        %2624 = vmatprep.mubr.f32.mxu0 0.0
        %2625 = vmatmul.mubr.f32.gmra.mrb[0].mxu0 %v1315
        %v2626 = vpop.f32.mrb[0].mxu0
        %v2627 = vadd.f32 %v594, %v2626
        %v2628 = vpop.f32.mrb[0].mxu0
        %2629 = vmatprep.mubr.f32.mxu0 0.0
        %2630 = vmatmul.mubr.f32.gmra.mrb[0].mxu0 %v1318
        %v2631 = vpop.f32.mrb[0].mxu0
        %v2632 = vadd.f32 %v594, %v2631
        %v2633 = vpop.f32.mrb[0].mxu0
        %2634 = vmatprep.mubr.f32.mxu0 0.0
        %2635 = vmatmul.mubr.f32.gmra.mrb[0].mxu0 %v1321
        %v2636 = vpop.f32.mrb[0].mxu0
        %v2637 = vadd.f32 %v594, %v2636
        %v2638 = vpop.f32.mrb[0].mxu0
        %2639 = vmatprep.mubr.f32.mxu0 0.0
        %2640 = vmatmul.mubr.f32.gmra.mrb[0].mxu0 %v1324
        %v2641 = vpop.f32.mrb[0].mxu0
        %v2642 = vadd.f32 %v594, %v2641
        %v2643 = vpop.f32.mrb[0].mxu0
        %2644 = vmatprep.mubr.f32.mxu0 0.0
        %2645 = vmatmul.mubr.f32.gmra.mrb[0].mxu0 %v1327
        %v2646 = vpop.f32.mrb[0].mxu0
        %v2647 = vadd.f32 %v594, %v2646
        %v2648 = vpop.f32.mrb[0].mxu0
        %2649 = vmatprep.mubr.f32.mxu0 0.0
        %2650 = vmatmul.mubr.f32.gmra.mrb[0].mxu0 %v1330
        %v2651 = vpop.f32.mrb[0].mxu0
        %v2652 = vadd.f32 %v594, %v2651
        %v2653 = vpop.f32.mrb[0].mxu0
        %2654 = vmatprep.mubr.f32.mxu0 0.0
        %2655 = vmatmul.mubr.f32.gmra.mrb[0].mxu0 %v1333
        %v2656 = vpop.f32.mrb[0].mxu0
        %v2657 = vadd.f32 %v594, %v2656
        %v2658 = vpop.f32.mrb[0].mxu0
        %2659 = vmatprep.mubr.f32.mxu0 0.0
        %2660 = vmatmul.mubr.f32.gmra.mrb[0].mxu0 %v1336
        %v2661 = vpop.f32.mrb[0].mxu0
        %v2662 = vadd.f32 %v594, %v2661
        %v2663 = vpop.f32.mrb[0].mxu0
        %2664 = vmatprep.mubr.f32.mxu0 0.0
        %2665 = vmatmul.mubr.f32.gmra.mrb[0].mxu0 %v1339
        %v2666 = vpop.f32.mrb[0].mxu0
        %v2667 = vadd.f32 %v594, %v2666
        %v2668 = vpop.f32.mrb[0].mxu0
        %2669 = vmatprep.mubr.f32.mxu0 0.0
        %2670 = vmatmul.mubr.f32.gmra.mrb[0].mxu0 %v1342
        %v2671 = vpop.f32.mrb[0].mxu0
        %v2672 = vadd.f32 %v594, %v2671
        %v2673 = vpop.f32.mrb[0].mxu0
        %2674 = vmatprep.mubr.f32.mxu0 0.0
        %2675 = vmatmul.mubr.f32.gmra.mrb[0].mxu0 %v1345
        %v2676 = vpop.f32.mrb[0].mxu0
        %v2677 = vadd.f32 %v594, %v2676
        %v2678 = vpop.f32.mrb[0].mxu0
        %2679 = vmatprep.mubr.f32.mxu0 0.0
        %2680 = vmatmul.mubr.f32.gmra.mrb[0].mxu0 %v1348
        %v2681 = vpop.f32.mrb[0].mxu0
        %v2682 = vadd.f32 %v594, %v2681
        %v2683 = vpop.f32.mrb[0].mxu0
        %2684 = vmatprep.mubr.f32.mxu0 0.0
        %2685 = vmatmul.mubr.f32.gmra.mrb[0].mxu0 %v1351
        %v2686 = vpop.f32.mrb[0].mxu0
        %v2687 = vadd.f32 %v594, %v2686
        %v2688 = vpop.f32.mrb[0].mxu0
        %2689 = vmatprep.mubr.f32.mxu0 0.0
        %2690 = vmatmul.mubr.f32.gmra.mrb[0].mxu0 %v1354
        %v2691 = vpop.f32.mrb[0].mxu0
        %v2692 = vadd.f32 %v594, %v2691
        %v2693 = vpop.f32.mrb[0].mxu0
        %2694 = vmatprep.mubr.f32.mxu0 0.0
        %2695 = vmatmul.mubr.f32.gmra.mrb[0].mxu0 %v1357
        %v2696 = vpop.f32.mrb[0].mxu0
        %v2697 = vadd.f32 %v594, %v2696
        %v2698 = vpop.f32.mrb[0].mxu0
        %2699 = vmatprep.mubr.f32.mxu0 0.0
        %2700 = vmatmul.mubr.f32.gmra.mrb[0].mxu0 %v1360
        %v2701 = vpop.f32.mrb[0].mxu0
        %v2702 = vadd.f32 %v594, %v2701
        %v2703 = vpop.f32.mrb[0].mxu0
        %2704 = vmatprep.mubr.f32.mxu0 0.0
        %2705 = vmatmul.mubr.f32.gmra.mrb[0].mxu0 %v1363
        %v2706 = vpop.f32.mrb[0].mxu0
        %v2707 = vadd.f32 %v594, %v2706
        %v2708 = vpop.f32.mrb[0].mxu0
        %2709 = vdwg.mxu0
        %v2710 = vmax.f32 %v1432, 0.0
        %v2711 = vmax.f32 %v1437, 0.0
        %v2712 = vmax.f32 %v1442, 0.0
        %v2713 = vmax.f32 %v1447, 0.0
        %v2714 = vmax.f32 %v1452, 0.0
        %v2715 = vmax.f32 %v1457, 0.0
        %v2716 = vmax.f32 %v1462, 0.0
        %v2717 = vmax.f32 %v1467, 0.0
        %v2718 = vmax.f32 %v1472, 0.0
        %v2719 = vmax.f32 %v1477, 0.0
        %v2720 = vmax.f32 %v1482, 0.0
        %v2721 = vmax.f32 %v1487, 0.0
        %v2722 = vmax.f32 %v1492, 0.0
        %v2723 = vmax.f32 %v1497, 0.0
        %v2724 = vmax.f32 %v1502, 0.0
        %v2725 = vmax.f32 %v1507, 0.0
        %v2726 = vmax.f32 %v1512, 0.0
        %v2727 = vmax.f32 %v1517, 0.0
        %v2728 = vmax.f32 %v1522, 0.0
        %v2729 = vmax.f32 %v1527, 0.0
        %v2730 = vmax.f32 %v1532, 0.0
        %v2731 = vmax.f32 %v1537, 0.0
        %v2732 = vmax.f32 %v1542, 0.0
        %v2733 = vmax.f32 %v1547, 0.0
        %v2734 = vmax.f32 %v1552, 0.0
        %v2735 = vmax.f32 %v1557, 0.0
        %v2736 = vmax.f32 %v1562, 0.0
        %v2737 = vmax.f32 %v1567, 0.0
        %v2738 = vmax.f32 %v1572, 0.0
        %v2739 = vmax.f32 %v1577, 0.0
        %v2740 = vmax.f32 %v1582, 0.0
        %v2741 = vmax.f32 %v1587, 0.0
        %v2742 = vmax.f32 %v1592, 0.0
        %v2743 = vmax.f32 %v1597, 0.0
        %v2744 = vmax.f32 %v1602, 0.0
        %v2745 = vmax.f32 %v1607, 0.0
        %v2746 = vmax.f32 %v1612, 0.0
        %v2747 = vmax.f32 %v1617, 0.0
        %v2748 = vmax.f32 %v1622, 0.0
        %v2749 = vmax.f32 %v1627, 0.0
        %v2750 = vmax.f32 %v1632, 0.0
        %v2751 = vmax.f32 %v1637, 0.0
        %v2752 = vmax.f32 %v1642, 0.0
        %v2753 = vmax.f32 %v1647, 0.0
        %v2754 = vmax.f32 %v1652, 0.0
        %v2755 = vmax.f32 %v1657, 0.0
        %v2756 = vmax.f32 %v1662, 0.0
        %v2757 = vmax.f32 %v1667, 0.0
        %v2758 = vmax.f32 %v1672, 0.0
        %v2759 = vmax.f32 %v1677, 0.0
        %v2760 = vmax.f32 %v1682, 0.0
        %v2761 = vmax.f32 %v1687, 0.0
        %v2762 = vmax.f32 %v1692, 0.0
        %v2763 = vmax.f32 %v1697, 0.0
        %v2764 = vmax.f32 %v1702, 0.0
        %v2765 = vmax.f32 %v1707, 0.0
        %v2766 = vmax.f32 %v1712, 0.0
        %v2767 = vmax.f32 %v1717, 0.0
        %v2768 = vmax.f32 %v1722, 0.0
        %v2769 = vmax.f32 %v1727, 0.0
        %v2770 = vmax.f32 %v1732, 0.0
        %v2771 = vmax.f32 %v1737, 0.0
        %v2772 = vmax.f32 %v1742, 0.0
        %v2773 = vmax.f32 %v1747, 0.0
        %v2774 = vmax.f32 %v1752, 0.0
        %v2775 = vmax.f32 %v1757, 0.0
        %v2776 = vmax.f32 %v1762, 0.0
        %v2777 = vmax.f32 %v1767, 0.0
        %v2778 = vmax.f32 %v1772, 0.0
        %v2779 = vmax.f32 %v1777, 0.0
        %v2780 = vmax.f32 %v1782, 0.0
        %v2781 = vmax.f32 %v1787, 0.0
        %v2782 = vmax.f32 %v1792, 0.0
        %v2783 = vmax.f32 %v1797, 0.0
        %v2784 = vmax.f32 %v1802, 0.0
        %v2785 = vmax.f32 %v1807, 0.0
        %v2786 = vmax.f32 %v1812, 0.0
        %v2787 = vmax.f32 %v1817, 0.0
        %v2788 = vmax.f32 %v1822, 0.0
        %v2789 = vmax.f32 %v1827, 0.0
        %v2790 = vmax.f32 %v1832, 0.0
        %v2791 = vmax.f32 %v1837, 0.0
        %v2792 = vmax.f32 %v1842, 0.0
        %v2793 = vmax.f32 %v1847, 0.0
        %v2794 = vmax.f32 %v1852, 0.0
        %v2795 = vmax.f32 %v1857, 0.0
        %v2796 = vmax.f32 %v1862, 0.0
        %v2797 = vmax.f32 %v1867, 0.0
        %v2798 = vmax.f32 %v1872, 0.0
        %v2799 = vmax.f32 %v1877, 0.0
        %v2800 = vmax.f32 %v1882, 0.0
        %v2801 = vmax.f32 %v1887, 0.0
        %v2802 = vmax.f32 %v1892, 0.0
        %v2803 = vmax.f32 %v1897, 0.0
        %v2804 = vmax.f32 %v1902, 0.0
        %v2805 = vmax.f32 %v1907, 0.0
        %v2806 = vmax.f32 %v1912, 0.0
        %v2807 = vmax.f32 %v1917, 0.0
        %v2808 = vmax.f32 %v1922, 0.0
        %v2809 = vmax.f32 %v1927, 0.0
        %v2810 = vmax.f32 %v1932, 0.0
        %v2811 = vmax.f32 %v1937, 0.0
        %v2812 = vmax.f32 %v1942, 0.0
        %v2813 = vmax.f32 %v1947, 0.0
        %v2814 = vmax.f32 %v1952, 0.0
        %v2815 = vmax.f32 %v1957, 0.0
        %v2816 = vmax.f32 %v1962, 0.0
        %v2817 = vmax.f32 %v1967, 0.0
        %v2818 = vmax.f32 %v1972, 0.0
        %v2819 = vmax.f32 %v1977, 0.0
        %v2820 = vmax.f32 %v1982, 0.0
        %v2821 = vmax.f32 %v1987, 0.0
        %v2822 = vmax.f32 %v1992, 0.0
        %v2823 = vmax.f32 %v1997, 0.0
        %v2824 = vmax.f32 %v2002, 0.0
        %v2825 = vmax.f32 %v2007, 0.0
        %v2826 = vmax.f32 %v2012, 0.0
        %v2827 = vmax.f32 %v2017, 0.0
        %v2828 = vmax.f32 %v2022, 0.0
        %v2829 = vmax.f32 %v2027, 0.0
        %v2830 = vmax.f32 %v2032, 0.0
        %v2831 = vmax.f32 %v2037, 0.0
        %v2832 = vmax.f32 %v2042, 0.0
        %v2833 = vmax.f32 %v2047, 0.0
        %v2834 = vmax.f32 %v2052, 0.0
        %v2835 = vmax.f32 %v2057, 0.0
        %v2836 = vmax.f32 %v2062, 0.0
        %v2837 = vmax.f32 %v2067, 0.0
        %v2838 = vmax.f32 %v2072, 0.0
        %v2839 = vmax.f32 %v2077, 0.0
        %v2840 = vmax.f32 %v2082, 0.0
        %v2841 = vmax.f32 %v2087, 0.0
        %v2842 = vmax.f32 %v2092, 0.0
        %v2843 = vmax.f32 %v2097, 0.0
        %v2844 = vmax.f32 %v2102, 0.0
        %v2845 = vmax.f32 %v2107, 0.0
        %v2846 = vmax.f32 %v2112, 0.0
        %v2847 = vmax.f32 %v2117, 0.0
        %v2848 = vmax.f32 %v2122, 0.0
        %v2849 = vmax.f32 %v2127, 0.0
        %v2850 = vmax.f32 %v2132, 0.0
        %v2851 = vmax.f32 %v2137, 0.0
        %v2852 = vmax.f32 %v2142, 0.0
        %v2853 = vmax.f32 %v2147, 0.0
        %v2854 = vmax.f32 %v2152, 0.0
        %v2855 = vmax.f32 %v2157, 0.0
        %v2856 = vmax.f32 %v2162, 0.0
        %v2857 = vmax.f32 %v2167, 0.0
        %v2858 = vmax.f32 %v2172, 0.0
        %v2859 = vmax.f32 %v2177, 0.0
        %v2860 = vmax.f32 %v2182, 0.0
        %v2861 = vmax.f32 %v2187, 0.0
        %v2862 = vmax.f32 %v2192, 0.0
        %v2863 = vmax.f32 %v2197, 0.0
        %v2864 = vmax.f32 %v2202, 0.0
        %v2865 = vmax.f32 %v2207, 0.0
        %v2866 = vmax.f32 %v2212, 0.0
        %v2867 = vmax.f32 %v2217, 0.0
        %v2868 = vmax.f32 %v2222, 0.0
        %v2869 = vmax.f32 %v2227, 0.0
        %v2870 = vmax.f32 %v2232, 0.0
        %v2871 = vmax.f32 %v2237, 0.0
        %v2872 = vmax.f32 %v2242, 0.0
        %v2873 = vmax.f32 %v2247, 0.0
        %v2874 = vmax.f32 %v2252, 0.0
        %v2875 = vmax.f32 %v2257, 0.0
        %v2876 = vmax.f32 %v2262, 0.0
        %v2877 = vmax.f32 %v2267, 0.0
        %v2878 = vmax.f32 %v2272, 0.0
        %v2879 = vmax.f32 %v2277, 0.0
        %v2880 = vmax.f32 %v2282, 0.0
        %v2881 = vmax.f32 %v2287, 0.0
        %v2882 = vmax.f32 %v2292, 0.0
        %v2883 = vmax.f32 %v2297, 0.0
        %v2884 = vmax.f32 %v2302, 0.0
        %v2885 = vmax.f32 %v2307, 0.0
        %v2886 = vmax.f32 %v2312, 0.0
        %v2887 = vmax.f32 %v2317, 0.0
        %v2888 = vmax.f32 %v2322, 0.0
        %v2889 = vmax.f32 %v2327, 0.0
        %v2890 = vmax.f32 %v2332, 0.0
        %v2891 = vmax.f32 %v2337, 0.0
        %v2892 = vmax.f32 %v2342, 0.0
        %v2893 = vmax.f32 %v2347, 0.0
        %v2894 = vmax.f32 %v2352, 0.0
        %v2895 = vmax.f32 %v2357, 0.0
        %v2896 = vmax.f32 %v2362, 0.0
        %v2897 = vmax.f32 %v2367, 0.0
        %v2898 = vmax.f32 %v2372, 0.0
        %v2899 = vmax.f32 %v2377, 0.0
        %v2900 = vmax.f32 %v2382, 0.0
        %v2901 = vmax.f32 %v2387, 0.0
        %v2902 = vmax.f32 %v2392, 0.0
        %v2903 = vmax.f32 %v2397, 0.0
        %v2904 = vmax.f32 %v2402, 0.0
        %v2905 = vmax.f32 %v2407, 0.0
        %v2906 = vmax.f32 %v2412, 0.0
        %v2907 = vmax.f32 %v2417, 0.0
        %v2908 = vmax.f32 %v2422, 0.0
        %v2909 = vmax.f32 %v2427, 0.0
        %v2910 = vmax.f32 %v2432, 0.0
        %v2911 = vmax.f32 %v2437, 0.0
        %v2912 = vmax.f32 %v2442, 0.0
        %v2913 = vmax.f32 %v2447, 0.0
        %v2914 = vmax.f32 %v2452, 0.0
        %v2915 = vmax.f32 %v2457, 0.0
        %v2916 = vmax.f32 %v2462, 0.0
        %v2917 = vmax.f32 %v2467, 0.0
        %v2918 = vmax.f32 %v2472, 0.0
        %v2919 = vmax.f32 %v2477, 0.0
        %v2920 = vmax.f32 %v2482, 0.0
        %v2921 = vmax.f32 %v2487, 0.0
        %v2922 = vmax.f32 %v2492, 0.0
        %v2923 = vmax.f32 %v2497, 0.0
        %v2924 = vmax.f32 %v2502, 0.0
        %v2925 = vmax.f32 %v2507, 0.0
        %v2926 = vmax.f32 %v2512, 0.0
        %v2927 = vmax.f32 %v2517, 0.0
        %v2928 = vmax.f32 %v2522, 0.0
        %v2929 = vmax.f32 %v2527, 0.0
        %v2930 = vmax.f32 %v2532, 0.0
        %v2931 = vmax.f32 %v2537, 0.0
        %v2932 = vmax.f32 %v2542, 0.0
        %v2933 = vmax.f32 %v2547, 0.0
        %v2934 = vmax.f32 %v2552, 0.0
        %v2935 = vmax.f32 %v2557, 0.0
        %v2936 = vmax.f32 %v2562, 0.0
        %v2937 = vmax.f32 %v2567, 0.0
        %v2938 = vmax.f32 %v2572, 0.0
        %v2939 = vmax.f32 %v2577, 0.0
        %v2940 = vmax.f32 %v2582, 0.0
        %v2941 = vmax.f32 %v2587, 0.0
        %v2942 = vmax.f32 %v2592, 0.0
        %v2943 = vmax.f32 %v2597, 0.0
        %v2944 = vmax.f32 %v2602, 0.0
        %v2945 = vmax.f32 %v2607, 0.0
        %v2946 = vmax.f32 %v2612, 0.0
        %v2947 = vmax.f32 %v2617, 0.0
        %v2948 = vmax.f32 %v2622, 0.0
        %v2949 = vmax.f32 %v2627, 0.0
        %v2950 = vmax.f32 %v2632, 0.0
        %v2951 = vmax.f32 %v2637, 0.0
        %v2952 = vmax.f32 %v2642, 0.0
        %v2953 = vmax.f32 %v2647, 0.0
        %v2954 = vmax.f32 %v2652, 0.0
        %v2955 = vmax.f32 %v2657, 0.0
        %v2956 = vmax.f32 %v2662, 0.0
        %v2957 = vmax.f32 %v2667, 0.0
        %v2958 = vmax.f32 %v2672, 0.0
        %v2959 = vmax.f32 %v2677, 0.0
        %v2960 = vmax.f32 %v2682, 0.0
        %v2961 = vmax.f32 %v2687, 0.0
        %v2962 = vmax.f32 %v2692, 0.0
        %v2963 = vmax.f32 %v2697, 0.0
        %v2964 = vmax.f32 %v2702, 0.0
        %v2965 = vmax.f32 %v2707, 0.0
        %v2966 = vadd.f32 %v2710, %v2711
        %v2967 = vadd.f32 %v2966, %v2712
        %v2968 = vadd.f32 %v2967, %v2713
        %v2969 = vadd.f32 %v2968, %v2714
        %v2970 = vadd.f32 %v2969, %v2715
        %v2971 = vadd.f32 %v2970, %v2716
        %v2972 = vadd.f32 %v2971, %v2717
        %v2973 = vadd.f32 %v2972, %v2718
        %v2974 = vadd.f32 %v2973, %v2719
        %v2975 = vadd.f32 %v2974, %v2720
        %v2976 = vadd.f32 %v2975, %v2721
        %v2977 = vadd.f32 %v2976, %v2722
        %v2978 = vadd.f32 %v2977, %v2723
        %v2979 = vadd.f32 %v2978, %v2724
        %v2980 = vadd.f32 %v2979, %v2725
        %v2981 = vadd.f32 %v2980, %v2726
        %v2982 = vadd.f32 %v2981, %v2727
        %v2983 = vadd.f32 %v2982, %v2728
        %v2984 = vadd.f32 %v2983, %v2729
        %v2985 = vadd.f32 %v2984, %v2730
        %v2986 = vadd.f32 %v2985, %v2731
        %v2987 = vadd.f32 %v2986, %v2732
        %v2988 = vadd.f32 %v2987, %v2733
        %v2989 = vadd.f32 %v2988, %v2734
        %v2990 = vadd.f32 %v2989, %v2735
        %v2991 = vadd.f32 %v2990, %v2736
        %v2992 = vadd.f32 %v2991, %v2737
        %v2993 = vadd.f32 %v2992, %v2738
        %v2994 = vadd.f32 %v2993, %v2739
        %v2995 = vadd.f32 %v2994, %v2740
        %v2996 = vadd.f32 %v2995, %v2741
        %v2997 = vrot.slane %v2996, 4
        %v2998 = vadd.f32 %v2996, %v2997
        %v2999 = vrot.slane %v2998, 2
        %v3000 = vadd.f32 %v2998, %v2999
        %v3001 = vrot.slane %v3000, 1
        %v3002 = vadd.f32 %v3000, %v3001
        %v3003 = vadd.f32 %v2742, %v2743
        %v3004 = vadd.f32 %v3003, %v2744
        %v3005 = vadd.f32 %v3004, %v2745
        %v3006 = vadd.f32 %v3005, %v2746
        %v3007 = vadd.f32 %v3006, %v2747
        %v3008 = vadd.f32 %v3007, %v2748
        %v3009 = vadd.f32 %v3008, %v2749
        %v3010 = vadd.f32 %v3009, %v2750
        %v3011 = vadd.f32 %v3010, %v2751
        %v3012 = vadd.f32 %v3011, %v2752
        %v3013 = vadd.f32 %v3012, %v2753
        %v3014 = vadd.f32 %v3013, %v2754
        %v3015 = vadd.f32 %v3014, %v2755
        %v3016 = vadd.f32 %v3015, %v2756
        %v3017 = vadd.f32 %v3016, %v2757
        %v3018 = vadd.f32 %v3017, %v2758
        %v3019 = vadd.f32 %v3018, %v2759
        %v3020 = vadd.f32 %v3019, %v2760
        %v3021 = vadd.f32 %v3020, %v2761
        %v3022 = vadd.f32 %v3021, %v2762
        %v3023 = vadd.f32 %v3022, %v2763
        %v3024 = vadd.f32 %v3023, %v2764
        %v3025 = vadd.f32 %v3024, %v2765
        %v3026 = vadd.f32 %v3025, %v2766
        %v3027 = vadd.f32 %v3026, %v2767
        %v3028 = vadd.f32 %v3027, %v2768
        %v3029 = vadd.f32 %v3028, %v2769
        %v3030 = vadd.f32 %v3029, %v2770
        %v3031 = vadd.f32 %v3030, %v2771
        %v3032 = vadd.f32 %v3031, %v2772
        %v3033 = vadd.f32 %v3032, %v2773
        %v3034 = vrot.slane %v3033, 4
        %v3035 = vadd.f32 %v3033, %v3034
        %v3036 = vrot.slane %v3035, 2
        %v3037 = vadd.f32 %v3035, %v3036
        %v3038 = vrot.slane %v3037, 1
        %v3039 = vadd.f32 %v3037, %v3038
        %v3040 = vadd.f32 %v2774, %v2775
        %v3041 = vadd.f32 %v3040, %v2776
        %v3042 = vadd.f32 %v3041, %v2777
        %v3043 = vadd.f32 %v3042, %v2778
        %v3044 = vadd.f32 %v3043, %v2779
        %v3045 = vadd.f32 %v3044, %v2780
        %v3046 = vadd.f32 %v3045, %v2781
        %v3047 = vadd.f32 %v3046, %v2782
        %v3048 = vadd.f32 %v3047, %v2783
        %v3049 = vadd.f32 %v3048, %v2784
        %v3050 = vadd.f32 %v3049, %v2785
        %v3051 = vadd.f32 %v3050, %v2786
        %v3052 = vadd.f32 %v3051, %v2787
        %v3053 = vadd.f32 %v3052, %v2788
        %v3054 = vadd.f32 %v3053, %v2789
        %v3055 = vadd.f32 %v3054, %v2790
        %v3056 = vadd.f32 %v3055, %v2791
        %v3057 = vadd.f32 %v3056, %v2792
        %v3058 = vadd.f32 %v3057, %v2793
        %v3059 = vadd.f32 %v3058, %v2794
        %v3060 = vadd.f32 %v3059, %v2795
        %v3061 = vadd.f32 %v3060, %v2796
        %v3062 = vadd.f32 %v3061, %v2797
        %v3063 = vadd.f32 %v3062, %v2798
        %v3064 = vadd.f32 %v3063, %v2799
        %v3065 = vadd.f32 %v3064, %v2800
        %v3066 = vadd.f32 %v3065, %v2801
        %v3067 = vadd.f32 %v3066, %v2802
        %v3068 = vadd.f32 %v3067, %v2803
        %v3069 = vadd.f32 %v3068, %v2804
        %v3070 = vadd.f32 %v3069, %v2805
        %v3071 = vrot.slane %v3070, 4
        %v3072 = vadd.f32 %v3070, %v3071
        %v3073 = vrot.slane %v3072, 2
        %v3074 = vadd.f32 %v3072, %v3073
        %v3075 = vrot.slane %v3074, 1
        %v3076 = vadd.f32 %v3074, %v3075
        %v3077 = vadd.f32 %v2806, %v2807
        %v3078 = vadd.f32 %v3077, %v2808
        %v3079 = vadd.f32 %v3078, %v2809
        %v3080 = vadd.f32 %v3079, %v2810
        %v3081 = vadd.f32 %v3080, %v2811
        %v3082 = vadd.f32 %v3081, %v2812
        %v3083 = vadd.f32 %v3082, %v2813
        %v3084 = vadd.f32 %v3083, %v2814
        %v3085 = vadd.f32 %v3084, %v2815
        %v3086 = vadd.f32 %v3085, %v2816
        %v3087 = vadd.f32 %v3086, %v2817
        %v3088 = vadd.f32 %v3087, %v2818
        %v3089 = vadd.f32 %v3088, %v2819
        %v3090 = vadd.f32 %v3089, %v2820
        %v3091 = vadd.f32 %v3090, %v2821
        %v3092 = vadd.f32 %v3091, %v2822
        %v3093 = vadd.f32 %v3092, %v2823
        %v3094 = vadd.f32 %v3093, %v2824
        %v3095 = vadd.f32 %v3094, %v2825
        %v3096 = vadd.f32 %v3095, %v2826
        %v3097 = vadd.f32 %v3096, %v2827
        %v3098 = vadd.f32 %v3097, %v2828
        %v3099 = vadd.f32 %v3098, %v2829
        %v3100 = vadd.f32 %v3099, %v2830
        %v3101 = vadd.f32 %v3100, %v2831
        %v3102 = vadd.f32 %v3101, %v2832
        %v3103 = vadd.f32 %v3102, %v2833
        %v3104 = vadd.f32 %v3103, %v2834
        %v3105 = vadd.f32 %v3104, %v2835
        %v3106 = vadd.f32 %v3105, %v2836
        %v3107 = vadd.f32 %v3106, %v2837
        %v3108 = vrot.slane %v3107, 4
        %v3109 = vadd.f32 %v3107, %v3108
        %v3110 = vrot.slane %v3109, 2
        %v3111 = vadd.f32 %v3109, %v3110
        %v3112 = vrot.slane %v3111, 1
        %v3113 = vadd.f32 %v3111, %v3112
        %v3114 = vadd.f32 %v2838, %v2839
        %v3115 = vadd.f32 %v3114, %v2840
        %v3116 = vadd.f32 %v3115, %v2841
        %v3117 = vadd.f32 %v3116, %v2842
        %v3118 = vadd.f32 %v3117, %v2843
        %v3119 = vadd.f32 %v3118, %v2844
        %v3120 = vadd.f32 %v3119, %v2845
        %v3121 = vadd.f32 %v3120, %v2846
        %v3122 = vadd.f32 %v3121, %v2847
        %v3123 = vadd.f32 %v3122, %v2848
        %v3124 = vadd.f32 %v3123, %v2849
        %v3125 = vadd.f32 %v3124, %v2850
        %v3126 = vadd.f32 %v3125, %v2851
        %v3127 = vadd.f32 %v3126, %v2852
        %v3128 = vadd.f32 %v3127, %v2853
        %v3129 = vadd.f32 %v3128, %v2854
        %v3130 = vadd.f32 %v3129, %v2855
        %v3131 = vadd.f32 %v3130, %v2856
        %v3132 = vadd.f32 %v3131, %v2857
        %v3133 = vadd.f32 %v3132, %v2858
        %v3134 = vadd.f32 %v3133, %v2859
        %v3135 = vadd.f32 %v3134, %v2860
        %v3136 = vadd.f32 %v3135, %v2861
        %v3137 = vadd.f32 %v3136, %v2862
        %v3138 = vadd.f32 %v3137, %v2863
        %v3139 = vadd.f32 %v3138, %v2864
        %v3140 = vadd.f32 %v3139, %v2865
        %v3141 = vadd.f32 %v3140, %v2866
        %v3142 = vadd.f32 %v3141, %v2867
        %v3143 = vadd.f32 %v3142, %v2868
        %v3144 = vadd.f32 %v3143, %v2869
        %v3145 = vrot.slane %v3144, 4
        %v3146 = vadd.f32 %v3144, %v3145
        %v3147 = vrot.slane %v3146, 2
        %v3148 = vadd.f32 %v3146, %v3147
        %v3149 = vrot.slane %v3148, 1
        %v3150 = vadd.f32 %v3148, %v3149
        %v3151 = vadd.f32 %v2870, %v2871
        %v3152 = vadd.f32 %v3151, %v2872
        %v3153 = vadd.f32 %v3152, %v2873
        %v3154 = vadd.f32 %v3153, %v2874
        %v3155 = vadd.f32 %v3154, %v2875
        %v3156 = vadd.f32 %v3155, %v2876
        %v3157 = vadd.f32 %v3156, %v2877
        %v3158 = vadd.f32 %v3157, %v2878
        %v3159 = vadd.f32 %v3158, %v2879
        %v3160 = vadd.f32 %v3159, %v2880
        %v3161 = vadd.f32 %v3160, %v2881
        %v3162 = vadd.f32 %v3161, %v2882
        %v3163 = vadd.f32 %v3162, %v2883
        %v3164 = vadd.f32 %v3163, %v2884
        %v3165 = vadd.f32 %v3164, %v2885
        %v3166 = vadd.f32 %v3165, %v2886
        %v3167 = vadd.f32 %v3166, %v2887
        %v3168 = vadd.f32 %v3167, %v2888
        %v3169 = vadd.f32 %v3168, %v2889
        %v3170 = vadd.f32 %v3169, %v2890
        %v3171 = vadd.f32 %v3170, %v2891
        %v3172 = vadd.f32 %v3171, %v2892
        %v3173 = vadd.f32 %v3172, %v2893
        %v3174 = vadd.f32 %v3173, %v2894
        %v3175 = vadd.f32 %v3174, %v2895
        %v3176 = vadd.f32 %v3175, %v2896
        %v3177 = vadd.f32 %v3176, %v2897
        %v3178 = vadd.f32 %v3177, %v2898
        %v3179 = vadd.f32 %v3178, %v2899
        %v3180 = vadd.f32 %v3179, %v2900
        %v3181 = vadd.f32 %v3180, %v2901
        %v3182 = vrot.slane %v3181, 4
        %v3183 = vadd.f32 %v3181, %v3182
        %v3184 = vrot.slane %v3183, 2
        %v3185 = vadd.f32 %v3183, %v3184
        %v3186 = vrot.slane %v3185, 1
        %v3187 = vadd.f32 %v3185, %v3186
        %v3188 = vadd.f32 %v2902, %v2903
        %v3189 = vadd.f32 %v3188, %v2904
        %v3190 = vadd.f32 %v3189, %v2905
        %v3191 = vadd.f32 %v3190, %v2906
        %v3192 = vadd.f32 %v3191, %v2907
        %v3193 = vadd.f32 %v3192, %v2908
        %v3194 = vadd.f32 %v3193, %v2909
        %v3195 = vadd.f32 %v3194, %v2910
        %v3196 = vadd.f32 %v3195, %v2911
        %v3197 = vadd.f32 %v3196, %v2912
        %v3198 = vadd.f32 %v3197, %v2913
        %v3199 = vadd.f32 %v3198, %v2914
        %v3200 = vadd.f32 %v3199, %v2915
        %v3201 = vadd.f32 %v3200, %v2916
        %v3202 = vadd.f32 %v3201, %v2917
        %v3203 = vadd.f32 %v3202, %v2918
        %v3204 = vadd.f32 %v3203, %v2919
        %v3205 = vadd.f32 %v3204, %v2920
        %v3206 = vadd.f32 %v3205, %v2921
        %v3207 = vadd.f32 %v3206, %v2922
        %v3208 = vadd.f32 %v3207, %v2923
        %v3209 = vadd.f32 %v3208, %v2924
        %v3210 = vadd.f32 %v3209, %v2925
        %v3211 = vadd.f32 %v3210, %v2926
        %v3212 = vadd.f32 %v3211, %v2927
        %v3213 = vadd.f32 %v3212, %v2928
        %v3214 = vadd.f32 %v3213, %v2929
        %v3215 = vadd.f32 %v3214, %v2930
        %v3216 = vadd.f32 %v3215, %v2931
        %v3217 = vadd.f32 %v3216, %v2932
        %v3218 = vadd.f32 %v3217, %v2933
        %v3219 = vrot.slane %v3218, 4
        %v3220 = vadd.f32 %v3218, %v3219
        %v3221 = vrot.slane %v3220, 2
        %v3222 = vadd.f32 %v3220, %v3221
        %v3223 = vrot.slane %v3222, 1
        %v3224 = vadd.f32 %v3222, %v3223
        %v3225 = vadd.f32 %v2934, %v2935
        %v3226 = vadd.f32 %v3225, %v2936
        %v3227 = vadd.f32 %v3226, %v2937
        %v3228 = vadd.f32 %v3227, %v2938
        %v3229 = vadd.f32 %v3228, %v2939
        %v3230 = vadd.f32 %v3229, %v2940
        %v3231 = vadd.f32 %v3230, %v2941
        %v3232 = vadd.f32 %v3231, %v2942
        %v3233 = vadd.f32 %v3232, %v2943
        %v3234 = vadd.f32 %v3233, %v2944
        %v3235 = vadd.f32 %v3234, %v2945
        %v3236 = vadd.f32 %v3235, %v2946
        %v3237 = vadd.f32 %v3236, %v2947
        %v3238 = vadd.f32 %v3237, %v2948
        %v3239 = vadd.f32 %v3238, %v2949
        %v3240 = vadd.f32 %v3239, %v2950
        %v3241 = vadd.f32 %v3240, %v2951
        %v3242 = vadd.f32 %v3241, %v2952
        %v3243 = vadd.f32 %v3242, %v2953
        %v3244 = vadd.f32 %v3243, %v2954
        %v3245 = vadd.f32 %v3244, %v2955
        %v3246 = vadd.f32 %v3245, %v2956
        %v3247 = vadd.f32 %v3246, %v2957
        %v3248 = vadd.f32 %v3247, %v2958
        %v3249 = vadd.f32 %v3248, %v2959
        %v3250 = vadd.f32 %v3249, %v2960
        %v3251 = vadd.f32 %v3250, %v2961
        %v3252 = vadd.f32 %v3251, %v2962
        %v3253 = vadd.f32 %v3252, %v2963
        %v3254 = vadd.f32 %v3253, %v2964
        %v3255 = vadd.f32 %v3254, %v2965
        %v3256 = vrot.slane %v3255, 4
        %v3257 = vadd.f32 %v3255, %v3256
        %v3258 = vrot.slane %v3257, 2
        %v3259 = vadd.f32 %v3257, %v3258
        %v3260 = vrot.slane %v3259, 1
        %v3261 = vadd.f32 %v3259, %v3260
        %v3262 = vmul.f32 %v3002, 0.00390625
        %v3263 = vmul.f32 %v3039, 0.00390625
        %v3264 = vmul.f32 %v3076, 0.00390625
        %v3265 = vmul.f32 %v3113, 0.00390625
        %v3266 = vmul.f32 %v3150, 0.00390625
        %v3267 = vmul.f32 %v3187, 0.00390625
        %v3268 = vmul.f32 %v3224, 0.00390625
        %v3269 = vmul.f32 %v3261, 0.00390625
        %v3270 = vld [vmem:[%s3] sm:$0xff]
        %v3271 = vld [vmem:[%s3 + $0x8] sm:$0xff]
        %v3272 = vld [vmem:[%s3 + $0x10] sm:$0xff]
        %v3273 = vld [vmem:[%s3 + $0x18] sm:$0xff]
        %v3274 = vld [vmem:[%s3 + $0x20] sm:$0xff]
        %v3275 = vld [vmem:[%s3 + $0x28] sm:$0xff]
        %v3276 = vld [vmem:[%s3 + $0x30] sm:$0xff]
        %v3277 = vld [vmem:[%s3 + $0x38] sm:$0xff]
        %v3278 = vld [vmem:[%s3 + $0x40] sm:$0xff]
        %v3279 = vld [vmem:[%s3 + $0x48] sm:$0xff]
        %v3280 = vld [vmem:[%s3 + $0x50] sm:$0xff]
        %v3281 = vld [vmem:[%s3 + $0x58] sm:$0xff]
        %v3282 = vld [vmem:[%s3 + $0x60] sm:$0xff]
        %v3283 = vld [vmem:[%s3 + $0x68] sm:$0xff]
        %v3284 = vld [vmem:[%s3 + $0x70] sm:$0xff]
        %v3285 = vld [vmem:[%s3 + $0x78] sm:$0xff]
        %v3286 = vld [vmem:[%s3 + $0x80] sm:$0xff]
        %v3287 = vld [vmem:[%s3 + $0x88] sm:$0xff]
        %v3288 = vld [vmem:[%s3 + $0x90] sm:$0xff]
        %v3289 = vld [vmem:[%s3 + $0x98] sm:$0xff]
        %v3290 = vld [vmem:[%s3 + $0xa0] sm:$0xff]
        %v3291 = vld [vmem:[%s3 + $0xa8] sm:$0xff]
        %v3292 = vld [vmem:[%s3 + $0xb0] sm:$0xff]
        %v3293 = vld [vmem:[%s3 + $0xb8] sm:$0xff]
        %v3294 = vld [vmem:[%s3 + $0xc0] sm:$0xff]
        %v3295 = vld [vmem:[%s3 + $0xc8] sm:$0xff]
        %v3296 = vld [vmem:[%s3 + $0xd0] sm:$0xff]
        %v3297 = vld [vmem:[%s3 + $0xd8] sm:$0xff]
        %v3298 = vld [vmem:[%s3 + $0xe0] sm:$0xff]
        %v3299 = vld [vmem:[%s3 + $0xe8] sm:$0xff]
        %v3300 = vld [vmem:[%s3 + $0xf0] sm:$0xff]
        %v3301 = vld [vmem:[%s3 + $0xf8] sm:$0xff]
        %v3302 = vld [vmem:[%s3 + $0x100] sm:$0xff]
        %v3303 = vld [vmem:[%s3 + $0x108] sm:$0xff]
        %v3304 = vld [vmem:[%s3 + $0x110] sm:$0xff]
        %v3305 = vld [vmem:[%s3 + $0x118] sm:$0xff]
        %v3306 = vld [vmem:[%s3 + $0x120] sm:$0xff]
        %v3307 = vld [vmem:[%s3 + $0x128] sm:$0xff]
        %v3308 = vld [vmem:[%s3 + $0x130] sm:$0xff]
        %v3309 = vld [vmem:[%s3 + $0x138] sm:$0xff]
        %v3310 = vld [vmem:[%s3 + $0x140] sm:$0xff]
        %v3311 = vld [vmem:[%s3 + $0x148] sm:$0xff]
        %v3312 = vld [vmem:[%s3 + $0x150] sm:$0xff]
        %v3313 = vld [vmem:[%s3 + $0x158] sm:$0xff]
        %v3314 = vld [vmem:[%s3 + $0x160] sm:$0xff]
        %v3315 = vld [vmem:[%s3 + $0x168] sm:$0xff]
        %v3316 = vld [vmem:[%s3 + $0x170] sm:$0xff]
        %v3317 = vld [vmem:[%s3 + $0x178] sm:$0xff]
        %v3318 = vld [vmem:[%s3 + $0x180] sm:$0xff]
        %v3319 = vld [vmem:[%s3 + $0x188] sm:$0xff]
        %v3320 = vld [vmem:[%s3 + $0x190] sm:$0xff]
        %v3321 = vld [vmem:[%s3 + $0x198] sm:$0xff]
        %v3322 = vld [vmem:[%s3 + $0x1a0] sm:$0xff]
        %v3323 = vld [vmem:[%s3 + $0x1a8] sm:$0xff]
        %v3324 = vld [vmem:[%s3 + $0x1b0] sm:$0xff]
        %v3325 = vld [vmem:[%s3 + $0x1b8] sm:$0xff]
        %v3326 = vld [vmem:[%s3 + $0x1c0] sm:$0xff]
        %v3327 = vld [vmem:[%s3 + $0x1c8] sm:$0xff]
        %v3328 = vld [vmem:[%s3 + $0x1d0] sm:$0xff]
        %v3329 = vld [vmem:[%s3 + $0x1d8] sm:$0xff]
        %v3330 = vld [vmem:[%s3 + $0x1e0] sm:$0xff]
        %v3331 = vld [vmem:[%s3 + $0x1e8] sm:$0xff]
        %v3332 = vld [vmem:[%s3 + $0x1f0] sm:$0xff]
        %v3333 = vld [vmem:[%s3 + $0x1f8] sm:$0xff]
        %v3334 = vld [vmem:[%s3 + $0x200] sm:$0xff]
        %v3335 = vld [vmem:[%s3 + $0x208] sm:$0xff]
        %v3336 = vld [vmem:[%s3 + $0x210] sm:$0xff]
        %v3337 = vld [vmem:[%s3 + $0x218] sm:$0xff]
        %v3338 = vld [vmem:[%s3 + $0x220] sm:$0xff]
        %v3339 = vld [vmem:[%s3 + $0x228] sm:$0xff]
        %v3340 = vld [vmem:[%s3 + $0x230] sm:$0xff]
        %v3341 = vld [vmem:[%s3 + $0x238] sm:$0xff]
        %v3342 = vld [vmem:[%s3 + $0x240] sm:$0xff]
        %v3343 = vld [vmem:[%s3 + $0x248] sm:$0xff]
        %v3344 = vld [vmem:[%s3 + $0x250] sm:$0xff]
        %v3345 = vld [vmem:[%s3 + $0x258] sm:$0xff]
        %v3346 = vld [vmem:[%s3 + $0x260] sm:$0xff]
        %v3347 = vld [vmem:[%s3 + $0x268] sm:$0xff]
        %v3348 = vld [vmem:[%s3 + $0x270] sm:$0xff]
        %v3349 = vld [vmem:[%s3 + $0x278] sm:$0xff]
        %v3350 = vld [vmem:[%s3 + $0x280] sm:$0xff]
        %v3351 = vld [vmem:[%s3 + $0x288] sm:$0xff]
        %v3352 = vld [vmem:[%s3 + $0x290] sm:$0xff]
        %v3353 = vld [vmem:[%s3 + $0x298] sm:$0xff]
        %v3354 = vld [vmem:[%s3 + $0x2a0] sm:$0xff]
        %v3355 = vld [vmem:[%s3 + $0x2a8] sm:$0xff]
        %v3356 = vld [vmem:[%s3 + $0x2b0] sm:$0xff]
        %v3357 = vld [vmem:[%s3 + $0x2b8] sm:$0xff]
        %v3358 = vld [vmem:[%s3 + $0x2c0] sm:$0xff]
        %v3359 = vld [vmem:[%s3 + $0x2c8] sm:$0xff]
        %v3360 = vld [vmem:[%s3 + $0x2d0] sm:$0xff]
        %v3361 = vld [vmem:[%s3 + $0x2d8] sm:$0xff]
        %v3362 = vld [vmem:[%s3 + $0x2e0] sm:$0xff]
        %v3363 = vld [vmem:[%s3 + $0x2e8] sm:$0xff]
        %v3364 = vld [vmem:[%s3 + $0x2f0] sm:$0xff]
        %v3365 = vld [vmem:[%s3 + $0x2f8] sm:$0xff]
        %v3366 = vld [vmem:[%s3 + $0x300] sm:$0xff]
        %v3367 = vld [vmem:[%s3 + $0x308] sm:$0xff]
        %v3368 = vld [vmem:[%s3 + $0x310] sm:$0xff]
        %v3369 = vld [vmem:[%s3 + $0x318] sm:$0xff]
        %v3370 = vld [vmem:[%s3 + $0x320] sm:$0xff]
        %v3371 = vld [vmem:[%s3 + $0x328] sm:$0xff]
        %v3372 = vld [vmem:[%s3 + $0x330] sm:$0xff]
        %v3373 = vld [vmem:[%s3 + $0x338] sm:$0xff]
        %v3374 = vld [vmem:[%s3 + $0x340] sm:$0xff]
        %v3375 = vld [vmem:[%s3 + $0x348] sm:$0xff]
        %v3376 = vld [vmem:[%s3 + $0x350] sm:$0xff]
        %v3377 = vld [vmem:[%s3 + $0x358] sm:$0xff]
        %v3378 = vld [vmem:[%s3 + $0x360] sm:$0xff]
        %v3379 = vld [vmem:[%s3 + $0x368] sm:$0xff]
        %v3380 = vld [vmem:[%s3 + $0x370] sm:$0xff]
        %v3381 = vld [vmem:[%s3 + $0x378] sm:$0xff]
        %v3382 = vld [vmem:[%s3 + $0x380] sm:$0xff]
        %v3383 = vld [vmem:[%s3 + $0x388] sm:$0xff]
        %v3384 = vld [vmem:[%s3 + $0x390] sm:$0xff]
        %v3385 = vld [vmem:[%s3 + $0x398] sm:$0xff]
        %v3386 = vld [vmem:[%s3 + $0x3a0] sm:$0xff]
        %v3387 = vld [vmem:[%s3 + $0x3a8] sm:$0xff]
        %v3388 = vld [vmem:[%s3 + $0x3b0] sm:$0xff]
        %v3389 = vld [vmem:[%s3 + $0x3b8] sm:$0xff]
        %v3390 = vld [vmem:[%s3 + $0x3c0] sm:$0xff]
        %v3391 = vld [vmem:[%s3 + $0x3c8] sm:$0xff]
        %v3392 = vld [vmem:[%s3 + $0x3d0] sm:$0xff]
        %v3393 = vld [vmem:[%s3 + $0x3d8] sm:$0xff]
        %v3394 = vld [vmem:[%s3 + $0x3e0] sm:$0xff]
        %v3395 = vld [vmem:[%s3 + $0x3e8] sm:$0xff]
        %v3396 = vld [vmem:[%s3 + $0x3f0] sm:$0xff]
        %v3397 = vld [vmem:[%s3 + $0x3f8] sm:$0xff]
        %v3398 = vunpack.c.l.bf16 %v3270
        %v3399 = vunpack.c.h.bf16 %v3270
        %v3400 = vunpack.c.l.bf16 %v3271
        %v3401 = vunpack.c.h.bf16 %v3271
        %v3402 = vunpack.c.l.bf16 %v3272
        %v3403 = vunpack.c.h.bf16 %v3272
        %v3404 = vunpack.c.l.bf16 %v3273
        %v3405 = vunpack.c.h.bf16 %v3273
        %v3406 = vunpack.c.l.bf16 %v3274
        %v3407 = vunpack.c.h.bf16 %v3274
        %v3408 = vunpack.c.l.bf16 %v3275
        %v3409 = vunpack.c.h.bf16 %v3275
        %v3410 = vunpack.c.l.bf16 %v3276
        %v3411 = vunpack.c.h.bf16 %v3276
        %v3412 = vunpack.c.l.bf16 %v3277
        %v3413 = vunpack.c.h.bf16 %v3277
        %v3414 = vunpack.c.l.bf16 %v3278
        %v3415 = vunpack.c.h.bf16 %v3278
        %v3416 = vunpack.c.l.bf16 %v3279
        %v3417 = vunpack.c.h.bf16 %v3279
        %v3418 = vunpack.c.l.bf16 %v3280
        %v3419 = vunpack.c.h.bf16 %v3280
        %v3420 = vunpack.c.l.bf16 %v3281
        %v3421 = vunpack.c.h.bf16 %v3281
        %v3422 = vunpack.c.l.bf16 %v3282
        %v3423 = vunpack.c.h.bf16 %v3282
        %v3424 = vunpack.c.l.bf16 %v3283
        %v3425 = vunpack.c.h.bf16 %v3283
        %v3426 = vunpack.c.l.bf16 %v3284
        %v3427 = vunpack.c.h.bf16 %v3284
        %v3428 = vunpack.c.l.bf16 %v3285
        %v3429 = vunpack.c.h.bf16 %v3285
        %v3430 = vunpack.c.l.bf16 %v3286
        %v3431 = vunpack.c.h.bf16 %v3286
        %v3432 = vunpack.c.l.bf16 %v3287
        %v3433 = vunpack.c.h.bf16 %v3287
        %v3434 = vunpack.c.l.bf16 %v3288
        %v3435 = vunpack.c.h.bf16 %v3288
        %v3436 = vunpack.c.l.bf16 %v3289
        %v3437 = vunpack.c.h.bf16 %v3289
        %v3438 = vunpack.c.l.bf16 %v3290
        %v3439 = vunpack.c.h.bf16 %v3290
        %v3440 = vunpack.c.l.bf16 %v3291
        %v3441 = vunpack.c.h.bf16 %v3291
        %v3442 = vunpack.c.l.bf16 %v3292
        %v3443 = vunpack.c.h.bf16 %v3292
        %v3444 = vunpack.c.l.bf16 %v3293
        %v3445 = vunpack.c.h.bf16 %v3293
        %v3446 = vunpack.c.l.bf16 %v3294
        %v3447 = vunpack.c.h.bf16 %v3294
        %v3448 = vunpack.c.l.bf16 %v3295
        %v3449 = vunpack.c.h.bf16 %v3295
        %v3450 = vunpack.c.l.bf16 %v3296
        %v3451 = vunpack.c.h.bf16 %v3296
        %v3452 = vunpack.c.l.bf16 %v3297
        %v3453 = vunpack.c.h.bf16 %v3297
        %v3454 = vunpack.c.l.bf16 %v3298
        %v3455 = vunpack.c.h.bf16 %v3298
        %v3456 = vunpack.c.l.bf16 %v3299
        %v3457 = vunpack.c.h.bf16 %v3299
        %v3458 = vunpack.c.l.bf16 %v3300
        %v3459 = vunpack.c.h.bf16 %v3300
        %v3460 = vunpack.c.l.bf16 %v3301
        %v3461 = vunpack.c.h.bf16 %v3301
        %v3462 = vunpack.c.l.bf16 %v3302
        %v3463 = vunpack.c.h.bf16 %v3302
        %v3464 = vunpack.c.l.bf16 %v3303
        %v3465 = vunpack.c.h.bf16 %v3303
        %v3466 = vunpack.c.l.bf16 %v3304
        %v3467 = vunpack.c.h.bf16 %v3304
        %v3468 = vunpack.c.l.bf16 %v3305
        %v3469 = vunpack.c.h.bf16 %v3305
        %v3470 = vunpack.c.l.bf16 %v3306
        %v3471 = vunpack.c.h.bf16 %v3306
        %v3472 = vunpack.c.l.bf16 %v3307
        %v3473 = vunpack.c.h.bf16 %v3307
        %v3474 = vunpack.c.l.bf16 %v3308
        %v3475 = vunpack.c.h.bf16 %v3308
        %v3476 = vunpack.c.l.bf16 %v3309
        %v3477 = vunpack.c.h.bf16 %v3309
        %v3478 = vunpack.c.l.bf16 %v3310
        %v3479 = vunpack.c.h.bf16 %v3310
        %v3480 = vunpack.c.l.bf16 %v3311
        %v3481 = vunpack.c.h.bf16 %v3311
        %v3482 = vunpack.c.l.bf16 %v3312
        %v3483 = vunpack.c.h.bf16 %v3312
        %v3484 = vunpack.c.l.bf16 %v3313
        %v3485 = vunpack.c.h.bf16 %v3313
        %v3486 = vunpack.c.l.bf16 %v3314
        %v3487 = vunpack.c.h.bf16 %v3314
        %v3488 = vunpack.c.l.bf16 %v3315
        %v3489 = vunpack.c.h.bf16 %v3315
        %v3490 = vunpack.c.l.bf16 %v3316
        %v3491 = vunpack.c.h.bf16 %v3316
        %v3492 = vunpack.c.l.bf16 %v3317
        %v3493 = vunpack.c.h.bf16 %v3317
        %v3494 = vunpack.c.l.bf16 %v3318
        %v3495 = vunpack.c.h.bf16 %v3318
        %v3496 = vunpack.c.l.bf16 %v3319
        %v3497 = vunpack.c.h.bf16 %v3319
        %v3498 = vunpack.c.l.bf16 %v3320
        %v3499 = vunpack.c.h.bf16 %v3320
        %v3500 = vunpack.c.l.bf16 %v3321
        %v3501 = vunpack.c.h.bf16 %v3321
        %v3502 = vunpack.c.l.bf16 %v3322
        %v3503 = vunpack.c.h.bf16 %v3322
        %v3504 = vunpack.c.l.bf16 %v3323
        %v3505 = vunpack.c.h.bf16 %v3323
        %v3506 = vunpack.c.l.bf16 %v3324
        %v3507 = vunpack.c.h.bf16 %v3324
        %v3508 = vunpack.c.l.bf16 %v3325
        %v3509 = vunpack.c.h.bf16 %v3325
        %v3510 = vunpack.c.l.bf16 %v3326
        %v3511 = vunpack.c.h.bf16 %v3326
        %v3512 = vunpack.c.l.bf16 %v3327
        %v3513 = vunpack.c.h.bf16 %v3327
        %v3514 = vunpack.c.l.bf16 %v3328
        %v3515 = vunpack.c.h.bf16 %v3328
        %v3516 = vunpack.c.l.bf16 %v3329
        %v3517 = vunpack.c.h.bf16 %v3329
        %v3518 = vunpack.c.l.bf16 %v3330
        %v3519 = vunpack.c.h.bf16 %v3330
        %v3520 = vunpack.c.l.bf16 %v3331
        %v3521 = vunpack.c.h.bf16 %v3331
        %v3522 = vunpack.c.l.bf16 %v3332
        %v3523 = vunpack.c.h.bf16 %v3332
        %v3524 = vunpack.c.l.bf16 %v3333
        %v3525 = vunpack.c.h.bf16 %v3333
        %v3526 = vunpack.c.l.bf16 %v3334
        %v3527 = vunpack.c.h.bf16 %v3334
        %v3528 = vunpack.c.l.bf16 %v3335
        %v3529 = vunpack.c.h.bf16 %v3335
        %v3530 = vunpack.c.l.bf16 %v3336
        %v3531 = vunpack.c.h.bf16 %v3336
        %v3532 = vunpack.c.l.bf16 %v3337
        %v3533 = vunpack.c.h.bf16 %v3337
        %v3534 = vunpack.c.l.bf16 %v3338
        %v3535 = vunpack.c.h.bf16 %v3338
        %v3536 = vunpack.c.l.bf16 %v3339
        %v3537 = vunpack.c.h.bf16 %v3339
        %v3538 = vunpack.c.l.bf16 %v3340
        %v3539 = vunpack.c.h.bf16 %v3340
        %v3540 = vunpack.c.l.bf16 %v3341
        %v3541 = vunpack.c.h.bf16 %v3341
        %v3542 = vunpack.c.l.bf16 %v3342
        %v3543 = vunpack.c.h.bf16 %v3342
        %v3544 = vunpack.c.l.bf16 %v3343
        %v3545 = vunpack.c.h.bf16 %v3343
        %v3546 = vunpack.c.l.bf16 %v3344
        %v3547 = vunpack.c.h.bf16 %v3344
        %v3548 = vunpack.c.l.bf16 %v3345
        %v3549 = vunpack.c.h.bf16 %v3345
        %v3550 = vunpack.c.l.bf16 %v3346
        %v3551 = vunpack.c.h.bf16 %v3346
        %v3552 = vunpack.c.l.bf16 %v3347
        %v3553 = vunpack.c.h.bf16 %v3347
        %v3554 = vunpack.c.l.bf16 %v3348
        %v3555 = vunpack.c.h.bf16 %v3348
        %v3556 = vunpack.c.l.bf16 %v3349
        %v3557 = vunpack.c.h.bf16 %v3349
        %v3558 = vunpack.c.l.bf16 %v3350
        %v3559 = vunpack.c.h.bf16 %v3350
        %v3560 = vunpack.c.l.bf16 %v3351
        %v3561 = vunpack.c.h.bf16 %v3351
        %v3562 = vunpack.c.l.bf16 %v3352
        %v3563 = vunpack.c.h.bf16 %v3352
        %v3564 = vunpack.c.l.bf16 %v3353
        %v3565 = vunpack.c.h.bf16 %v3353
        %v3566 = vunpack.c.l.bf16 %v3354
        %v3567 = vunpack.c.h.bf16 %v3354
        %v3568 = vunpack.c.l.bf16 %v3355
        %v3569 = vunpack.c.h.bf16 %v3355
        %v3570 = vunpack.c.l.bf16 %v3356
        %v3571 = vunpack.c.h.bf16 %v3356
        %v3572 = vunpack.c.l.bf16 %v3357
        %v3573 = vunpack.c.h.bf16 %v3357
        %v3574 = vunpack.c.l.bf16 %v3358
        %v3575 = vunpack.c.h.bf16 %v3358
        %v3576 = vunpack.c.l.bf16 %v3359
        %v3577 = vunpack.c.h.bf16 %v3359
        %v3578 = vunpack.c.l.bf16 %v3360
        %v3579 = vunpack.c.h.bf16 %v3360
        %v3580 = vunpack.c.l.bf16 %v3361
        %v3581 = vunpack.c.h.bf16 %v3361
        %v3582 = vunpack.c.l.bf16 %v3362
        %v3583 = vunpack.c.h.bf16 %v3362
        %v3584 = vunpack.c.l.bf16 %v3363
        %v3585 = vunpack.c.h.bf16 %v3363
        %v3586 = vunpack.c.l.bf16 %v3364
        %v3587 = vunpack.c.h.bf16 %v3364
        %v3588 = vunpack.c.l.bf16 %v3365
        %v3589 = vunpack.c.h.bf16 %v3365
        %v3590 = vunpack.c.l.bf16 %v3366
        %v3591 = vunpack.c.h.bf16 %v3366
        %v3592 = vunpack.c.l.bf16 %v3367
        %v3593 = vunpack.c.h.bf16 %v3367
        %v3594 = vunpack.c.l.bf16 %v3368
        %v3595 = vunpack.c.h.bf16 %v3368
        %v3596 = vunpack.c.l.bf16 %v3369
        %v3597 = vunpack.c.h.bf16 %v3369
        %v3598 = vunpack.c.l.bf16 %v3370
        %v3599 = vunpack.c.h.bf16 %v3370
        %v3600 = vunpack.c.l.bf16 %v3371
        %v3601 = vunpack.c.h.bf16 %v3371
        %v3602 = vunpack.c.l.bf16 %v3372
        %v3603 = vunpack.c.h.bf16 %v3372
        %v3604 = vunpack.c.l.bf16 %v3373
        %v3605 = vunpack.c.h.bf16 %v3373
        %v3606 = vunpack.c.l.bf16 %v3374
        %v3607 = vunpack.c.h.bf16 %v3374
        %v3608 = vunpack.c.l.bf16 %v3375
        %v3609 = vunpack.c.h.bf16 %v3375
        %v3610 = vunpack.c.l.bf16 %v3376
        %v3611 = vunpack.c.h.bf16 %v3376
        %v3612 = vunpack.c.l.bf16 %v3377
        %v3613 = vunpack.c.h.bf16 %v3377
        %v3614 = vunpack.c.l.bf16 %v3378
        %v3615 = vunpack.c.h.bf16 %v3378
        %v3616 = vunpack.c.l.bf16 %v3379
        %v3617 = vunpack.c.h.bf16 %v3379
        %v3618 = vunpack.c.l.bf16 %v3380
        %v3619 = vunpack.c.h.bf16 %v3380
        %v3620 = vunpack.c.l.bf16 %v3381
        %v3621 = vunpack.c.h.bf16 %v3381
        %v3622 = vunpack.c.l.bf16 %v3382
        %v3623 = vunpack.c.h.bf16 %v3382
        %v3624 = vunpack.c.l.bf16 %v3383
        %v3625 = vunpack.c.h.bf16 %v3383
        %v3626 = vunpack.c.l.bf16 %v3384
        %v3627 = vunpack.c.h.bf16 %v3384
        %v3628 = vunpack.c.l.bf16 %v3385
        %v3629 = vunpack.c.h.bf16 %v3385
        %v3630 = vunpack.c.l.bf16 %v3386
        %v3631 = vunpack.c.h.bf16 %v3386
        %v3632 = vunpack.c.l.bf16 %v3387
        %v3633 = vunpack.c.h.bf16 %v3387
        %v3634 = vunpack.c.l.bf16 %v3388
        %v3635 = vunpack.c.h.bf16 %v3388
        %v3636 = vunpack.c.l.bf16 %v3389
        %v3637 = vunpack.c.h.bf16 %v3389
        %v3638 = vunpack.c.l.bf16 %v3390
        %v3639 = vunpack.c.h.bf16 %v3390
        %v3640 = vunpack.c.l.bf16 %v3391
        %v3641 = vunpack.c.h.bf16 %v3391
        %v3642 = vunpack.c.l.bf16 %v3392
        %v3643 = vunpack.c.h.bf16 %v3392
        %v3644 = vunpack.c.l.bf16 %v3393
        %v3645 = vunpack.c.h.bf16 %v3393
        %v3646 = vunpack.c.l.bf16 %v3394
        %v3647 = vunpack.c.h.bf16 %v3394
        %v3648 = vunpack.c.l.bf16 %v3395
        %v3649 = vunpack.c.h.bf16 %v3395
        %v3650 = vunpack.c.l.bf16 %v3396
        %v3651 = vunpack.c.h.bf16 %v3396
        %v3652 = vunpack.c.l.bf16 %v3397
        %v3653 = vunpack.c.h.bf16 %v3397
        %v3654 = vld [vmem:[%s4] sm:$0xff]
        %v3655 = vld [vmem:[%s4 + $0x8] sm:$0xff]
        %v3658 = vlaneseq
        %v3659 = vshrl.u32 %v3658, 7
        %v3660 = vsub.s32 0, %v3659
        %v3661 = vrot.slane %v3654, %v3660
        %v3662 = vlaneseq
        %v3663 = vshrl.u32 %v3662, 7
        %v3664 = vsub.s32 1, %v3663
        %v3665 = vrot.slane %v3654, %v3664
        %v3666 = vlaneseq
        %v3667 = vshrl.u32 %v3666, 7
        %v3668 = vsub.s32 2, %v3667
        %v3669 = vrot.slane %v3654, %v3668
        %v3670 = vlaneseq
        %v3671 = vshrl.u32 %v3670, 7
        %v3672 = vsub.s32 3, %v3671
        %v3673 = vrot.slane %v3654, %v3672
        %v3674 = vlaneseq
        %v3675 = vshrl.u32 %v3674, 7
        %v3676 = vsub.s32 4, %v3675
        %v3677 = vrot.slane %v3654, %v3676
        %v3678 = vlaneseq
        %v3679 = vshrl.u32 %v3678, 7
        %v3680 = vsub.s32 5, %v3679
        %v3681 = vrot.slane %v3654, %v3680
        %v3682 = vlaneseq
        %v3683 = vshrl.u32 %v3682, 7
        %v3684 = vsub.s32 6, %v3683
        %v3685 = vrot.slane %v3654, %v3684
        %v3686 = vlaneseq
        %v3687 = vshrl.u32 %v3686, 7
        %v3688 = vsub.s32 7, %v3687
        %v3689 = vrot.slane %v3654, %v3688
        %v3690 = vlaneseq
        %v3691 = vshrl.u32 %v3690, 7
        %v3692 = vsub.s32 0, %v3691
        %v3693 = vrot.slane %v3655, %v3692
        %v3694 = vlaneseq
        %v3695 = vshrl.u32 %v3694, 7
        %v3696 = vsub.s32 1, %v3695
        %v3697 = vrot.slane %v3655, %v3696
        %v3698 = vlaneseq
        %v3699 = vshrl.u32 %v3698, 7
        %v3700 = vsub.s32 2, %v3699
        %v3701 = vrot.slane %v3655, %v3700
        %v3702 = vlaneseq
        %v3703 = vshrl.u32 %v3702, 7
        %v3704 = vsub.s32 3, %v3703
        %v3705 = vrot.slane %v3655, %v3704
        %v3706 = vlaneseq
        %v3707 = vshrl.u32 %v3706, 7
        %v3708 = vsub.s32 4, %v3707
        %v3709 = vrot.slane %v3655, %v3708
        %v3710 = vlaneseq
        %v3711 = vshrl.u32 %v3710, 7
        %v3712 = vsub.s32 5, %v3711
        %v3713 = vrot.slane %v3655, %v3712
        %v3714 = vlaneseq
        %v3715 = vshrl.u32 %v3714, 7
        %v3716 = vsub.s32 6, %v3715
        %v3717 = vrot.slane %v3655, %v3716
        %v3718 = vlaneseq
        %v3719 = vshrl.u32 %v3718, 7
        %v3720 = vsub.s32 7, %v3719
        %v3721 = vrot.slane %v3655, %v3720
        %vm3746 = vcmask 1041409
        %v3747 = vsel %vm3746, %v3263, %v3262
        %vm3748 = vcmask 1042434
        %v3749 = vsel %vm3748, %v3264, %v3747
        %vm3750 = vcmask 1043459
        %v3751 = vsel %vm3750, %v3265, %v3749
        %vm3752 = vcmask 1044484
        %v3753 = vsel %vm3752, %v3266, %v3751
        %vm3754 = vcmask 1045509
        %v3755 = vsel %vm3754, %v3267, %v3753
        %vm3756 = vcmask 1046534
        %v3757 = vsel %vm3756, %v3268, %v3755
        %vm3758 = vcmask 1047559
        %v3759 = vsel %vm3758, %v3269, %v3757
        %3761 = vmatprep.subr.mxu0 %v3399
        %3762 = vmatpush1.msra.mxu0 %v3398
        %3763 = vmatprep.subr.mxu0 %v3415
        %3764 = vmatpush1.msra.mxu0 %v3414
        %3765 = vmatprep.subr.mxu0 %v3431
        %3766 = vmatpush1.msra.mxu0 %v3430
        %3767 = vmatprep.subr.mxu0 %v3447
        %3768 = vmatpush1.msra.mxu0 %v3446
        %3769 = vmatprep.subr.mxu0 %v3463
        %3770 = vmatpush1.msra.mxu0 %v3462
        %3771 = vmatprep.subr.mxu0 %v3479
        %3772 = vmatpush1.msra.mxu0 %v3478
        %3773 = vmatprep.subr.mxu0 %v3495
        %3774 = vmatpush1.msra.mxu0 %v3494
        %3775 = vmatprep.subr.mxu0 %v3511
        %3776 = vmatpush1.msra.mxu0 %v3510
        %3777 = vmatprep.subr.mxu0 %v3527
        %3778 = vmatpush1.msra.mxu0 %v3526
        %3779 = vmatprep.subr.mxu0 %v3543
        %3780 = vmatpush1.msra.mxu0 %v3542
        %3781 = vmatprep.subr.mxu0 %v3559
        %3782 = vmatpush1.msra.mxu0 %v3558
        %3783 = vmatprep.subr.mxu0 %v3575
        %3784 = vmatpush1.msra.mxu0 %v3574
        %3785 = vmatprep.subr.mxu0 %v3591
        %3786 = vmatpush1.msra.mxu0 %v3590
        %3787 = vmatprep.subr.mxu0 %v3607
        %3788 = vmatpush1.msra.mxu0 %v3606
        %3789 = vmatprep.subr.mxu0 %v3623
        %3790 = vmatpush1.msra.mxu0 %v3622
        %3791 = vmatprep.subr.mxu0 %v3639
        %3792 = vmatpush1.msra.mxu0 %v3638
        %3793 = vmatprep.subr.mxu0 0.0
        %3794 = vmatpush1.msra.mxu0 0.0
        %3795 = vmatprep.subr.mxu0 0.0
        %3796 = vmatpush1.msra.mxu0 0.0
        %3797 = vmatprep.subr.mxu0 0.0
        %3798 = vmatpush1.msra.mxu0 0.0
        %3799 = vmatprep.subr.mxu0 0.0
        %3800 = vmatpush1.msra.mxu0 0.0
        %3801 = vmatprep.subr.mxu0 0.0
        %3802 = vmatpush1.msra.mxu0 0.0
        %3803 = vmatprep.subr.mxu0 0.0
        %3804 = vmatpush1.msra.mxu0 0.0
        %3805 = vmatprep.subr.mxu0 0.0
        %3806 = vmatpush1.msra.mxu0 0.0
        %3807 = vmatprep.subr.mxu0 0.0
        %3808 = vmatpush1.msra.mxu0 0.0
        %3809 = vmatprep.subr.mxu0 0.0
        %3810 = vmatpush1.msra.mxu0 0.0
        %3811 = vmatprep.subr.mxu0 0.0
        %3812 = vmatpush1.msra.mxu0 0.0
        %3813 = vmatprep.subr.mxu0 0.0
        %3814 = vmatpush1.msra.mxu0 0.0
        %3815 = vmatprep.subr.mxu0 0.0
        %3816 = vmatpush1.msra.mxu0 0.0
        %3817 = vmatprep.subr.mxu0 0.0
        %3818 = vmatpush1.msra.mxu0 0.0
        %3819 = vmatprep.subr.mxu0 0.0
        %3820 = vmatpush1.msra.mxu0 0.0
        %3821 = vmatprep.subr.mxu0 0.0
        %3822 = vmatpush1.msra.mxu0 0.0
        %3823 = vmatprep.subr.mxu0 0.0
        %3824 = vmatpush1.msra.mxu0 0.0
        %3825 = vmatprep.mubr.f32.mxu0 0.0
        %3826 = vmatmul.mubr.f32.gmra.mrb[0].mxu0 %v3759
        %v3827 = vpop.f32.mrb[0].mxu0
        %v3828 = vadd.f32 %v3661, %v3827
        %v3829 = vpop.f32.mrb[0].mxu0
        %v3830 = vadd.f32 %v3665, %v3829
        %3831 = vdwg.mxu0
        %3832 = vmatprep.subr.mxu0 %v3401
        %3833 = vmatpush1.msra.mxu0 %v3400
        %3834 = vmatprep.subr.mxu0 %v3417
        %3835 = vmatpush1.msra.mxu0 %v3416
        %3836 = vmatprep.subr.mxu0 %v3433
        %3837 = vmatpush1.msra.mxu0 %v3432
        %3838 = vmatprep.subr.mxu0 %v3449
        %3839 = vmatpush1.msra.mxu0 %v3448
        %3840 = vmatprep.subr.mxu0 %v3465
        %3841 = vmatpush1.msra.mxu0 %v3464
        %3842 = vmatprep.subr.mxu0 %v3481
        %3843 = vmatpush1.msra.mxu0 %v3480
        %3844 = vmatprep.subr.mxu0 %v3497
        %3845 = vmatpush1.msra.mxu0 %v3496
        %3846 = vmatprep.subr.mxu0 %v3513
        %3847 = vmatpush1.msra.mxu0 %v3512
        %3848 = vmatprep.subr.mxu0 %v3529
        %3849 = vmatpush1.msra.mxu0 %v3528
        %3850 = vmatprep.subr.mxu0 %v3545
        %3851 = vmatpush1.msra.mxu0 %v3544
        %3852 = vmatprep.subr.mxu0 %v3561
        %3853 = vmatpush1.msra.mxu0 %v3560
        %3854 = vmatprep.subr.mxu0 %v3577
        %3855 = vmatpush1.msra.mxu0 %v3576
        %3856 = vmatprep.subr.mxu0 %v3593
        %3857 = vmatpush1.msra.mxu0 %v3592
        %3858 = vmatprep.subr.mxu0 %v3609
        %3859 = vmatpush1.msra.mxu0 %v3608
        %3860 = vmatprep.subr.mxu0 %v3625
        %3861 = vmatpush1.msra.mxu0 %v3624
        %3862 = vmatprep.subr.mxu0 %v3641
        %3863 = vmatpush1.msra.mxu0 %v3640
        %3864 = vmatprep.subr.mxu0 0.0
        %3865 = vmatpush1.msra.mxu0 0.0
        %3866 = vmatprep.subr.mxu0 0.0
        %3867 = vmatpush1.msra.mxu0 0.0
        %3868 = vmatprep.subr.mxu0 0.0
        %3869 = vmatpush1.msra.mxu0 0.0
        %3870 = vmatprep.subr.mxu0 0.0
        %3871 = vmatpush1.msra.mxu0 0.0
        %3872 = vmatprep.subr.mxu0 0.0
        %3873 = vmatpush1.msra.mxu0 0.0
        %3874 = vmatprep.subr.mxu0 0.0
        %3875 = vmatpush1.msra.mxu0 0.0
        %3876 = vmatprep.subr.mxu0 0.0
        %3877 = vmatpush1.msra.mxu0 0.0
        %3878 = vmatprep.subr.mxu0 0.0
        %3879 = vmatpush1.msra.mxu0 0.0
        %3880 = vmatprep.subr.mxu0 0.0
        %3881 = vmatpush1.msra.mxu0 0.0
        %3882 = vmatprep.subr.mxu0 0.0
        %3883 = vmatpush1.msra.mxu0 0.0
        %3884 = vmatprep.subr.mxu0 0.0
        %3885 = vmatpush1.msra.mxu0 0.0
        %3886 = vmatprep.subr.mxu0 0.0
        %3887 = vmatpush1.msra.mxu0 0.0
        %3888 = vmatprep.subr.mxu0 0.0
        %3889 = vmatpush1.msra.mxu0 0.0
        %3890 = vmatprep.subr.mxu0 0.0
        %3891 = vmatpush1.msra.mxu0 0.0
        %3892 = vmatprep.subr.mxu0 0.0
        %3893 = vmatpush1.msra.mxu0 0.0
        %3894 = vmatprep.subr.mxu0 0.0
        %3895 = vmatpush1.msra.mxu0 0.0
        %3896 = vmatprep.mubr.f32.mxu0 0.0
        %3897 = vmatmul.mubr.f32.gmra.mrb[0].mxu0 %v3759
        %v3898 = vpop.f32.mrb[0].mxu0
        %v3899 = vadd.f32 %v3669, %v3898
        %v3900 = vpop.f32.mrb[0].mxu0
        %v3901 = vadd.f32 %v3673, %v3900
        %3902 = vdwg.mxu0
        %3903 = vmatprep.subr.mxu0 %v3403
        %3904 = vmatpush1.msra.mxu0 %v3402
        %3905 = vmatprep.subr.mxu0 %v3419
        %3906 = vmatpush1.msra.mxu0 %v3418
        %3907 = vmatprep.subr.mxu0 %v3435
        %3908 = vmatpush1.msra.mxu0 %v3434
        %3909 = vmatprep.subr.mxu0 %v3451
        %3910 = vmatpush1.msra.mxu0 %v3450
        %3911 = vmatprep.subr.mxu0 %v3467
        %3912 = vmatpush1.msra.mxu0 %v3466
        %3913 = vmatprep.subr.mxu0 %v3483
        %3914 = vmatpush1.msra.mxu0 %v3482
        %3915 = vmatprep.subr.mxu0 %v3499
        %3916 = vmatpush1.msra.mxu0 %v3498
        %3917 = vmatprep.subr.mxu0 %v3515
        %3918 = vmatpush1.msra.mxu0 %v3514
        %3919 = vmatprep.subr.mxu0 %v3531
        %3920 = vmatpush1.msra.mxu0 %v3530
        %3921 = vmatprep.subr.mxu0 %v3547
        %3922 = vmatpush1.msra.mxu0 %v3546
        %3923 = vmatprep.subr.mxu0 %v3563
        %3924 = vmatpush1.msra.mxu0 %v3562
        %3925 = vmatprep.subr.mxu0 %v3579
        %3926 = vmatpush1.msra.mxu0 %v3578
        %3927 = vmatprep.subr.mxu0 %v3595
        %3928 = vmatpush1.msra.mxu0 %v3594
        %3929 = vmatprep.subr.mxu0 %v3611
        %3930 = vmatpush1.msra.mxu0 %v3610
        %3931 = vmatprep.subr.mxu0 %v3627
        %3932 = vmatpush1.msra.mxu0 %v3626
        %3933 = vmatprep.subr.mxu0 %v3643
        %3934 = vmatpush1.msra.mxu0 %v3642
        %3935 = vmatprep.subr.mxu0 0.0
        %3936 = vmatpush1.msra.mxu0 0.0
        %3937 = vmatprep.subr.mxu0 0.0
        %3938 = vmatpush1.msra.mxu0 0.0
        %3939 = vmatprep.subr.mxu0 0.0
        %3940 = vmatpush1.msra.mxu0 0.0
        %3941 = vmatprep.subr.mxu0 0.0
        %3942 = vmatpush1.msra.mxu0 0.0
        %3943 = vmatprep.subr.mxu0 0.0
        %3944 = vmatpush1.msra.mxu0 0.0
        %3945 = vmatprep.subr.mxu0 0.0
        %3946 = vmatpush1.msra.mxu0 0.0
        %3947 = vmatprep.subr.mxu0 0.0
        %3948 = vmatpush1.msra.mxu0 0.0
        %3949 = vmatprep.subr.mxu0 0.0
        %3950 = vmatpush1.msra.mxu0 0.0
        %3951 = vmatprep.subr.mxu0 0.0
        %3952 = vmatpush1.msra.mxu0 0.0
        %3953 = vmatprep.subr.mxu0 0.0
        %3954 = vmatpush1.msra.mxu0 0.0
        %3955 = vmatprep.subr.mxu0 0.0
        %3956 = vmatpush1.msra.mxu0 0.0
        %3957 = vmatprep.subr.mxu0 0.0
        %3958 = vmatpush1.msra.mxu0 0.0
        %3959 = vmatprep.subr.mxu0 0.0
        %3960 = vmatpush1.msra.mxu0 0.0
        %3961 = vmatprep.subr.mxu0 0.0
        %3962 = vmatpush1.msra.mxu0 0.0
        %3963 = vmatprep.subr.mxu0 0.0
        %3964 = vmatpush1.msra.mxu0 0.0
        %3965 = vmatprep.subr.mxu0 0.0
        %3966 = vmatpush1.msra.mxu0 0.0
        %3967 = vmatprep.mubr.f32.mxu0 0.0
        %3968 = vmatmul.mubr.f32.gmra.mrb[0].mxu0 %v3759
        %v3969 = vpop.f32.mrb[0].mxu0
        %v3970 = vadd.f32 %v3677, %v3969
        %v3971 = vpop.f32.mrb[0].mxu0
        %v3972 = vadd.f32 %v3681, %v3971
        %3973 = vdwg.mxu0
        %3974 = vmatprep.subr.mxu0 %v3405
        %3975 = vmatpush1.msra.mxu0 %v3404
        %3976 = vmatprep.subr.mxu0 %v3421
        %3977 = vmatpush1.msra.mxu0 %v3420
        %3978 = vmatprep.subr.mxu0 %v3437
        %3979 = vmatpush1.msra.mxu0 %v3436
        %3980 = vmatprep.subr.mxu0 %v3453
        %3981 = vmatpush1.msra.mxu0 %v3452
        %3982 = vmatprep.subr.mxu0 %v3469
        %3983 = vmatpush1.msra.mxu0 %v3468
        %3984 = vmatprep.subr.mxu0 %v3485
        %3985 = vmatpush1.msra.mxu0 %v3484
        %3986 = vmatprep.subr.mxu0 %v3501
        %3987 = vmatpush1.msra.mxu0 %v3500
        %3988 = vmatprep.subr.mxu0 %v3517
        %3989 = vmatpush1.msra.mxu0 %v3516
        %3990 = vmatprep.subr.mxu0 %v3533
        %3991 = vmatpush1.msra.mxu0 %v3532
        %3992 = vmatprep.subr.mxu0 %v3549
        %3993 = vmatpush1.msra.mxu0 %v3548
        %3994 = vmatprep.subr.mxu0 %v3565
        %3995 = vmatpush1.msra.mxu0 %v3564
        %3996 = vmatprep.subr.mxu0 %v3581
        %3997 = vmatpush1.msra.mxu0 %v3580
        %3998 = vmatprep.subr.mxu0 %v3597
        %3999 = vmatpush1.msra.mxu0 %v3596
        %4000 = vmatprep.subr.mxu0 %v3613
        %4001 = vmatpush1.msra.mxu0 %v3612
        %4002 = vmatprep.subr.mxu0 %v3629
        %4003 = vmatpush1.msra.mxu0 %v3628
        %4004 = vmatprep.subr.mxu0 %v3645
        %4005 = vmatpush1.msra.mxu0 %v3644
        %4006 = vmatprep.subr.mxu0 0.0
        %4007 = vmatpush1.msra.mxu0 0.0
        %4008 = vmatprep.subr.mxu0 0.0
        %4009 = vmatpush1.msra.mxu0 0.0
        %4010 = vmatprep.subr.mxu0 0.0
        %4011 = vmatpush1.msra.mxu0 0.0
        %4012 = vmatprep.subr.mxu0 0.0
        %4013 = vmatpush1.msra.mxu0 0.0
        %4014 = vmatprep.subr.mxu0 0.0
        %4015 = vmatpush1.msra.mxu0 0.0
        %4016 = vmatprep.subr.mxu0 0.0
        %4017 = vmatpush1.msra.mxu0 0.0
        %4018 = vmatprep.subr.mxu0 0.0
        %4019 = vmatpush1.msra.mxu0 0.0
        %4020 = vmatprep.subr.mxu0 0.0
        %4021 = vmatpush1.msra.mxu0 0.0
        %4022 = vmatprep.subr.mxu0 0.0
        %4023 = vmatpush1.msra.mxu0 0.0
        %4024 = vmatprep.subr.mxu0 0.0
        %4025 = vmatpush1.msra.mxu0 0.0
        %4026 = vmatprep.subr.mxu0 0.0
        %4027 = vmatpush1.msra.mxu0 0.0
        %4028 = vmatprep.subr.mxu0 0.0
        %4029 = vmatpush1.msra.mxu0 0.0
        %4030 = vmatprep.subr.mxu0 0.0
        %4031 = vmatpush1.msra.mxu0 0.0
        %4032 = vmatprep.subr.mxu0 0.0
        %4033 = vmatpush1.msra.mxu0 0.0
        %4034 = vmatprep.subr.mxu0 0.0
        %4035 = vmatpush1.msra.mxu0 0.0
        %4036 = vmatprep.subr.mxu0 0.0
        %4037 = vmatpush1.msra.mxu0 0.0
        %4038 = vmatprep.mubr.f32.mxu0 0.0
        %4039 = vmatmul.mubr.f32.gmra.mrb[0].mxu0 %v3759
        %v4040 = vpop.f32.mrb[0].mxu0
        %v4041 = vadd.f32 %v3685, %v4040
        %v4042 = vpop.f32.mrb[0].mxu0
        %v4043 = vadd.f32 %v3689, %v4042
        %4044 = vdwg.mxu0
        %4045 = vmatprep.subr.mxu0 %v3407
        %4046 = vmatpush1.msra.mxu0 %v3406
        %4047 = vmatprep.subr.mxu0 %v3423
        %4048 = vmatpush1.msra.mxu0 %v3422
        %4049 = vmatprep.subr.mxu0 %v3439
        %4050 = vmatpush1.msra.mxu0 %v3438
        %4051 = vmatprep.subr.mxu0 %v3455
        %4052 = vmatpush1.msra.mxu0 %v3454
        %4053 = vmatprep.subr.mxu0 %v3471
        %4054 = vmatpush1.msra.mxu0 %v3470
        %4055 = vmatprep.subr.mxu0 %v3487
        %4056 = vmatpush1.msra.mxu0 %v3486
        %4057 = vmatprep.subr.mxu0 %v3503
        %4058 = vmatpush1.msra.mxu0 %v3502
        %4059 = vmatprep.subr.mxu0 %v3519
        %4060 = vmatpush1.msra.mxu0 %v3518
        %4061 = vmatprep.subr.mxu0 %v3535
        %4062 = vmatpush1.msra.mxu0 %v3534
        %4063 = vmatprep.subr.mxu0 %v3551
        %4064 = vmatpush1.msra.mxu0 %v3550
        %4065 = vmatprep.subr.mxu0 %v3567
        %4066 = vmatpush1.msra.mxu0 %v3566
        %4067 = vmatprep.subr.mxu0 %v3583
        %4068 = vmatpush1.msra.mxu0 %v3582
        %4069 = vmatprep.subr.mxu0 %v3599
        %4070 = vmatpush1.msra.mxu0 %v3598
        %4071 = vmatprep.subr.mxu0 %v3615
        %4072 = vmatpush1.msra.mxu0 %v3614
        %4073 = vmatprep.subr.mxu0 %v3631
        %4074 = vmatpush1.msra.mxu0 %v3630
        %4075 = vmatprep.subr.mxu0 %v3647
        %4076 = vmatpush1.msra.mxu0 %v3646
        %4077 = vmatprep.subr.mxu0 0.0
        %4078 = vmatpush1.msra.mxu0 0.0
        %4079 = vmatprep.subr.mxu0 0.0
        %4080 = vmatpush1.msra.mxu0 0.0
        %4081 = vmatprep.subr.mxu0 0.0
        %4082 = vmatpush1.msra.mxu0 0.0
        %4083 = vmatprep.subr.mxu0 0.0
        %4084 = vmatpush1.msra.mxu0 0.0
        %4085 = vmatprep.subr.mxu0 0.0
        %4086 = vmatpush1.msra.mxu0 0.0
        %4087 = vmatprep.subr.mxu0 0.0
        %4088 = vmatpush1.msra.mxu0 0.0
        %4089 = vmatprep.subr.mxu0 0.0
        %4090 = vmatpush1.msra.mxu0 0.0
        %4091 = vmatprep.subr.mxu0 0.0
        %4092 = vmatpush1.msra.mxu0 0.0
        %4093 = vmatprep.subr.mxu0 0.0
        %4094 = vmatpush1.msra.mxu0 0.0
        %4095 = vmatprep.subr.mxu0 0.0
        %4096 = vmatpush1.msra.mxu0 0.0
        %4097 = vmatprep.subr.mxu0 0.0
        %4098 = vmatpush1.msra.mxu0 0.0
        %4099 = vmatprep.subr.mxu0 0.0
        %4100 = vmatpush1.msra.mxu0 0.0
        %4101 = vmatprep.subr.mxu0 0.0
        %4102 = vmatpush1.msra.mxu0 0.0
        %4103 = vmatprep.subr.mxu0 0.0
        %4104 = vmatpush1.msra.mxu0 0.0
        %4105 = vmatprep.subr.mxu0 0.0
        %4106 = vmatpush1.msra.mxu0 0.0
        %4107 = vmatprep.subr.mxu0 0.0
        %4108 = vmatpush1.msra.mxu0 0.0
        %4109 = vmatprep.mubr.f32.mxu0 0.0
        %4110 = vmatmul.mubr.f32.gmra.mrb[0].mxu0 %v3759
        %v4111 = vpop.f32.mrb[0].mxu0
        %v4112 = vadd.f32 %v3693, %v4111
        %v4113 = vpop.f32.mrb[0].mxu0
        %v4114 = vadd.f32 %v3697, %v4113
        %4115 = vdwg.mxu0
        %4116 = vmatprep.subr.mxu0 %v3409
        %4117 = vmatpush1.msra.mxu0 %v3408
        %4118 = vmatprep.subr.mxu0 %v3425
        %4119 = vmatpush1.msra.mxu0 %v3424
        %4120 = vmatprep.subr.mxu0 %v3441
        %4121 = vmatpush1.msra.mxu0 %v3440
        %4122 = vmatprep.subr.mxu0 %v3457
        %4123 = vmatpush1.msra.mxu0 %v3456
        %4124 = vmatprep.subr.mxu0 %v3473
        %4125 = vmatpush1.msra.mxu0 %v3472
        %4126 = vmatprep.subr.mxu0 %v3489
        %4127 = vmatpush1.msra.mxu0 %v3488
        %4128 = vmatprep.subr.mxu0 %v3505
        %4129 = vmatpush1.msra.mxu0 %v3504
        %4130 = vmatprep.subr.mxu0 %v3521
        %4131 = vmatpush1.msra.mxu0 %v3520
        %4132 = vmatprep.subr.mxu0 %v3537
        %4133 = vmatpush1.msra.mxu0 %v3536
        %4134 = vmatprep.subr.mxu0 %v3553
        %4135 = vmatpush1.msra.mxu0 %v3552
        %4136 = vmatprep.subr.mxu0 %v3569
        %4137 = vmatpush1.msra.mxu0 %v3568
        %4138 = vmatprep.subr.mxu0 %v3585
        %4139 = vmatpush1.msra.mxu0 %v3584
        %4140 = vmatprep.subr.mxu0 %v3601
        %4141 = vmatpush1.msra.mxu0 %v3600
        %4142 = vmatprep.subr.mxu0 %v3617
        %4143 = vmatpush1.msra.mxu0 %v3616
        %4144 = vmatprep.subr.mxu0 %v3633
        %4145 = vmatpush1.msra.mxu0 %v3632
        %4146 = vmatprep.subr.mxu0 %v3649
        %4147 = vmatpush1.msra.mxu0 %v3648
        %4148 = vmatprep.subr.mxu0 0.0
        %4149 = vmatpush1.msra.mxu0 0.0
        %4150 = vmatprep.subr.mxu0 0.0
        %4151 = vmatpush1.msra.mxu0 0.0
        %4152 = vmatprep.subr.mxu0 0.0
        %4153 = vmatpush1.msra.mxu0 0.0
        %4154 = vmatprep.subr.mxu0 0.0
        %4155 = vmatpush1.msra.mxu0 0.0
        %4156 = vmatprep.subr.mxu0 0.0
        %4157 = vmatpush1.msra.mxu0 0.0
        %4158 = vmatprep.subr.mxu0 0.0
        %4159 = vmatpush1.msra.mxu0 0.0
        %4160 = vmatprep.subr.mxu0 0.0
        %4161 = vmatpush1.msra.mxu0 0.0
        %4162 = vmatprep.subr.mxu0 0.0
        %4163 = vmatpush1.msra.mxu0 0.0
        %4164 = vmatprep.subr.mxu0 0.0
        %4165 = vmatpush1.msra.mxu0 0.0
        %4166 = vmatprep.subr.mxu0 0.0
        %4167 = vmatpush1.msra.mxu0 0.0
        %4168 = vmatprep.subr.mxu0 0.0
        %4169 = vmatpush1.msra.mxu0 0.0
        %4170 = vmatprep.subr.mxu0 0.0
        %4171 = vmatpush1.msra.mxu0 0.0
        %4172 = vmatprep.subr.mxu0 0.0
        %4173 = vmatpush1.msra.mxu0 0.0
        %4174 = vmatprep.subr.mxu0 0.0
        %4175 = vmatpush1.msra.mxu0 0.0
        %4176 = vmatprep.subr.mxu0 0.0
        %4177 = vmatpush1.msra.mxu0 0.0
        %4178 = vmatprep.subr.mxu0 0.0
        %4179 = vmatpush1.msra.mxu0 0.0
        %4180 = vmatprep.mubr.f32.mxu0 0.0
        %4181 = vmatmul.mubr.f32.gmra.mrb[0].mxu0 %v3759
        %v4182 = vpop.f32.mrb[0].mxu0
        %v4183 = vadd.f32 %v3701, %v4182
        %v4184 = vpop.f32.mrb[0].mxu0
        %v4185 = vadd.f32 %v3705, %v4184
        %4186 = vdwg.mxu0
        %4187 = vmatprep.subr.mxu0 %v3411
        %4188 = vmatpush1.msra.mxu0 %v3410
        %4189 = vmatprep.subr.mxu0 %v3427
        %4190 = vmatpush1.msra.mxu0 %v3426
        %4191 = vmatprep.subr.mxu0 %v3443
        %4192 = vmatpush1.msra.mxu0 %v3442
        %4193 = vmatprep.subr.mxu0 %v3459
        %4194 = vmatpush1.msra.mxu0 %v3458
        %4195 = vmatprep.subr.mxu0 %v3475
        %4196 = vmatpush1.msra.mxu0 %v3474
        %4197 = vmatprep.subr.mxu0 %v3491
        %4198 = vmatpush1.msra.mxu0 %v3490
        %4199 = vmatprep.subr.mxu0 %v3507
        %4200 = vmatpush1.msra.mxu0 %v3506
        %4201 = vmatprep.subr.mxu0 %v3523
        %4202 = vmatpush1.msra.mxu0 %v3522
        %4203 = vmatprep.subr.mxu0 %v3539
        %4204 = vmatpush1.msra.mxu0 %v3538
        %4205 = vmatprep.subr.mxu0 %v3555
        %4206 = vmatpush1.msra.mxu0 %v3554
        %4207 = vmatprep.subr.mxu0 %v3571
        %4208 = vmatpush1.msra.mxu0 %v3570
        %4209 = vmatprep.subr.mxu0 %v3587
        %4210 = vmatpush1.msra.mxu0 %v3586
        %4211 = vmatprep.subr.mxu0 %v3603
        %4212 = vmatpush1.msra.mxu0 %v3602
        %4213 = vmatprep.subr.mxu0 %v3619
        %4214 = vmatpush1.msra.mxu0 %v3618
        %4215 = vmatprep.subr.mxu0 %v3635
        %4216 = vmatpush1.msra.mxu0 %v3634
        %4217 = vmatprep.subr.mxu0 %v3651
        %4218 = vmatpush1.msra.mxu0 %v3650
        %4219 = vmatprep.subr.mxu0 0.0
        %4220 = vmatpush1.msra.mxu0 0.0
        %4221 = vmatprep.subr.mxu0 0.0
        %4222 = vmatpush1.msra.mxu0 0.0
        %4223 = vmatprep.subr.mxu0 0.0
        %4224 = vmatpush1.msra.mxu0 0.0
        %4225 = vmatprep.subr.mxu0 0.0
        %4226 = vmatpush1.msra.mxu0 0.0
        %4227 = vmatprep.subr.mxu0 0.0
        %4228 = vmatpush1.msra.mxu0 0.0
        %4229 = vmatprep.subr.mxu0 0.0
        %4230 = vmatpush1.msra.mxu0 0.0
        %4231 = vmatprep.subr.mxu0 0.0
        %4232 = vmatpush1.msra.mxu0 0.0
        %4233 = vmatprep.subr.mxu0 0.0
        %4234 = vmatpush1.msra.mxu0 0.0
        %4235 = vmatprep.subr.mxu0 0.0
        %4236 = vmatpush1.msra.mxu0 0.0
        %4237 = vmatprep.subr.mxu0 0.0
        %4238 = vmatpush1.msra.mxu0 0.0
        %4239 = vmatprep.subr.mxu0 0.0
        %4240 = vmatpush1.msra.mxu0 0.0
        %4241 = vmatprep.subr.mxu0 0.0
        %4242 = vmatpush1.msra.mxu0 0.0
        %4243 = vmatprep.subr.mxu0 0.0
        %4244 = vmatpush1.msra.mxu0 0.0
        %4245 = vmatprep.subr.mxu0 0.0
        %4246 = vmatpush1.msra.mxu0 0.0
        %4247 = vmatprep.subr.mxu0 0.0
        %4248 = vmatpush1.msra.mxu0 0.0
        %4249 = vmatprep.subr.mxu0 0.0
        %4250 = vmatpush1.msra.mxu0 0.0
        %4251 = vmatprep.mubr.f32.mxu0 0.0
        %4252 = vmatmul.mubr.f32.gmra.mrb[0].mxu0 %v3759
        %v4253 = vpop.f32.mrb[0].mxu0
        %v4254 = vadd.f32 %v3709, %v4253
        %v4255 = vpop.f32.mrb[0].mxu0
        %v4256 = vadd.f32 %v3713, %v4255
        %4257 = vdwg.mxu0
        %4258 = vmatprep.subr.mxu0 %v3413
        %4259 = vmatpush1.msra.mxu0 %v3412
        %4260 = vmatprep.subr.mxu0 %v3429
        %4261 = vmatpush1.msra.mxu0 %v3428
        %4262 = vmatprep.subr.mxu0 %v3445
        %4263 = vmatpush1.msra.mxu0 %v3444
        %4264 = vmatprep.subr.mxu0 %v3461
        %4265 = vmatpush1.msra.mxu0 %v3460
        %4266 = vmatprep.subr.mxu0 %v3477
        %4267 = vmatpush1.msra.mxu0 %v3476
        %4268 = vmatprep.subr.mxu0 %v3493
        %4269 = vmatpush1.msra.mxu0 %v3492
        %4270 = vmatprep.subr.mxu0 %v3509
        %4271 = vmatpush1.msra.mxu0 %v3508
        %4272 = vmatprep.subr.mxu0 %v3525
        %4273 = vmatpush1.msra.mxu0 %v3524
        %4274 = vmatprep.subr.mxu0 %v3541
        %4275 = vmatpush1.msra.mxu0 %v3540
        %4276 = vmatprep.subr.mxu0 %v3557
        %4277 = vmatpush1.msra.mxu0 %v3556
        %4278 = vmatprep.subr.mxu0 %v3573
        %4279 = vmatpush1.msra.mxu0 %v3572
        %4280 = vmatprep.subr.mxu0 %v3589
        %4281 = vmatpush1.msra.mxu0 %v3588
        %4282 = vmatprep.subr.mxu0 %v3605
        %4283 = vmatpush1.msra.mxu0 %v3604
        %4284 = vmatprep.subr.mxu0 %v3621
        %4285 = vmatpush1.msra.mxu0 %v3620
        %4286 = vmatprep.subr.mxu0 %v3637
        %4287 = vmatpush1.msra.mxu0 %v3636
        %4288 = vmatprep.subr.mxu0 %v3653
        %4289 = vmatpush1.msra.mxu0 %v3652
        %4290 = vmatprep.subr.mxu0 0.0
        %4291 = vmatpush1.msra.mxu0 0.0
        %4292 = vmatprep.subr.mxu0 0.0
        %4293 = vmatpush1.msra.mxu0 0.0
        %4294 = vmatprep.subr.mxu0 0.0
        %4295 = vmatpush1.msra.mxu0 0.0
        %4296 = vmatprep.subr.mxu0 0.0
        %4297 = vmatpush1.msra.mxu0 0.0
        %4298 = vmatprep.subr.mxu0 0.0
        %4299 = vmatpush1.msra.mxu0 0.0
        %4300 = vmatprep.subr.mxu0 0.0
        %4301 = vmatpush1.msra.mxu0 0.0
        %4302 = vmatprep.subr.mxu0 0.0
        %4303 = vmatpush1.msra.mxu0 0.0
        %4304 = vmatprep.subr.mxu0 0.0
        %4305 = vmatpush1.msra.mxu0 0.0
        %4306 = vmatprep.subr.mxu0 0.0
        %4307 = vmatpush1.msra.mxu0 0.0
        %4308 = vmatprep.subr.mxu0 0.0
        %4309 = vmatpush1.msra.mxu0 0.0
        %4310 = vmatprep.subr.mxu0 0.0
        %4311 = vmatpush1.msra.mxu0 0.0
        %4312 = vmatprep.subr.mxu0 0.0
        %4313 = vmatpush1.msra.mxu0 0.0
        %4314 = vmatprep.subr.mxu0 0.0
        %4315 = vmatpush1.msra.mxu0 0.0
        %4316 = vmatprep.subr.mxu0 0.0
        %4317 = vmatpush1.msra.mxu0 0.0
        %4318 = vmatprep.subr.mxu0 0.0
        %4319 = vmatpush1.msra.mxu0 0.0
        %4320 = vmatprep.subr.mxu0 0.0
        %4321 = vmatpush1.msra.mxu0 0.0
        %4322 = vmatprep.mubr.f32.mxu0 0.0
        %4323 = vmatmul.mubr.f32.gmra.mrb[0].mxu0 %v3759
        %v4324 = vpop.f32.mrb[0].mxu0
        %v4325 = vadd.f32 %v3717, %v4324
        %v4326 = vpop.f32.mrb[0].mxu0
        %v4327 = vadd.f32 %v3721, %v4326
        %4328 = vdwg.mxu0
        %v4329 = vtanh.pop %v3828
        %v4330 = vtanh.pop %v3830
        %v4331 = vtanh.pop %v3899
        %v4332 = vtanh.pop %v3901
        %v4333 = vtanh.pop %v3970
        %v4334 = vtanh.pop %v3972
        %v4335 = vtanh.pop %v4041
        %v4336 = vtanh.pop %v4043
        %v4337 = vtanh.pop %v4112
        %v4338 = vtanh.pop %v4114
        %v4339 = vtanh.pop %v4183
        %v4340 = vtanh.pop %v4185
        %v4341 = vtanh.pop %v4254
        %v4342 = vtanh.pop %v4256
        %v4343 = vtanh.pop %v4325
        %v4344 = vtanh.pop %v4327
        %v4345 = vld [vmem:[%s5] sm:$0xff]
        %v4346 = vld [vmem:[%s5 + $0x8] sm:$0xff]
        %v4349 = vlaneseq
        %v4350 = vshrl.u32 %v4349, 7
        %v4351 = vsub.s32 0, %v4350
        %v4352 = vrot.slane %v4345, %v4351
        %v4353 = vlaneseq
        %v4354 = vshrl.u32 %v4353, 7
        %v4355 = vsub.s32 1, %v4354
        %v4356 = vrot.slane %v4345, %v4355
        %v4357 = vlaneseq
        %v4358 = vshrl.u32 %v4357, 7
        %v4359 = vsub.s32 2, %v4358
        %v4360 = vrot.slane %v4345, %v4359
        %v4361 = vlaneseq
        %v4362 = vshrl.u32 %v4361, 7
        %v4363 = vsub.s32 3, %v4362
        %v4364 = vrot.slane %v4345, %v4363
        %v4365 = vlaneseq
        %v4366 = vshrl.u32 %v4365, 7
        %v4367 = vsub.s32 4, %v4366
        %v4368 = vrot.slane %v4345, %v4367
        %v4369 = vlaneseq
        %v4370 = vshrl.u32 %v4369, 7
        %v4371 = vsub.s32 5, %v4370
        %v4372 = vrot.slane %v4345, %v4371
        %v4373 = vlaneseq
        %v4374 = vshrl.u32 %v4373, 7
        %v4375 = vsub.s32 6, %v4374
        %v4376 = vrot.slane %v4345, %v4375
        %v4377 = vlaneseq
        %v4378 = vshrl.u32 %v4377, 7
        %v4379 = vsub.s32 7, %v4378
        %v4380 = vrot.slane %v4345, %v4379
        %v4381 = vlaneseq
        %v4382 = vshrl.u32 %v4381, 7
        %v4383 = vsub.s32 0, %v4382
        %v4384 = vrot.slane %v4346, %v4383
        %v4385 = vlaneseq
        %v4386 = vshrl.u32 %v4385, 7
        %v4387 = vsub.s32 1, %v4386
        %v4388 = vrot.slane %v4346, %v4387
        %v4389 = vlaneseq
        %v4390 = vshrl.u32 %v4389, 7
        %v4391 = vsub.s32 2, %v4390
        %v4392 = vrot.slane %v4346, %v4391
        %v4393 = vlaneseq
        %v4394 = vshrl.u32 %v4393, 7
        %v4395 = vsub.s32 3, %v4394
        %v4396 = vrot.slane %v4346, %v4395
        %v4397 = vlaneseq
        %v4398 = vshrl.u32 %v4397, 7
        %v4399 = vsub.s32 4, %v4398
        %v4400 = vrot.slane %v4346, %v4399
        %v4401 = vlaneseq
        %v4402 = vshrl.u32 %v4401, 7
        %v4403 = vsub.s32 5, %v4402
        %v4404 = vrot.slane %v4346, %v4403
        %v4405 = vlaneseq
        %v4406 = vshrl.u32 %v4405, 7
        %v4407 = vsub.s32 6, %v4406
        %v4408 = vrot.slane %v4346, %v4407
        %v4409 = vlaneseq
        %v4410 = vshrl.u32 %v4409, 7
        %v4411 = vsub.s32 7, %v4410
        %v4412 = vrot.slane %v4346, %v4411
        %v4429 = vmul.f32 %v4329, %v4352
        %v4430 = vmul.f32 %v4330, %v4356
        %v4431 = vmul.f32 %v4331, %v4360
        %v4432 = vmul.f32 %v4332, %v4364
        %v4433 = vmul.f32 %v4333, %v4368
        %v4434 = vmul.f32 %v4334, %v4372
        %v4435 = vmul.f32 %v4335, %v4376
        %v4436 = vmul.f32 %v4336, %v4380
        %v4437 = vmul.f32 %v4337, %v4384
        %v4438 = vmul.f32 %v4338, %v4388
        %v4439 = vmul.f32 %v4339, %v4392
        %v4440 = vmul.f32 %v4340, %v4396
        %v4441 = vmul.f32 %v4341, %v4400
        %v4442 = vmul.f32 %v4342, %v4404
        %v4443 = vmul.f32 %v4343, %v4408
        %v4444 = vmul.f32 %v4344, %v4412
        %v4445 = vadd.f32 %v4429, %v4430
        %v4446 = vadd.f32 %v4445, %v4431
        %v4447 = vadd.f32 %v4446, %v4432
        %v4448 = vadd.f32 %v4447, %v4433
        %v4449 = vadd.f32 %v4448, %v4434
        %v4450 = vadd.f32 %v4449, %v4435
        %v4451 = vadd.f32 %v4450, %v4436
        %v4452 = vadd.f32 %v4451, %v4437
        %v4453 = vadd.f32 %v4452, %v4438
        %v4454 = vadd.f32 %v4453, %v4439
        %v4455 = vadd.f32 %v4454, %v4440
        %v4456 = vadd.f32 %v4455, %v4441
        %v4457 = vadd.f32 %v4456, %v4442
        %v4458 = vadd.f32 %v4457, %v4443
        %v4459 = vadd.f32 %v4458, %v4444
        %4460 = vadd.xlane.f32.xlu0 %v4459
        %v4461 = vpop.xlane.xlu0 %4460
        %s4462 = sld [smem:[#allocation2]]
        %v4463 = vstv %s4462
        %v4464 = vadd.f32 %v4461, %v4463
        %v4465 = vrot.slane %v4464, 4
        %v4466 = vmax.f32 %v4464, %v4465
        %v4467 = vrot.slane %v4466, 2
        %v4468 = vmax.f32 %v4466, %v4467
        %v4469 = vrot.slane %v4468, 1
        %v4470 = vmax.f32 %v4468, %v4469
        %v4471 = vsub.f32 %v4464, %v4470
        %v4472 = vmul.f32 %v4471, 1.442695
        %v4473 = vpow.pop %v4472
        %v4474 = vrot.slane %v4473, 4
        %v4475 = vadd.f32 %v4473, %v4474
        %v4476 = vrot.slane %v4475, 2
        %v4477 = vadd.f32 %v4475, %v4476
        %v4478 = vrot.slane %v4477, 1
        %v4479 = vadd.f32 %v4477, %v4478
        %v4480 = vrcp.pop %v4479
        %v4481 = vmul.f32 %v4473, %v4480
        %v4483 = vrot.slane %v4481, 1
        %v4484 = vrot.slane %v4481, 2
        %v4485 = vrot.slane %v4481, 3
        %v4486 = vrot.slane %v4481, 4
        %v4487 = vrot.slane %v4481, 5
        %v4488 = vrot.slane %v4481, 6
        %v4489 = vrot.slane %v4481, 7
        %v4498 = vmul.f32 %v3262, %v4481
        %v4499 = vmul.f32 %v3263, %v4483
        %v4500 = vmul.f32 %v3264, %v4484
        %v4501 = vmul.f32 %v3265, %v4485
        %v4502 = vmul.f32 %v3266, %v4486
        %v4503 = vmul.f32 %v3267, %v4487
        %v4504 = vmul.f32 %v3268, %v4488
        %v4505 = vmul.f32 %v3269, %v4489
        %v4514 = vrot.slane %v4499, 7
        %v4515 = vsel %vm3746, %v4514, %v4498
        %v4516 = vrot.slane %v4500, 6
        %v4517 = vsel %vm3748, %v4516, %v4515
        %v4518 = vrot.slane %v4501, 5
        %v4519 = vsel %vm3750, %v4518, %v4517
        %v4520 = vrot.slane %v4502, 4
        %v4521 = vsel %vm3752, %v4520, %v4519
        %v4522 = vrot.slane %v4503, 3
        %v4523 = vsel %vm3754, %v4522, %v4521
        %v4524 = vrot.slane %v4504, 2
        %v4525 = vsel %vm3756, %v4524, %v4523
        %v4526 = vrot.slane %v4505, 1
        %v4527 = vsel %vm3758, %v4526, %v4525
        %v4529 = vrot.slane %v4527, 4
        %v4530 = vadd.f32 %v4527, %v4529
        %v4531 = vrot.slane %v4530, 2
        %v4532 = vadd.f32 %v4530, %v4531
        %v4533 = vrot.slane %v4532, 1
        %v4534 = vadd.f32 %v4532, %v4533
        %v4535 = vld [vmem:[%s7] sm:$0xff]
        %v4536 = vld [vmem:[%s7 + $0x8] sm:$0xff]
        %v4537 = vld [vmem:[%s7 + $0x10] sm:$0xff]
        %v4538 = vld [vmem:[%s7 + $0x18] sm:$0xff]
        %v4539 = vld [vmem:[%s7 + $0x20] sm:$0xff]
        %v4540 = vld [vmem:[%s7 + $0x28] sm:$0xff]
        %v4541 = vld [vmem:[%s7 + $0x30] sm:$0xff]
        %v4542 = vld [vmem:[%s7 + $0x38] sm:$0xff]
        %v4543 = vld [vmem:[%s7 + $0x40] sm:$0xff]
        %v4544 = vld [vmem:[%s7 + $0x48] sm:$0xff]
        %v4545 = vld [vmem:[%s7 + $0x50] sm:$0xff]
        %v4546 = vld [vmem:[%s7 + $0x58] sm:$0xff]
        %v4547 = vld [vmem:[%s7 + $0x60] sm:$0xff]
        %v4548 = vld [vmem:[%s7 + $0x68] sm:$0xff]
        %v4549 = vld [vmem:[%s7 + $0x70] sm:$0xff]
        %v4550 = vld [vmem:[%s7 + $0x78] sm:$0xff]
        %v4551 = vld [vmem:[%s8] sm:$0x1]
        %4552 = vmatprep.subr.mxu0 0.0
        %4553 = vmatpush1.msra.mxu0 %v4535
        %4554 = vmatprep.subr.mxu0 0.0
        %4555 = vmatpush1.msra.mxu0 %v4536
        %4556 = vmatprep.subr.mxu0 0.0
        %4557 = vmatpush1.msra.mxu0 %v4537
        %4558 = vmatprep.subr.mxu0 0.0
        %4559 = vmatpush1.msra.mxu0 %v4538
        %4560 = vmatprep.subr.mxu0 0.0
        %4561 = vmatpush1.msra.mxu0 %v4539
        %4562 = vmatprep.subr.mxu0 0.0
        %4563 = vmatpush1.msra.mxu0 %v4540
        %4564 = vmatprep.subr.mxu0 0.0
        %4565 = vmatpush1.msra.mxu0 %v4541
        %4566 = vmatprep.subr.mxu0 0.0
        %4567 = vmatpush1.msra.mxu0 %v4542
        %4568 = vmatprep.subr.mxu0 0.0
        %4569 = vmatpush1.msra.mxu0 %v4543
        %4570 = vmatprep.subr.mxu0 0.0
        %4571 = vmatpush1.msra.mxu0 %v4544
        %4572 = vmatprep.subr.mxu0 0.0
        %4573 = vmatpush1.msra.mxu0 %v4545
        %4574 = vmatprep.subr.mxu0 0.0
        %4575 = vmatpush1.msra.mxu0 %v4546
        %4576 = vmatprep.subr.mxu0 0.0
        %4577 = vmatpush1.msra.mxu0 %v4547
        %4578 = vmatprep.subr.mxu0 0.0
        %4579 = vmatpush1.msra.mxu0 %v4548
        %4580 = vmatprep.subr.mxu0 0.0
        %4581 = vmatpush1.msra.mxu0 %v4549
        %4582 = vmatprep.subr.mxu0 0.0
        %4583 = vmatpush1.msra.mxu0 %v4550
        %4584 = vmatprep.subr.mxu0 0.0
        %4585 = vmatpush1.msra.mxu0 0.0
        %4586 = vmatprep.subr.mxu0 0.0
        %4587 = vmatpush1.msra.mxu0 0.0
        %4588 = vmatprep.subr.mxu0 0.0
        %4589 = vmatpush1.msra.mxu0 0.0
        %4590 = vmatprep.subr.mxu0 0.0
        %4591 = vmatpush1.msra.mxu0 0.0
        %4592 = vmatprep.subr.mxu0 0.0
        %4593 = vmatpush1.msra.mxu0 0.0
        %4594 = vmatprep.subr.mxu0 0.0
        %4595 = vmatpush1.msra.mxu0 0.0
        %4596 = vmatprep.subr.mxu0 0.0
        %4597 = vmatpush1.msra.mxu0 0.0
        %4598 = vmatprep.subr.mxu0 0.0
        %4599 = vmatpush1.msra.mxu0 0.0
        %4600 = vmatprep.subr.mxu0 0.0
        %4601 = vmatpush1.msra.mxu0 0.0
        %4602 = vmatprep.subr.mxu0 0.0
        %4603 = vmatpush1.msra.mxu0 0.0
        %4604 = vmatprep.subr.mxu0 0.0
        %4605 = vmatpush1.msra.mxu0 0.0
        %4606 = vmatprep.subr.mxu0 0.0
        %4607 = vmatpush1.msra.mxu0 0.0
        %4608 = vmatprep.subr.mxu0 0.0
        %4609 = vmatpush1.msra.mxu0 0.0
        %4610 = vmatprep.subr.mxu0 0.0
        %4611 = vmatpush1.msra.mxu0 0.0
        %4612 = vmatprep.subr.mxu0 0.0
        %4613 = vmatpush1.msra.mxu0 0.0
        %4614 = vmatprep.subr.mxu0 0.0
        %4615 = vmatpush1.msra.mxu0 0.0
        %4616 = vmatprep.mubr.f32.mxu0 0.0
        %4617 = vmatmul.mubr.f32.gmra.mrb[0].mxu0 %v4534
        %v4618 = vpop.f32.mrb[0].mxu0
        %v4619 = vadd.f32 %v4551, %v4618
        %v4620 = vpop.f32.mrb[0].mxu0
        %4621 = vdwg.mxu0
        %4622 = vst [vmem:[%s325] sm:$0x1] %v4619
        %s4623 = sand.u32 %s226, 1
        %s4624 = scalar_lea.sflag [#allocation4], %s4623
        %s4625 = sand.u32 %s226, 1
        %s4626 = scalar_lea.vmem [#allocation3], %s4625
        // Predicated region
        $region57: #{mil_forward.1} parent=55 // pred_check
          %p4627 = pneg %p236
        $region58: #{mil_forward.1} parent=55 // pred_check_branch
          %4629 = sbr.rel (%p4627) target = $region60
        $region59: #{mil_forward.1} parent=55 // pred_region
          %s4631 = ssub.s32 16, 16
          %4632 = vsyncadd %s4624, %s4631
          %s4633 = smul.addr %s24, 16
          %s4634 = scalar_lea.hbm %s9, %s4633
          %s4636 = sshll.u32 %s4626, 4
          %s4637 = int_to_ptr.vmem [resolvable:$true] %s4636
          %4639 = dma.vmem_to_hbm [thread:$0]  %s4637, 16, %s4634, %s4624
        $region60: #{mil_forward.1} parent=55 // pred_fallthru
          _
      $region56: #{mil_forward.1} parent=5 // pred_fallthru
        _
      %p4640 = scmp.le.s32.totalorder 2, %s19
      // Predicated region
      $region61: #{mil_forward.1} parent=5 // pred_check
        %p4641 = pneg %p4640
      $region62: #{mil_forward.1} parent=5 // pred_check_branch
        %4643 = sbr.rel (%p4641) target = $region64
      $region63: #{mil_forward.1} parent=5 // pred_region
        %s4644 = ssub.s32 %s19, 2
        // Predicated region
        $region65: #{mil_forward.1} parent=63 // pred_check
          %p4645 = pneg %p242
        $region66: #{mil_forward.1} parent=63 // pred_check_branch
          %4647 = sbr.rel (%p4645) target = $region68
        $region67: #{mil_forward.1} parent=63 // pred_region
          %s4648 = sand.u32 %s227, 1
          %s4649 = scalar_lea.sflag [#allocation4], %s4648
          %s4650 = sand.u32 %s227, 1
          %s4651 = scalar_lea.vmem [#allocation3], %s4650
          %4652 = dma.done %s4649, 16
        $region68: #{mil_forward.1} parent=63 // pred_fallthru
          _
      $region64: #{mil_forward.1} parent=5 // pred_fallthru
        _
    $region6: #{mil_forward.1} parent=1 // loop_footer
      %s23 = sadd.s32 1, %s19
    $region7: #{mil_forward.1} parent=1 // loop_footer_branch
      %18 = sbr.rel target = $region3
    $region8: #{mil_forward.1} parent=1 // loop_exit
      _
    %4653 = vsyncpa [#allocation4], 1
    %s4654 = scalar_lea.sflag [#allocation4], 1
    %4655 = vsyncpa %s4654, 1

</llo_original>
